<compile_context>
chip_gen: v7x
topology: tpu7x:2x2x1
jax: 0.10.0
libtpu: 0.0.40
codegen_flags: <defaults>
</compile_context>

<pallas_src>
import functools
import math

import jax
import jax.numpy as jnp
from jax.experimental import pallas as pl
from jax.experimental.pallas import tpu as pltpu


# ----------------------------- tiling helper -----------------------------

def _pick_tile(dim, target, align):
    """Largest multiple of `align` that divides `dim` and is <= target; else full dim."""
    if dim <= target:
        return dim
    t = (target // align) * align
    while t >= align:
        if dim % t == 0:
            return t
        t -= align
    return dim


# ----------------------------- Pallas kernels -----------------------------

def linear_kernel(x_ref, w_ref, b_ref, o_ref, acc_ref, *, activation):
    """Tiled y = x @ w + b with K accumulation; activation fused on last K step."""
    @pl.when(pl.program_id(2) == 0)
    def _():
        acc_ref[...] = jnp.zeros_like(acc_ref)

    acc_ref[...] += jnp.dot(x_ref[...].astype(jnp.bfloat16),
                            w_ref[...].astype(jnp.bfloat16),
                            preferred_element_type=jnp.float32)

    @pl.when(pl.program_id(2) == pl.num_programs(2) - 1)
    def _():
        y = acc_ref[...] + b_ref[...]
        if activation == "relu":
            y = jnp.maximum(y, 0.0)
        elif activation == "log_softmax":
            y = y - jnp.max(y, axis=-1, keepdims=True)
            y = y - jnp.log(jnp.sum(jnp.exp(y), axis=-1, keepdims=True))
        o_ref[...] = y


def ln_residual_kernel(x_ref, r_ref, g_ref, b_ref, o_ref, *, eps):
    """LayerNorm(x + residual) over the last axis (f32)."""
    x = x_ref[...] + r_ref[...]
    mean = jnp.mean(x, axis=-1, keepdims=True)
    c = x - mean
    var = jnp.mean(c * c, axis=-1, keepdims=True)
    o_ref[...] = c * jax.lax.rsqrt(var + eps) * g_ref[...] + b_ref[...]


def attention_kernel(q_ref, k_ref, v_ref, o_ref, *, masked, scale, num_heads):
    """One batch element: per-head softmax(QK^T * scale) V, all heads in one step.

    q/k/v/o refs are (1, S, H, hd); output is written directly in
    (S, H, hd)-interleaved layout so head-concat outside is a free reshape.
    """
    S = q_ref.shape[1]
    if masked:  # hoisted: causal mask is loop-invariant across heads
        row = jax.lax.broadcasted_iota(jnp.int32, (S, S), 0)
        col = jax.lax.broadcasted_iota(jnp.int32, (S, S), 1)
        causal = col <= row

    for h in range(num_heads):  # static unroll (gives the scheduler visibility)
        q = q_ref[0, :, h, :].astype(jnp.bfloat16)   # (S, hd)
        k = k_ref[0, :, h, :].astype(jnp.bfloat16)
        v = v_ref[0, :, h, :].astype(jnp.bfloat16)

        # q @ k^T without materializing a transpose of k.
        s = jax.lax.dot_general(q, k, (((1,), (1,)), ((), ())),
                                preferred_element_type=jnp.float32) * scale
        if masked:
            s = jnp.where(causal, s, -1e30)

        m = jnp.max(s, axis=-1, keepdims=True)
        p = jnp.exp(s - m)
        p = p * pl.reciprocal(jnp.sum(p, axis=-1, keepdims=True), approx=True)
        o_ref[0, :, h, :] = jnp.dot(p.astype(jnp.bfloat16), v,
                                    preferred_element_type=jnp.float32)


# ----------------------------- kernel wrappers -----------------------------

def linear_op(x, w, b=None, activation=None,
              tm_target=256, tn_target=256, tk_target=512):
    """x: (N, Din) f32, w: (Din, Dout) (bf16 or f32), b: (Dout,) -> (N, Dout) f32."""
    N, Din = x.shape
    Dout = w.shape[1]
    if b is None:
        b = jnp.zeros((Dout,), jnp.float32)
    b2 = b.reshape(1, Dout).astype(jnp.float32)

    tm = _pick_tile(N, tm_target, 8)
    tk = _pick_tile(Din, tk_target, 128)
    # log_softmax needs the full row resident -> never tile Dout for that call.
    tn = Dout if activation == "log_softmax" else _pick_tile(Dout, tn_target, 128)
    grid = (N // tm, Dout // tn, Din // tk)

    return pl.pallas_call(
        functools.partial(linear_kernel, activation=activation),
        out_shape=jax.ShapeDtypeStruct((N, Dout), jnp.float32),
        grid=grid,
        in_specs=[
            pl.BlockSpec((tm, tk), lambda i, j, k: (i, k)),
            pl.BlockSpec((tk, tn), lambda i, j, k: (k, j)),
            pl.BlockSpec((1, tn), lambda i, j, k: (0, j)),
        ],
        out_specs=pl.BlockSpec((tm, tn), lambda i, j, k: (i, j)),
        scratch_shapes=[pltpu.VMEM((tm, tn), jnp.float32)],
        compiler_params=pltpu.CompilerParams(
            dimension_semantics=("parallel", "parallel", "arbitrary")),
    )(x, w, b2)


def layernorm_residual(x, residual, gamma, beta, eps=1e-5):
    """x, residual: (B, S, D) -> LayerNorm(x + residual), row-tiled."""
    B, S, D = x.shape
    N = B * S
    tm = _pick_tile(N, 512, 8)
    out = pl.pallas_call(
        functools.partial(ln_residual_kernel, eps=eps),
        out_shape=jax.ShapeDtypeStruct((N, D), jnp.float32),
        grid=(N // tm,),
        in_specs=[pl.BlockSpec((tm, D), lambda i: (i, 0)),
                  pl.BlockSpec((tm, D), lambda i: (i, 0)),
                  pl.BlockSpec((1, D), lambda i: (0, 0)),
                  pl.BlockSpec((1, D), lambda i: (0, 0))],
        out_specs=pl.BlockSpec((tm, D), lambda i: (i, 0)),
        compiler_params=pltpu.CompilerParams(dimension_semantics=("parallel",)),
    )(x.reshape(N, D), residual.reshape(N, D),
      gamma.reshape(1, D), beta.reshape(1, D))
    return out.reshape(B, S, D)


def attention_core(q, k, v, masked):
    """q/k/v: (B, S, H, hd) already per-head projected; -> (B, S, H, hd)."""
    B, S, H, hd = q.shape
    scale = 1.0 / math.sqrt(hd)
    spec = pl.BlockSpec((1, S, H, hd), lambda b: (b, 0, 0, 0))
    return pl.pallas_call(
        functools.partial(attention_kernel, masked=masked, scale=scale,
                          num_heads=H),
        out_shape=jax.ShapeDtypeStruct((B, S, H, hd), jnp.float32),
        grid=(B,),
        in_specs=[spec, spec, spec],
        out_specs=spec,
        compiler_params=pltpu.CompilerParams(dimension_semantics=("parallel",)),
    )(q, k, v)


# ----------------------------- model forward -----------------------------

def decoder_layer_forward(encoder_output, decoder_input, lp, num_heads):
    B, S, D = decoder_input.shape
    H = num_heads
    hd = D // H
    N = B * S
    x2d = decoder_input.reshape(N, D)

    # One fused matmul produces all masked-MHA Q/K/V heads + cross-MHA Q heads.
    dec_proj = linear_op(x2d, lp["dec_w"])                      # (N, 4D)
    q1 = dec_proj[:, 0 * D:1 * D].reshape(B, S, H, hd)
    k1 = dec_proj[:, 1 * D:2 * D].reshape(B, S, H, hd)
    v1 = dec_proj[:, 2 * D:3 * D].reshape(B, S, H, hd)
    q2 = dec_proj[:, 3 * D:4 * D].reshape(B, S, H, hd)

    attn1 = attention_core(q1, k1, v1, masked=True)             # (B, S, H, hd)
    attn1 = linear_op(attn1.reshape(N, D), lp["mha1_wo"], lp["mha1_bo"])
    # dropout: identity (eval semantics)
    h1 = layernorm_residual(attn1.reshape(B, S, D), decoder_input,
                            lp["ln1_g"], lp["ln1_b"])

    # One fused matmul produces all cross-MHA K/V heads from the encoder output.
    enc_proj = linear_op(encoder_output.reshape(N, D), lp["enc_w"])  # (N, 2D)
    k2 = enc_proj[:, 0 * D:1 * D].reshape(B, S, H, hd)
    v2 = enc_proj[:, 1 * D:2 * D].reshape(B, S, H, hd)

    attn2 = attention_core(q2, k2, v2, masked=False)
    attn2 = linear_op(attn2.reshape(N, D), lp["mha2_wo"], lp["mha2_bo"])
    h2 = layernorm_residual(attn2.reshape(B, S, D), h1, lp["ln2_g"], lp["ln2_b"])

    ff = linear_op(h2.reshape(N, D), lp["ffn_w1"], lp["ffn_b1"],
                   activation="relu")
    ff = linear_op(ff, lp["ffn_w2"], lp["ffn_b2"])
    out = layernorm_residual(ff.reshape(B, S, D), h2, lp["ln3_g"], lp["ln3_b"])
    return out


def decoder_forward(encoder_output, target_embeddings, layers, final_w, final_b,
                    *, num_heads):
    B, S, D = target_embeddings.shape
    output = target_embeddings
    for lp in layers:
        output = decoder_layer_forward(encoder_output, output, lp, num_heads)
    # Final vocab projection + log_softmax; tiled over tokens only.
    logp = linear_op(output.reshape(B * S, D), final_w, final_b,
                     activation="log_softmax")
    return logp.reshape(B, S, final_w.shape[1])


# ----------------------------- parameters -----------------------------

def init_params(key, vocab_size, embed_dim, num_layers, num_heads):
    """Raw parameters mirroring the PyTorch module structure."""
    hd = embed_dim // num_heads
    width = 4 * embed_dim

    def nrm(k, shape, fan_in):
        return jax.random.normal(k, shape, jnp.float32) / jnp.sqrt(float(fan_in))

    layers = []
    for _ in range(num_layers):
        key, *ks = jax.random.split(key, 18)
        layers.append(dict(
            wk_dec=nrm(ks[0], (embed_dim, hd), embed_dim),
            wq_dec=nrm(ks[1], (embed_dim, hd), embed_dim),
            wv_dec=nrm(ks[2], (embed_dim, hd), embed_dim),
            wk_enc=nrm(ks[3], (embed_dim, hd), embed_dim),
            wv_enc=nrm(ks[4], (embed_dim, hd), embed_dim),
            mha1_wq=nrm(ks[5], (num_heads, hd, hd), hd),
            mha1_wk=nrm(ks[6], (num_heads, hd, hd), hd),
            mha1_wv=nrm(ks[7], (num_heads, hd, hd), hd),
            mha1_wo=nrm(ks[8], (embed_dim, embed_dim), embed_dim),
            mha1_bo=jnp.zeros((embed_dim,), jnp.float32),
            mha2_wq=nrm(ks[9], (num_heads, hd, hd), hd),
            mha2_wk=nrm(ks[10], (num_heads, hd, hd), hd),
            mha2_wv=nrm(ks[11], (num_heads, hd, hd), hd),
            mha2_wo=nrm(ks[12], (embed_dim, embed_dim), embed_dim),
            mha2_bo=jnp.zeros((embed_dim,), jnp.float32),
            ln1_g=jnp.ones((embed_dim,), jnp.float32),
            ln1_b=jnp.zeros((embed_dim,), jnp.float32),
            ln2_g=jnp.ones((embed_dim,), jnp.float32),
            ln2_b=jnp.zeros((embed_dim,), jnp.float32),
            ln3_g=jnp.ones((embed_dim,), jnp.float32),
            ln3_b=jnp.zeros((embed_dim,), jnp.float32),
            ffn_w1=nrm(ks[13], (embed_dim, width), embed_dim),
            ffn_b1=jnp.zeros((width,), jnp.float32),
            ffn_w2=nrm(ks[14], (width, embed_dim), width),
            ffn_b2=jnp.zeros((embed_dim,), jnp.float32),
        ))

    key, k1 = jax.random.split(key)
    final_w = nrm(k1, (embed_dim, vocab_size), embed_dim)
    final_b = jnp.zeros((vocab_size,), jnp.float32)
    return layers, final_w, final_b


def _concat_heads(w):
    """(H, hd, hd) -> (hd, H*hd) so columns [h*hd:(h+1)*hd] = w[h]."""
    H, hd, _ = w.shape
    return jnp.transpose(w, (1, 0, 2)).reshape(hd, H * hd)


def prepare_layer(p):
    """Compose token-projection and per-head MHA projections into lane-dense
    (D, 4D)/(D, 2D) weights (mathematically identical: x@(A@B) == (x@A)@B).
    Matmul weights are stored in bf16; LayerNorm params / biases stay f32."""
    bf = jnp.bfloat16
    wq1 = p["wq_dec"] @ _concat_heads(p["mha1_wq"])   # (D, D)
    wk1 = p["wk_dec"] @ _concat_heads(p["mha1_wk"])
    wv1 = p["wv_dec"] @ _concat_heads(p["mha1_wv"])
    wq2 = p["wq_dec"] @ _concat_heads(p["mha2_wq"])
    wk2 = p["wk_enc"] @ _concat_heads(p["mha2_wk"])
    wv2 = p["wv_enc"] @ _concat_heads(p["mha2_wv"])
    return dict(
        dec_w=jnp.concatenate([wq1, wk1, wv1, wq2], axis=1).astype(bf),  # (D, 4D)
        enc_w=jnp.concatenate([wk2, wv2], axis=1).astype(bf),            # (D, 2D)
        mha1_wo=p["mha1_wo"].astype(bf), mha1_bo=p["mha1_bo"],
        mha2_wo=p["mha2_wo"].astype(bf), mha2_bo=p["mha2_bo"],
        ln1_g=p["ln1_g"], ln1_b=p["ln1_b"],
        ln2_g=p["ln2_g"], ln2_b=p["ln2_b"],
        ln3_g=p["ln3_g"], ln3_b=p["ln3_b"],
        ffn_w1=p["ffn_w1"].astype(bf), ffn_b1=p["ffn_b1"],
        ffn_w2=p["ffn_w2"].astype(bf), ffn_b2=p["ffn_b2"],
    )


# ----------------------------- main -----------------------------

if __name__ == "__main__":
    B, S = 2, 8
    embed_dim = 32
    num_heads = 4
    num_layers = 2
    vocab_size = 64

    key = jax.random.PRNGKey(0)
    key, k_enc, k_tgt, k_par = jax.random.split(key, 4)
    encoder_output = jax.random.normal(k_enc, (B, S, embed_dim), jnp.float32)
    target_embeddings = jax.random.normal(k_tgt, (B, S, embed_dim), jnp.float32)

    raw_layers, final_w, final_b = init_params(
        k_par, vocab_size, embed_dim, num_layers, num_heads)
    layers = [prepare_layer(p) for p in raw_layers]
    final_w_bf = final_w.astype(jnp.bfloat16)

    fwd = jax.jit(functools.partial(decoder_forward, num_heads=num_heads))
    out = fwd(encoder_output, target_embeddings, layers, final_w_bf, final_b)
    out = jax.block_until_ready(out)

    assert out.shape == (B, S, vocab_size)
    # sanity: rows of log_softmax should exp-sum to 1
    assert bool(jnp.allclose(jnp.exp(out).sum(-1), 1.0, atol=1e-4))
    print("KERNEL_OK")
</pallas_src>

<mosaic_0001>
module attributes {stable_mosaic.version = 11 : i64} {
  func.func @linear_kernel(%arg0: i32, %arg1: i32, %arg2: i32, %arg3: memref<16x32xf32, #tpu.memory_space<vmem>>, %arg4: memref<32x128xbf16, #tpu.memory_space<vmem>>, %arg5: memref<1x128xf32, #tpu.memory_space<vmem>>, %arg6: memref<16x128xf32, #tpu.memory_space<vmem>>, %arg7: memref<16x128xf32, #tpu.memory_space<vmem>>) attributes {dimension_semantics = [#tpu.dimension_semantics<parallel>, #tpu.dimension_semantics<parallel>, #tpu.dimension_semantics<arbitrary>], iteration_bounds = array<i64: 1, 1, 1>, scalar_prefetch = 0 : i64, scratch_operands = 1 : i64, tpu.core_type = #tpu.core_type<tc>, window_params = [{transform_indices = @transform_0, window_bounds = array<i64: 16, 32>}, {transform_indices = @transform_1, window_bounds = array<i64: 32, 128>}, {transform_indices = @transform_2, window_bounds = array<i64: 1, 128>}, {transform_indices = @transform_3, window_bounds = array<i64: 16, 128>}]} {
    %c0_i32 = arith.constant 0 : i32
    %0 = arith.cmpi eq, %arg2, %c0_i32 : i32
    %1 = arith.extui %0 : i1 to i32
    %c0_i32_0 = arith.constant 0 : i32
    %2 = arith.cmpi ne, %1, %c0_i32_0 : i32
    scf.if %2 {
      %cst_10 = arith.constant 0.000000e+00 : f32
      %13 = vector.broadcast %cst_10 : f32 to vector<16x128xf32>
      %c0_11 = arith.constant 0 : index
      %c0_12 = arith.constant 0 : index
      %14 = vector.load %arg7[%c0_11, %c0_12] : memref<16x128xf32, #tpu.memory_space<vmem>>, vector<16x128xf32>
      tpu.vector_store %arg7[%c0_11, %c0_12], %13 {strides = array<i32>} : memref<16x128xf32, #tpu.memory_space<vmem>>, vector<16x128xf32>,
    } else {
    }
    %c0 = arith.constant 0 : index
    %c0_1 = arith.constant 0 : index
    %3 = vector.load %arg7[%c0, %c0_1] : memref<16x128xf32, #tpu.memory_space<vmem>>, vector<16x128xf32>
    %c0_2 = arith.constant 0 : index
    %c0_3 = arith.constant 0 : index
    %4 = vector.load %arg3[%c0_2, %c0_3] : memref<16x32xf32, #tpu.memory_space<vmem>>, vector<16x32xf32>
    %5 = arith.truncf %4 : vector<16x32xf32> to vector<16x32xbf16>
    %c0_4 = arith.constant 0 : index
    %c0_5 = arith.constant 0 : index
    %6 = vector.load %arg4[%c0_4, %c0_5] : memref<32x128xbf16, #tpu.memory_space<vmem>>, vector<32x128xbf16>
    %cst = arith.constant dense<0.000000e+00> : vector<16x128xf32>
    %7 = tpu.matmul %5, %6, %cst {dimension_numbers = #tpu.dot_dimension_numbers<[1], [0], [0], [1], [0, 0, 1, 1], [], []>} : vector<16x32xbf16>, vector<32x128xbf16>, vector<16x128xf32> -> vector<16x128xf32>
    %8 = arith.addf %3, %7 : vector<16x128xf32>
    %c0_6 = arith.constant 0 : index
    %c0_7 = arith.constant 0 : index
    %9 = vector.load %arg7[%c0_6, %c0_7] : memref<16x128xf32, #tpu.memory_space<vmem>>, vector<16x128xf32>
    tpu.vector_store %arg7[%c0_6, %c0_7], %8 {strides = array<i32>} : memref<16x128xf32, #tpu.memory_space<vmem>>, vector<16x128xf32>,
    %c0_i32_8 = arith.constant 0 : i32
    %10 = arith.cmpi eq, %arg2, %c0_i32_8 : i32
    %11 = arith.extui %10 : i1 to i32
    %c0_i32_9 = arith.constant 0 : i32
    %12 = arith.cmpi ne, %11, %c0_i32_9 : i32
    scf.if %12 {
      %c0_10 = arith.constant 0 : index
      %c0_11 = arith.constant 0 : index
      %13 = vector.load %arg7[%c0_10, %c0_11] : memref<16x128xf32, #tpu.memory_space<vmem>>, vector<16x128xf32>
      %c0_12 = arith.constant 0 : index
      %c0_13 = arith.constant 0 : index
      %14 = vector.load %arg5[%c0_12, %c0_13] : memref<1x128xf32, #tpu.memory_space<vmem>>, vector<1x128xf32>
      %15 = vector.broadcast %14 : vector<1x128xf32> to vector<16x128xf32>
      %16 = arith.addf %13, %15 : vector<16x128xf32>
      %c0_14 = arith.constant 0 : index
      %c0_15 = arith.constant 0 : index
      %17 = vector.load %arg6[%c0_14, %c0_15] : memref<16x128xf32, #tpu.memory_space<vmem>>, vector<16x128xf32>
      tpu.vector_store %arg6[%c0_14, %c0_15], %16 {strides = array<i32>} : memref<16x128xf32, #tpu.memory_space<vmem>>, vector<16x128xf32>,
    } else {
    }
    return
  }
  func.func @transform_0(%arg0: i32, %arg1: i32, %arg2: i32) -> (i32, i32) {
    %c0_i32 = arith.constant 0 : i32
    return %arg0, %arg2 : i32, i32
  }
  func.func @transform_1(%arg0: i32, %arg1: i32, %arg2: i32) -> (i32, i32) {
    %c0_i32 = arith.constant 0 : i32
    return %arg2, %arg1 : i32, i32
  }
  func.func @transform_2(%arg0: i32, %arg1: i32, %arg2: i32) -> (i32, i32) {
    %c0_i32 = arith.constant 0 : i32
    %c0_i32_0 = arith.constant 0 : i32
    return %c0_i32, %arg1 : i32, i32
  }
  func.func @transform_3(%arg0: i32, %arg1: i32, %arg2: i32) -> (i32, i32) {
    %c0_i32 = arith.constant 0 : i32
    return %arg0, %arg1 : i32, i32
  }
}

module attributes {stable_mosaic.version = 11 : i64} {
  func.func @attention_kernel(%arg0: i32, %arg1: memref<1x8x4x8xf32, #tpu.memory_space<vmem>>, %arg2: memref<1x8x4x8xf32, #tpu.memory_space<vmem>>, %arg3: memref<1x8x4x8xf32, #tpu.memory_space<vmem>>, %arg4: memref<1x8x4x8xf32, #tpu.memory_space<vmem>>) attributes {dimension_semantics = [#tpu.dimension_semantics<parallel>], iteration_bounds = array<i64: 2>, scalar_prefetch = 0 : i64, scratch_operands = 0 : i64, tpu.core_type = #tpu.core_type<tc>, window_params = [{transform_indices = @transform_0, window_bounds = array<i64: 1, 8, 4, 8>}, {transform_indices = @transform_1, window_bounds = array<i64: 1, 8, 4, 8>}, {transform_indices = @transform_2, window_bounds = array<i64: 1, 8, 4, 8>}, {transform_indices = @transform_3, window_bounds = array<i64: 1, 8, 4, 8>}]} {
    %0 = tpu.iota {dimensions = array<i32: 0>} : vector<8x8xi32>
    %1 = tpu.iota {dimensions = array<i32: 1>} : vector<8x8xi32>
    %2 = arith.cmpi sle, %1, %0 : vector<8x8xi32>
    %c0 = arith.constant 0 : index
    %c0_0 = arith.constant 0 : index
    %c0_1 = arith.constant 0 : index
    %c0_2 = arith.constant 0 : index
    %3 = vector.load %arg1[%c0, %c0_0, %c0_1, %c0_2] : memref<1x8x4x8xf32, #tpu.memory_space<vmem>>, vector<1x8x1x8xf32>
    %4 = vector.shape_cast %3 : vector<1x8x1x8xf32> to vector<8x8xf32>
    %5 = arith.truncf %4 : vector<8x8xf32> to vector<8x8xbf16>
    %c0_3 = arith.constant 0 : index
    %c0_4 = arith.constant 0 : index
    %c0_5 = arith.constant 0 : index
    %c0_6 = arith.constant 0 : index
    %6 = vector.load %arg2[%c0_3, %c0_4, %c0_5, %c0_6] : memref<1x8x4x8xf32, #tpu.memory_space<vmem>>, vector<1x8x1x8xf32>
    %7 = vector.shape_cast %6 : vector<1x8x1x8xf32> to vector<8x8xf32>
    %8 = arith.truncf %7 : vector<8x8xf32> to vector<8x8xbf16>
    %c0_7 = arith.constant 0 : index
    %c0_8 = arith.constant 0 : index
    %c0_9 = arith.constant 0 : index
    %c0_10 = arith.constant 0 : index
    %9 = vector.load %arg3[%c0_7, %c0_8, %c0_9, %c0_10] : memref<1x8x4x8xf32, #tpu.memory_space<vmem>>, vector<1x8x1x8xf32>
    %10 = vector.shape_cast %9 : vector<1x8x1x8xf32> to vector<8x8xf32>
    %11 = arith.truncf %10 : vector<8x8xf32> to vector<8x8xbf16>
    %cst = arith.constant dense<0.000000e+00> : vector<8x8xf32>
    %12 = tpu.matmul %5, %8, %cst {dimension_numbers = #tpu.dot_dimension_numbers<[1], [1], [0], [0], [0, 0, 1, 0], [], []>} : vector<8x8xbf16>, vector<8x8xbf16>, vector<8x8xf32> -> vector<8x8xf32>
    %cst_11 = arith.constant 0.353553385 : f32
    %13 = vector.broadcast %cst_11 : f32 to vector<8x8xf32>
    %14 = arith.mulf %12, %13 : vector<8x8xf32>
    %cst_12 = arith.constant -1.000000e+30 : f32
    %15 = vector.broadcast %cst_12 : f32 to vector<8x8xf32>
    %16 = arith.select %2, %14, %15 : vector<8x8xi1>, vector<8x8xf32>
    %cst_13 = arith.constant dense<0xFF800000> : vector<8xf32>
    %17 = vector.multi_reduction <maximumf>, %16, %cst_13 [1] : vector<8x8xf32> to vector<8xf32>
    %18 = vector.shape_cast %17 : vector<8xf32> to vector<8x1xf32>
    %19 = vector.broadcast %18 : vector<8x1xf32> to vector<8x8xf32>
    %20 = arith.subf %16, %19 : vector<8x8xf32>
    %21 = math.exp %20 : vector<8x8xf32>
    %cst_14 = arith.constant dense<0.000000e+00> : vector<8xf32>
    %22 = vector.multi_reduction <add>, %21, %cst_14 [1] : vector<8x8xf32> to vector<8xf32>
    %23 = vector.shape_cast %22 : vector<8xf32> to vector<8x1xf32>
    %24 = tpu.reciprocal %23 {approx = true} : vector<8x1xf32> -> vector<8x1xf32>
    %25 = vector.broadcast %24 : vector<8x1xf32> to vector<8x8xf32>
    %26 = arith.mulf %21, %25 : vector<8x8xf32>
    %27 = arith.truncf %26 : vector<8x8xf32> to vector<8x8xbf16>
    %cst_15 = arith.constant dense<0.000000e+00> : vector<8x8xf32>
    %28 = tpu.matmul %27, %11, %cst_15 {dimension_numbers = #tpu.dot_dimension_numbers<[1], [0], [0], [1], [0, 0, 1, 1], [], []>} : vector<8x8xbf16>, vector<8x8xbf16>, vector<8x8xf32> -> vector<8x8xf32>
    %c0_16 = arith.constant 0 : index
    %c0_17 = arith.constant 0 : index
    %c0_18 = arith.constant 0 : index
    %c0_19 = arith.constant 0 : index
    %29 = vector.load %arg4[%c0_16, %c0_17, %c0_18, %c0_19] : memref<1x8x4x8xf32, #tpu.memory_space<vmem>>, vector<1x8x1x8xf32>
    %30 = vector.shape_cast %29 : vector<1x8x1x8xf32> to vector<8x8xf32>
    %31 = vector.shape_cast %28 : vector<8x8xf32> to vector<1x8x1x8xf32>
    tpu.vector_store %arg4[%c0_16, %c0_17, %c0_18, %c0_19], %31 {strides = array<i32>} : memref<1x8x4x8xf32, #tpu.memory_space<vmem>>, vector<1x8x1x8xf32>,
    %c0_20 = arith.constant 0 : index
    %c0_21 = arith.constant 0 : index
    %c1 = arith.constant 1 : index
    %c0_22 = arith.constant 0 : index
    %32 = vector.load %arg1[%c0_20, %c0_21, %c1, %c0_22] : memref<1x8x4x8xf32, #tpu.memory_space<vmem>>, vector<1x8x1x8xf32>
    %33 = vector.shape_cast %32 : vector<1x8x1x8xf32> to vector<8x8xf32>
    %34 = arith.truncf %33 : vector<8x8xf32> to vector<8x8xbf16>
    %c0_23 = arith.constant 0 : index
    %c0_24 = arith.constant 0 : index
    %c1_25 = arith.constant 1 : index
    %c0_26 = arith.constant 0 : index
    %35 = vector.load %arg2[%c0_23, %c0_24, %c1_25, %c0_26] : memref<1x8x4x8xf32, #tpu.memory_space<vmem>>, vector<1x8x1x8xf32>
    %36 = vector.shape_cast %35 : vector<1x8x1x8xf32> to vector<8x8xf32>
    %37 = arith.truncf %36 : vector<8x8xf32> to vector<8x8xbf16>
    %c0_27 = arith.constant 0 : index
    %c0_28 = arith.constant 0 : index
    %c1_29 = arith.constant 1 : index
    %c0_30 = arith.constant 0 : index
    %38 = vector.load %arg3[%c0_27, %c0_28, %c1_29, %c0_30] : memref<1x8x4x8xf32, #tpu.memory_space<vmem>>, vector<1x8x1x8xf32>
    %39 = vector.shape_cast %38 : vector<1x8x1x8xf32> to vector<8x8xf32>
    %40 = arith.truncf %39 : vector<8x8xf32> to vector<8x8xbf16>
    %cst_31 = arith.constant dense<0.000000e+00> : vector<8x8xf32>
    %41 = tpu.matmul %34, %37, %cst_31 {dimension_numbers = #tpu.dot_dimension_numbers<[1], [1], [0], [0], [0, 0, 1, 0], [], []>} : vector<8x8xbf16>, vector<8x8xbf16>, vector<8x8xf32> -> vector<8x8xf32>
    %cst_32 = arith.constant 0.353553385 : f32
    %42 = vector.broadcast %cst_32 : f32 to vector<8x8xf32>
    %43 = arith.mulf %41, %42 : vector<8x8xf32>
    %cst_33 = arith.constant -1.000000e+30 : f32
    %44 = vector.broadcast %cst_33 : f32 to vector<8x8xf32>
    %45 = arith.select %2, %43, %44 : vector<8x8xi1>, vector<8x8xf32>
    %cst_34 = arith.constant dense<0xFF800000> : vector<8xf32>
    %46 = vector.multi_reduction <maximumf>, %45, %cst_34 [1] : vector<8x8xf32> to vector<8xf32>
    %47 = vector.shape_cast %46 : vector<8xf32> to vector<8x1xf32>
    %48 = vector.broadcast %47 : vector<8x1xf32> to vector<8x8xf32>
    %49 = arith.subf %45, %48 : vector<8x8xf32>
    %50 = math.exp %49 : vector<8x8xf32>
    %cst_35 = arith.constant dense<0.000000e+00> : vector<8xf32>
    %51 = vector.multi_reduction <add>, %50, %cst_35 [1] : vector<8x8xf32> to vector<8xf32>
    %52 = vector.shape_cast %51 : vector<8xf32> to vector<8x1xf32>
    %53 = tpu.reciprocal %52 {approx = true} : vector<8x1xf32> -> vector<8x1xf32>
    %54 = vector.broadcast %53 : vector<8x1xf32> to vector<8x8xf32>
    %55 = arith.mulf %50, %54 : vector<8x8xf32>
    %56 = arith.truncf %55 : vector<8x8xf32> to vector<8x8xbf16>
    %cst_36 = arith.constant dense<0.000000e+00> : vector<8x8xf32>
    %57 = tpu.matmul %56, %40, %cst_36 {dimension_numbers = #tpu.dot_dimension_numbers<[1], [0], [0], [1], [0, 0, 1, 1], [], []>} : vector<8x8xbf16>, vector<8x8xbf16>, vector<8x8xf32> -> vector<8x8xf32>
    %c0_37 = arith.constant 0 : index
    %c0_38 = arith.constant 0 : index
    %c1_39 = arith.constant 1 : index
    %c0_40 = arith.constant 0 : index
    %58 = vector.load %arg4[%c0_37, %c0_38, %c1_39, %c0_40] : memref<1x8x4x8xf32, #tpu.memory_space<vmem>>, vector<1x8x1x8xf32>
    %59 = vector.shape_cast %58 : vector<1x8x1x8xf32> to vector<8x8xf32>
    %60 = vector.shape_cast %57 : vector<8x8xf32> to vector<1x8x1x8xf32>
    tpu.vector_store %arg4[%c0_37, %c0_38, %c1_39, %c0_40], %60 {strides = array<i32>} : memref<1x8x4x8xf32, #tpu.memory_space<vmem>>, vector<1x8x1x8xf32>,
    %c0_41 = arith.constant 0 : index
    %c0_42 = arith.constant 0 : index
    %c2 = arith.constant 2 : index
    %c0_43 = arith.constant 0 : index
    %61 = vector.load %arg1[%c0_41, %c0_42, %c2, %c0_43] : memref<1x8x4x8xf32, #tpu.memory_space<vmem>>, vector<1x8x1x8xf32>
    %62 = vector.shape_cast %61 : vector<1x8x1x8xf32> to vector<8x8xf32>
    %63 = arith.truncf %62 : vector<8x8xf32> to vector<8x8xbf16>
    %c0_44 = arith.constant 0 : index
    %c0_45 = arith.constant 0 : index
    %c2_46 = arith.constant 2 : index
    %c0_47 = arith.constant 0 : index
    %64 = vector.load %arg2[%c0_44, %c0_45, %c2_46, %c0_47] : memref<1x8x4x8xf32, #tpu.memory_space<vmem>>, vector<1x8x1x8xf32>
    %65 = vector.shape_cast %64 : vector<1x8x1x8xf32> to vector<8x8xf32>
    %66 = arith.truncf %65 : vector<8x8xf32> to vector<8x8xbf16>
    %c0_48 = arith.constant 0 : index
    %c0_49 = arith.constant 0 : index
    %c2_50 = arith.constant 2 : index
    %c0_51 = arith.constant 0 : index
    %67 = vector.load %arg3[%c0_48, %c0_49, %c2_50, %c0_51] : memref<1x8x4x8xf32, #tpu.memory_space<vmem>>, vector<1x8x1x8xf32>
    %68 = vector.shape_cast %67 : vector<1x8x1x8xf32> to vector<8x8xf32>
    %69 = arith.truncf %68 : vector<8x8xf32> to vector<8x8xbf16>
    %cst_52 = arith.constant dense<0.000000e+00> : vector<8x8xf32>
    %70 = tpu.matmul %63, %66, %cst_52 {dimension_numbers = #tpu.dot_dimension_numbers<[1], [1], [0], [0], [0, 0, 1, 0], [], []>} : vector<8x8xbf16>, vector<8x8xbf16>, vector<8x8xf32> -> vector<8x8xf32>
    %cst_53 = arith.constant 0.353553385 : f32
    %71 = vector.broadcast %cst_53 : f32 to vector<8x8xf32>
    %72 = arith.mulf %70, %71 : vector<8x8xf32>
    %cst_54 = arith.constant -1.000000e+30 : f32
    %73 = vector.broadcast %cst_54 : f32 to vector<8x8xf32>
    %74 = arith.select %2, %72, %73 : vector<8x8xi1>, vector<8x8xf32>
    %cst_55 = arith.constant dense<0xFF800000> : vector<8xf32>
    %75 = vector.multi_reduction <maximumf>, %74, %cst_55 [1] : vector<8x8xf32> to vector<8xf32>
    %76 = vector.shape_cast %75 : vector<8xf32> to vector<8x1xf32>
    %77 = vector.broadcast %76 : vector<8x1xf32> to vector<8x8xf32>
    %78 = arith.subf %74, %77 : vector<8x8xf32>
    %79 = math.exp %78 : vector<8x8xf32>
    %cst_56 = arith.constant dense<0.000000e+00> : vector<8xf32>
    %80 = vector.multi_reduction <add>, %79, %cst_56 [1] : vector<8x8xf32> to vector<8xf32>
    %81 = vector.shape_cast %80 : vector<8xf32> to vector<8x1xf32>
    %82 = tpu.reciprocal %81 {approx = true} : vector<8x1xf32> -> vector<8x1xf32>
    %83 = vector.broadcast %82 : vector<8x1xf32> to vector<8x8xf32>
    %84 = arith.mulf %79, %83 : vector<8x8xf32>
    %85 = arith.truncf %84 : vector<8x8xf32> to vector<8x8xbf16>
    %cst_57 = arith.constant dense<0.000000e+00> : vector<8x8xf32>
    %86 = tpu.matmul %85, %69, %cst_57 {dimension_numbers = #tpu.dot_dimension_numbers<[1], [0], [0], [1], [0, 0, 1, 1], [], []>} : vector<8x8xbf16>, vector<8x8xbf16>, vector<8x8xf32> -> vector<8x8xf32>
    %c0_58 = arith.constant 0 : index
    %c0_59 = arith.constant 0 : index
    %c2_60 = arith.constant 2 : index
    %c0_61 = arith.constant 0 : index
    %87 = vector.load %arg4[%c0_58, %c0_59, %c2_60, %c0_61] : memref<1x8x4x8xf32, #tpu.memory_space<vmem>>, vector<1x8x1x8xf32>
    %88 = vector.shape_cast %87 : vector<1x8x1x8xf32> to vector<8x8xf32>
    %89 = vector.shape_cast %86 : vector<8x8xf32> to vector<1x8x1x8xf32>
    tpu.vector_store %arg4[%c0_58, %c0_59, %c2_60, %c0_61], %89 {strides = array<i32>} : memref<1x8x4x8xf32, #tpu.memory_space<vmem>>, vector<1x8x1x8xf32>,
    %c0_62 = arith.constant 0 : index
    %c0_63 = arith.constant 0 : index
    %c3 = arith.constant 3 : index
    %c0_64 = arith.constant 0 : index
    %90 = vector.load %arg1[%c0_62, %c0_63, %c3, %c0_64] : memref<1x8x4x8xf32, #tpu.memory_space<vmem>>, vector<1x8x1x8xf32>
    %91 = vector.shape_cast %90 : vector<1x8x1x8xf32> to vector<8x8xf32>
    %92 = arith.truncf %91 : vector<8x8xf32> to vector<8x8xbf16>
    %c0_65 = arith.constant 0 : index
    %c0_66 = arith.constant 0 : index
    %c3_67 = arith.constant 3 : index
    %c0_68 = arith.constant 0 : index
    %93 = vector.load %arg2[%c0_65, %c0_66, %c3_67, %c0_68] : memref<1x8x4x8xf32, #tpu.memory_space<vmem>>, vector<1x8x1x8xf32>
    %94 = vector.shape_cast %93 : vector<1x8x1x8xf32> to vector<8x8xf32>
    %95 = arith.truncf %94 : vector<8x8xf32> to vector<8x8xbf16>
    %c0_69 = arith.constant 0 : index
    %c0_70 = arith.constant 0 : index
    %c3_71 = arith.constant 3 : index
    %c0_72 = arith.constant 0 : index
    %96 = vector.load %arg3[%c0_69, %c0_70, %c3_71, %c0_72] : memref<1x8x4x8xf32, #tpu.memory_space<vmem>>, vector<1x8x1x8xf32>
    %97 = vector.shape_cast %96 : vector<1x8x1x8xf32> to vector<8x8xf32>
    %98 = arith.truncf %97 : vector<8x8xf32> to vector<8x8xbf16>
    %cst_73 = arith.constant dense<0.000000e+00> : vector<8x8xf32>
    %99 = tpu.matmul %92, %95, %cst_73 {dimension_numbers = #tpu.dot_dimension_numbers<[1], [1], [0], [0], [0, 0, 1, 0], [], []>} : vector<8x8xbf16>, vector<8x8xbf16>, vector<8x8xf32> -> vector<8x8xf32>
    %cst_74 = arith.constant 0.353553385 : f32
    %100 = vector.broadcast %cst_74 : f32 to vector<8x8xf32>
    %101 = arith.mulf %99, %100 : vector<8x8xf32>
    %cst_75 = arith.constant -1.000000e+30 : f32
    %102 = vector.broadcast %cst_75 : f32 to vector<8x8xf32>
    %103 = arith.select %2, %101, %102 : vector<8x8xi1>, vector<8x8xf32>
    %cst_76 = arith.constant dense<0xFF800000> : vector<8xf32>
    %104 = vector.multi_reduction <maximumf>, %103, %cst_76 [1] : vector<8x8xf32> to vector<8xf32>
    %105 = vector.shape_cast %104 : vector<8xf32> to vector<8x1xf32>
    %106 = vector.broadcast %105 : vector<8x1xf32> to vector<8x8xf32>
    %107 = arith.subf %103, %106 : vector<8x8xf32>
    %108 = math.exp %107 : vector<8x8xf32>
    %cst_77 = arith.constant dense<0.000000e+00> : vector<8xf32>
    %109 = vector.multi_reduction <add>, %108, %cst_77 [1] : vector<8x8xf32> to vector<8xf32>
    %110 = vector.shape_cast %109 : vector<8xf32> to vector<8x1xf32>
    %111 = tpu.reciprocal %110 {approx = true} : vector<8x1xf32> -> vector<8x1xf32>
    %112 = vector.broadcast %111 : vector<8x1xf32> to vector<8x8xf32>
    %113 = arith.mulf %108, %112 : vector<8x8xf32>
    %114 = arith.truncf %113 : vector<8x8xf32> to vector<8x8xbf16>
    %cst_78 = arith.constant dense<0.000000e+00> : vector<8x8xf32>
    %115 = tpu.matmul %114, %98, %cst_78 {dimension_numbers = #tpu.dot_dimension_numbers<[1], [0], [0], [1], [0, 0, 1, 1], [], []>} : vector<8x8xbf16>, vector<8x8xbf16>, vector<8x8xf32> -> vector<8x8xf32>
    %c0_79 = arith.constant 0 : index
    %c0_80 = arith.constant 0 : index
    %c3_81 = arith.constant 3 : index
    %c0_82 = arith.constant 0 : index
    %116 = vector.load %arg4[%c0_79, %c0_80, %c3_81, %c0_82] : memref<1x8x4x8xf32, #tpu.memory_space<vmem>>, vector<1x8x1x8xf32>
    %117 = vector.shape_cast %116 : vector<1x8x1x8xf32> to vector<8x8xf32>
    %118 = vector.shape_cast %115 : vector<8x8xf32> to vector<1x8x1x8xf32>
    tpu.vector_store %arg4[%c0_79, %c0_80, %c3_81, %c0_82], %118 {strides = array<i32>} : memref<1x8x4x8xf32, #tpu.memory_space<vmem>>, vector<1x8x1x8xf32>,
    return
  }
  func.func @transform_0(%arg0: i32) -> (i32, i32, i32, i32) {
    %c0_i32 = arith.constant 0 : i32
    %c0_i32_0 = arith.constant 0 : i32
    %c0_i32_1 = arith.constant 0 : i32
    %c0_i32_2 = arith.constant 0 : i32
    return %arg0, %c0_i32, %c0_i32_0, %c0_i32_1 : i32, i32, i32, i32
  }
  func.func @transform_1(%arg0: i32) -> (i32, i32, i32, i32) {
    %c0_i32 = arith.constant 0 : i32
    %c0_i32_0 = arith.constant 0 : i32
    %c0_i32_1 = arith.constant 0 : i32
    %c0_i32_2 = arith.constant 0 : i32
    return %arg0, %c0_i32, %c0_i32_0, %c0_i32_1 : i32, i32, i32, i32
  }
  func.func @transform_2(%arg0: i32) -> (i32, i32, i32, i32) {
    %c0_i32 = arith.constant 0 : i32
    %c0_i32_0 = arith.constant 0 : i32
    %c0_i32_1 = arith.constant 0 : i32
    %c0_i32_2 = arith.constant 0 : i32
    return %arg0, %c0_i32, %c0_i32_0, %c0_i32_1 : i32, i32, i32, i32
  }
  func.func @transform_3(%arg0: i32) -> (i32, i32, i32, i32) {
    %c0_i32 = arith.constant 0 : i32
    %c0_i32_0 = arith.constant 0 : i32
    %c0_i32_1 = arith.constant 0 : i32
    %c0_i32_2 = arith.constant 0 : i32
    return %arg0, %c0_i32, %c0_i32_0, %c0_i32_1 : i32, i32, i32, i32
  }
}

module attributes {stable_mosaic.version = 11 : i64} {
  func.func @ln_residual_kernel(%arg0: i32, %arg1: memref<16x32xf32, #tpu.memory_space<vmem>>, %arg2: memref<16x32xf32, #tpu.memory_space<vmem>>, %arg3: memref<1x32xf32, #tpu.memory_space<vmem>>, %arg4: memref<1x32xf32, #tpu.memory_space<vmem>>, %arg5: memref<16x32xf32, #tpu.memory_space<vmem>>) attributes {dimension_semantics = [#tpu.dimension_semantics<parallel>], iteration_bounds = array<i64: 1>, scalar_prefetch = 0 : i64, scratch_operands = 0 : i64, tpu.core_type = #tpu.core_type<tc>, window_params = [{transform_indices = @transform_0, window_bounds = array<i64: 16, 32>}, {transform_indices = @transform_1, window_bounds = array<i64: 16, 32>}, {pipeline_mode = #tpu.pipeline_mode<synchronous>, transform_indices = @transform_2, window_bounds = array<i64: 1, 32>}, {pipeline_mode = #tpu.pipeline_mode<synchronous>, transform_indices = @transform_3, window_bounds = array<i64: 1, 32>}, {transform_indices = @transform_4, window_bounds = array<i64: 16, 32>}]} {
    %c0 = arith.constant 0 : index
    %c0_0 = arith.constant 0 : index
    %0 = vector.load %arg1[%c0, %c0_0] : memref<16x32xf32, #tpu.memory_space<vmem>>, vector<16x32xf32>
    %c0_1 = arith.constant 0 : index
    %c0_2 = arith.constant 0 : index
    %1 = vector.load %arg2[%c0_1, %c0_2] : memref<16x32xf32, #tpu.memory_space<vmem>>, vector<16x32xf32>
    %2 = arith.addf %0, %1 : vector<16x32xf32>
    %cst = arith.constant dense<0.000000e+00> : vector<16xf32>
    %3 = vector.multi_reduction <add>, %2, %cst [1] : vector<16x32xf32> to vector<16xf32>
    %4 = vector.shape_cast %3 : vector<16xf32> to vector<16x1xf32>
    %cst_3 = arith.constant 3.200000e+01 : f32
    %5 = vector.broadcast %cst_3 : f32 to vector<16x1xf32>
    %6 = arith.divf %4, %5 : vector<16x1xf32>
    %7 = vector.broadcast %6 : vector<16x1xf32> to vector<16x32xf32>
    %8 = arith.subf %2, %7 : vector<16x32xf32>
    %9 = arith.mulf %8, %8 : vector<16x32xf32>
    %cst_4 = arith.constant dense<0.000000e+00> : vector<16xf32>
    %10 = vector.multi_reduction <add>, %9, %cst_4 [1] : vector<16x32xf32> to vector<16xf32>
    %11 = vector.shape_cast %10 : vector<16xf32> to vector<16x1xf32>
    %cst_5 = arith.constant 3.200000e+01 : f32
    %12 = vector.broadcast %cst_5 : f32 to vector<16x1xf32>
    %13 = arith.divf %11, %12 : vector<16x1xf32>
    %cst_6 = arith.constant 9.99999974E-6 : f32
    %14 = vector.broadcast %cst_6 : f32 to vector<16x1xf32>
    %15 = arith.addf %13, %14 : vector<16x1xf32>
    %16 = math.rsqrt %15 : vector<16x1xf32>
    %17 = vector.broadcast %16 : vector<16x1xf32> to vector<16x32xf32>
    %18 = arith.mulf %8, %17 : vector<16x32xf32>
    %c0_7 = arith.constant 0 : index
    %c0_8 = arith.constant 0 : index
    %19 = vector.load %arg3[%c0_7, %c0_8] : memref<1x32xf32, #tpu.memory_space<vmem>>, vector<1x32xf32>
    %20 = vector.broadcast %19 : vector<1x32xf32> to vector<16x32xf32>
    %21 = arith.mulf %18, %20 : vector<16x32xf32>
    %c0_9 = arith.constant 0 : index
    %c0_10 = arith.constant 0 : index
    %22 = vector.load %arg4[%c0_9, %c0_10] : memref<1x32xf32, #tpu.memory_space<vmem>>, vector<1x32xf32>
    %23 = vector.broadcast %22 : vector<1x32xf32> to vector<16x32xf32>
    %24 = arith.addf %21, %23 : vector<16x32xf32>
    %c0_11 = arith.constant 0 : index
    %c0_12 = arith.constant 0 : index
    %25 = vector.load %arg5[%c0_11, %c0_12] : memref<16x32xf32, #tpu.memory_space<vmem>>, vector<16x32xf32>
    tpu.vector_store %arg5[%c0_11, %c0_12], %24 {strides = array<i32>} : memref<16x32xf32, #tpu.memory_space<vmem>>, vector<16x32xf32>,
    return
  }
  func.func @transform_0(%arg0: i32) -> (i32, i32) {
    %c0_i32 = arith.constant 0 : i32
    %c0_i32_0 = arith.constant 0 : i32
    return %arg0, %c0_i32 : i32, i32
  }
  func.func @transform_1(%arg0: i32) -> (i32, i32) {
    %c0_i32 = arith.constant 0 : i32
    %c0_i32_0 = arith.constant 0 : i32
    return %arg0, %c0_i32 : i32, i32
  }
  func.func @transform_2(%arg0: i32) -> (i32, i32) {
    %c0_i32 = arith.constant 0 : i32
    %c0_i32_0 = arith.constant 0 : i32
    %c0_i32_1 = arith.constant 0 : i32
    return %c0_i32, %c0_i32_0 : i32, i32
  }
  func.func @transform_3(%arg0: i32) -> (i32, i32) {
    %c0_i32 = arith.constant 0 : i32
    %c0_i32_0 = arith.constant 0 : i32
    %c0_i32_1 = arith.constant 0 : i32
    return %c0_i32, %c0_i32_0 : i32, i32
  }
  func.func @transform_4(%arg0: i32) -> (i32, i32) {
    %c0_i32 = arith.constant 0 : i32
    %c0_i32_0 = arith.constant 0 : i32
    return %arg0, %c0_i32 : i32, i32
  }
}

module attributes {stable_mosaic.version = 11 : i64} {
  func.func @linear_kernel(%arg0: i32, %arg1: i32, %arg2: i32, %arg3: memref<16x32xf32, #tpu.memory_space<vmem>>, %arg4: memref<32x32xbf16, #tpu.memory_space<vmem>>, %arg5: memref<1x32xf32, #tpu.memory_space<vmem>>, %arg6: memref<16x32xf32, #tpu.memory_space<vmem>>, %arg7: memref<16x32xf32, #tpu.memory_space<vmem>>) attributes {dimension_semantics = [#tpu.dimension_semantics<parallel>, #tpu.dimension_semantics<parallel>, #tpu.dimension_semantics<arbitrary>], iteration_bounds = array<i64: 1, 1, 1>, scalar_prefetch = 0 : i64, scratch_operands = 1 : i64, tpu.core_type = #tpu.core_type<tc>, window_params = [{transform_indices = @transform_0, window_bounds = array<i64: 16, 32>}, {transform_indices = @transform_1, window_bounds = array<i64: 32, 32>}, {transform_indices = @transform_2, window_bounds = array<i64: 1, 32>}, {transform_indices = @transform_3, window_bounds = array<i64: 16, 32>}]} {
    %c0_i32 = arith.constant 0 : i32
    %0 = arith.cmpi eq, %arg2, %c0_i32 : i32
    %1 = arith.extui %0 : i1 to i32
    %c0_i32_0 = arith.constant 0 : i32
    %2 = arith.cmpi ne, %1, %c0_i32_0 : i32
    scf.if %2 {
      %cst_10 = arith.constant 0.000000e+00 : f32
      %13 = vector.broadcast %cst_10 : f32 to vector<16x32xf32>
      %c0_11 = arith.constant 0 : index
      %c0_12 = arith.constant 0 : index
      %14 = vector.load %arg7[%c0_11, %c0_12] : memref<16x32xf32, #tpu.memory_space<vmem>>, vector<16x32xf32>
      tpu.vector_store %arg7[%c0_11, %c0_12], %13 {strides = array<i32>} : memref<16x32xf32, #tpu.memory_space<vmem>>, vector<16x32xf32>,
    } else {
    }
    %c0 = arith.constant 0 : index
    %c0_1 = arith.constant 0 : index
    %3 = vector.load %arg7[%c0, %c0_1] : memref<16x32xf32, #tpu.memory_space<vmem>>, vector<16x32xf32>
    %c0_2 = arith.constant 0 : index
    %c0_3 = arith.constant 0 : index
    %4 = vector.load %arg3[%c0_2, %c0_3] : memref<16x32xf32, #tpu.memory_space<vmem>>, vector<16x32xf32>
    %5 = arith.truncf %4 : vector<16x32xf32> to vector<16x32xbf16>
    %c0_4 = arith.constant 0 : index
    %c0_5 = arith.constant 0 : index
    %6 = vector.load %arg4[%c0_4, %c0_5] : memref<32x32xbf16, #tpu.memory_space<vmem>>, vector<32x32xbf16>
    %cst = arith.constant dense<0.000000e+00> : vector<16x32xf32>
    %7 = tpu.matmul %5, %6, %cst {dimension_numbers = #tpu.dot_dimension_numbers<[1], [0], [0], [1], [0, 0, 1, 1], [], []>} : vector<16x32xbf16>, vector<32x32xbf16>, vector<16x32xf32> -> vector<16x32xf32>
    %8 = arith.addf %3, %7 : vector<16x32xf32>
    %c0_6 = arith.constant 0 : index
    %c0_7 = arith.constant 0 : index
    %9 = vector.load %arg7[%c0_6, %c0_7] : memref<16x32xf32, #tpu.memory_space<vmem>>, vector<16x32xf32>
    tpu.vector_store %arg7[%c0_6, %c0_7], %8 {strides = array<i32>} : memref<16x32xf32, #tpu.memory_space<vmem>>, vector<16x32xf32>,
    %c0_i32_8 = arith.constant 0 : i32
    %10 = arith.cmpi eq, %arg2, %c0_i32_8 : i32
    %11 = arith.extui %10 : i1 to i32
    %c0_i32_9 = arith.constant 0 : i32
    %12 = arith.cmpi ne, %11, %c0_i32_9 : i32
    scf.if %12 {
      %c0_10 = arith.constant 0 : index
      %c0_11 = arith.constant 0 : index
      %13 = vector.load %arg7[%c0_10, %c0_11] : memref<16x32xf32, #tpu.memory_space<vmem>>, vector<16x32xf32>
      %c0_12 = arith.constant 0 : index
      %c0_13 = arith.constant 0 : index
      %14 = vector.load %arg5[%c0_12, %c0_13] : memref<1x32xf32, #tpu.memory_space<vmem>>, vector<1x32xf32>
      %15 = vector.broadcast %14 : vector<1x32xf32> to vector<16x32xf32>
      %16 = arith.addf %13, %15 : vector<16x32xf32>
      %c0_14 = arith.constant 0 : index
      %c0_15 = arith.constant 0 : index
      %17 = vector.load %arg6[%c0_14, %c0_15] : memref<16x32xf32, #tpu.memory_space<vmem>>, vector<16x32xf32>
      tpu.vector_store %arg6[%c0_14, %c0_15], %16 {strides = array<i32>} : memref<16x32xf32, #tpu.memory_space<vmem>>, vector<16x32xf32>,
    } else {
    }
    return
  }
  func.func @transform_0(%arg0: i32, %arg1: i32, %arg2: i32) -> (i32, i32) {
    %c0_i32 = arith.constant 0 : i32
    return %arg0, %arg2 : i32, i32
  }
  func.func @transform_1(%arg0: i32, %arg1: i32, %arg2: i32) -> (i32, i32) {
    %c0_i32 = arith.constant 0 : i32
    return %arg2, %arg1 : i32, i32
  }
  func.func @transform_2(%arg0: i32, %arg1: i32, %arg2: i32) -> (i32, i32) {
    %c0_i32 = arith.constant 0 : i32
    %c0_i32_0 = arith.constant 0 : i32
    return %c0_i32, %arg1 : i32, i32
  }
  func.func @transform_3(%arg0: i32, %arg1: i32, %arg2: i32) -> (i32, i32) {
    %c0_i32 = arith.constant 0 : i32
    return %arg0, %arg1 : i32, i32
  }
}

module attributes {stable_mosaic.version = 11 : i64} {
  func.func @linear_kernel(%arg0: i32, %arg1: i32, %arg2: i32, %arg3: memref<16x32xf32, #tpu.memory_space<vmem>>, %arg4: memref<32x128xbf16, #tpu.memory_space<vmem>>, %arg5: memref<1x128xf32, #tpu.memory_space<vmem>>, %arg6: memref<16x128xf32, #tpu.memory_space<vmem>>, %arg7: memref<16x128xf32, #tpu.memory_space<vmem>>) attributes {dimension_semantics = [#tpu.dimension_semantics<parallel>, #tpu.dimension_semantics<parallel>, #tpu.dimension_semantics<arbitrary>], iteration_bounds = array<i64: 1, 1, 1>, scalar_prefetch = 0 : i64, scratch_operands = 1 : i64, tpu.core_type = #tpu.core_type<tc>, window_params = [{transform_indices = @transform_0, window_bounds = array<i64: 16, 32>}, {transform_indices = @transform_1, window_bounds = array<i64: 32, 128>}, {transform_indices = @transform_2, window_bounds = array<i64: 1, 128>}, {transform_indices = @transform_3, window_bounds = array<i64: 16, 128>}]} {
    %c0_i32 = arith.constant 0 : i32
    %0 = arith.cmpi eq, %arg2, %c0_i32 : i32
    %1 = arith.extui %0 : i1 to i32
    %c0_i32_0 = arith.constant 0 : i32
    %2 = arith.cmpi ne, %1, %c0_i32_0 : i32
    scf.if %2 {
      %cst_10 = arith.constant 0.000000e+00 : f32
      %13 = vector.broadcast %cst_10 : f32 to vector<16x128xf32>
      %c0_11 = arith.constant 0 : index
      %c0_12 = arith.constant 0 : index
      %14 = vector.load %arg7[%c0_11, %c0_12] : memref<16x128xf32, #tpu.memory_space<vmem>>, vector<16x128xf32>
      tpu.vector_store %arg7[%c0_11, %c0_12], %13 {strides = array<i32>} : memref<16x128xf32, #tpu.memory_space<vmem>>, vector<16x128xf32>,
    } else {
    }
    %c0 = arith.constant 0 : index
    %c0_1 = arith.constant 0 : index
    %3 = vector.load %arg7[%c0, %c0_1] : memref<16x128xf32, #tpu.memory_space<vmem>>, vector<16x128xf32>
    %c0_2 = arith.constant 0 : index
    %c0_3 = arith.constant 0 : index
    %4 = vector.load %arg3[%c0_2, %c0_3] : memref<16x32xf32, #tpu.memory_space<vmem>>, vector<16x32xf32>
    %5 = arith.truncf %4 : vector<16x32xf32> to vector<16x32xbf16>
    %c0_4 = arith.constant 0 : index
    %c0_5 = arith.constant 0 : index
    %6 = vector.load %arg4[%c0_4, %c0_5] : memref<32x128xbf16, #tpu.memory_space<vmem>>, vector<32x128xbf16>
    %cst = arith.constant dense<0.000000e+00> : vector<16x128xf32>
    %7 = tpu.matmul %5, %6, %cst {dimension_numbers = #tpu.dot_dimension_numbers<[1], [0], [0], [1], [0, 0, 1, 1], [], []>} : vector<16x32xbf16>, vector<32x128xbf16>, vector<16x128xf32> -> vector<16x128xf32>
    %8 = arith.addf %3, %7 : vector<16x128xf32>
    %c0_6 = arith.constant 0 : index
    %c0_7 = arith.constant 0 : index
    %9 = vector.load %arg7[%c0_6, %c0_7] : memref<16x128xf32, #tpu.memory_space<vmem>>, vector<16x128xf32>
    tpu.vector_store %arg7[%c0_6, %c0_7], %8 {strides = array<i32>} : memref<16x128xf32, #tpu.memory_space<vmem>>, vector<16x128xf32>,
    %c0_i32_8 = arith.constant 0 : i32
    %10 = arith.cmpi eq, %arg2, %c0_i32_8 : i32
    %11 = arith.extui %10 : i1 to i32
    %c0_i32_9 = arith.constant 0 : i32
    %12 = arith.cmpi ne, %11, %c0_i32_9 : i32
    scf.if %12 {
      %c0_10 = arith.constant 0 : index
      %c0_11 = arith.constant 0 : index
      %13 = vector.load %arg7[%c0_10, %c0_11] : memref<16x128xf32, #tpu.memory_space<vmem>>, vector<16x128xf32>
      %c0_12 = arith.constant 0 : index
      %c0_13 = arith.constant 0 : index
      %14 = vector.load %arg5[%c0_12, %c0_13] : memref<1x128xf32, #tpu.memory_space<vmem>>, vector<1x128xf32>
      %15 = vector.broadcast %14 : vector<1x128xf32> to vector<16x128xf32>
      %16 = arith.addf %13, %15 : vector<16x128xf32>
      %cst_14 = arith.constant 0.000000e+00 : f32
      %17 = vector.broadcast %cst_14 : f32 to vector<16x128xf32>
      %18 = arith.maximumf %16, %17 : vector<16x128xf32>
      %c0_15 = arith.constant 0 : index
      %c0_16 = arith.constant 0 : index
      %19 = vector.load %arg6[%c0_15, %c0_16] : memref<16x128xf32, #tpu.memory_space<vmem>>, vector<16x128xf32>
      tpu.vector_store %arg6[%c0_15, %c0_16], %18 {strides = array<i32>} : memref<16x128xf32, #tpu.memory_space<vmem>>, vector<16x128xf32>,
    } else {
    }
    return
  }
  func.func @transform_0(%arg0: i32, %arg1: i32, %arg2: i32) -> (i32, i32) {
    %c0_i32 = arith.constant 0 : i32
    return %arg0, %arg2 : i32, i32
  }
  func.func @transform_1(%arg0: i32, %arg1: i32, %arg2: i32) -> (i32, i32) {
    %c0_i32 = arith.constant 0 : i32
    return %arg2, %arg1 : i32, i32
  }
  func.func @transform_2(%arg0: i32, %arg1: i32, %arg2: i32) -> (i32, i32) {
    %c0_i32 = arith.constant 0 : i32
    %c0_i32_0 = arith.constant 0 : i32
    return %c0_i32, %arg1 : i32, i32
  }
  func.func @transform_3(%arg0: i32, %arg1: i32, %arg2: i32) -> (i32, i32) {
    %c0_i32 = arith.constant 0 : i32
    return %arg0, %arg1 : i32, i32
  }
}

module attributes {stable_mosaic.version = 11 : i64} {
  func.func @attention_kernel(%arg0: i32, %arg1: memref<1x8x4x8xf32, #tpu.memory_space<vmem>>, %arg2: memref<1x8x4x8xf32, #tpu.memory_space<vmem>>, %arg3: memref<1x8x4x8xf32, #tpu.memory_space<vmem>>, %arg4: memref<1x8x4x8xf32, #tpu.memory_space<vmem>>) attributes {dimension_semantics = [#tpu.dimension_semantics<parallel>], iteration_bounds = array<i64: 2>, scalar_prefetch = 0 : i64, scratch_operands = 0 : i64, tpu.core_type = #tpu.core_type<tc>, window_params = [{transform_indices = @transform_0, window_bounds = array<i64: 1, 8, 4, 8>}, {transform_indices = @transform_1, window_bounds = array<i64: 1, 8, 4, 8>}, {transform_indices = @transform_2, window_bounds = array<i64: 1, 8, 4, 8>}, {transform_indices = @transform_3, window_bounds = array<i64: 1, 8, 4, 8>}]} {
    %c0 = arith.constant 0 : index
    %c0_0 = arith.constant 0 : index
    %c0_1 = arith.constant 0 : index
    %c0_2 = arith.constant 0 : index
    %0 = vector.load %arg1[%c0, %c0_0, %c0_1, %c0_2] : memref<1x8x4x8xf32, #tpu.memory_space<vmem>>, vector<1x8x1x8xf32>
    %1 = vector.shape_cast %0 : vector<1x8x1x8xf32> to vector<8x8xf32>
    %2 = arith.truncf %1 : vector<8x8xf32> to vector<8x8xbf16>
    %c0_3 = arith.constant 0 : index
    %c0_4 = arith.constant 0 : index
    %c0_5 = arith.constant 0 : index
    %c0_6 = arith.constant 0 : index
    %3 = vector.load %arg2[%c0_3, %c0_4, %c0_5, %c0_6] : memref<1x8x4x8xf32, #tpu.memory_space<vmem>>, vector<1x8x1x8xf32>
    %4 = vector.shape_cast %3 : vector<1x8x1x8xf32> to vector<8x8xf32>
    %5 = arith.truncf %4 : vector<8x8xf32> to vector<8x8xbf16>
    %c0_7 = arith.constant 0 : index
    %c0_8 = arith.constant 0 : index
    %c0_9 = arith.constant 0 : index
    %c0_10 = arith.constant 0 : index
    %6 = vector.load %arg3[%c0_7, %c0_8, %c0_9, %c0_10] : memref<1x8x4x8xf32, #tpu.memory_space<vmem>>, vector<1x8x1x8xf32>
    %7 = vector.shape_cast %6 : vector<1x8x1x8xf32> to vector<8x8xf32>
    %8 = arith.truncf %7 : vector<8x8xf32> to vector<8x8xbf16>
    %cst = arith.constant dense<0.000000e+00> : vector<8x8xf32>
    %9 = tpu.matmul %2, %5, %cst {dimension_numbers = #tpu.dot_dimension_numbers<[1], [1], [0], [0], [0, 0, 1, 0], [], []>} : vector<8x8xbf16>, vector<8x8xbf16>, vector<8x8xf32> -> vector<8x8xf32>
    %cst_11 = arith.constant 0.353553385 : f32
    %10 = vector.broadcast %cst_11 : f32 to vector<8x8xf32>
    %11 = arith.mulf %9, %10 : vector<8x8xf32>
    %cst_12 = arith.constant dense<0xFF800000> : vector<8xf32>
    %12 = vector.multi_reduction <maximumf>, %11, %cst_12 [1] : vector<8x8xf32> to vector<8xf32>
    %13 = vector.shape_cast %12 : vector<8xf32> to vector<8x1xf32>
    %14 = vector.broadcast %13 : vector<8x1xf32> to vector<8x8xf32>
    %15 = arith.subf %11, %14 : vector<8x8xf32>
    %16 = math.exp %15 : vector<8x8xf32>
    %cst_13 = arith.constant dense<0.000000e+00> : vector<8xf32>
    %17 = vector.multi_reduction <add>, %16, %cst_13 [1] : vector<8x8xf32> to vector<8xf32>
    %18 = vector.shape_cast %17 : vector<8xf32> to vector<8x1xf32>
    %19 = tpu.reciprocal %18 {approx = true} : vector<8x1xf32> -> vector<8x1xf32>
    %20 = vector.broadcast %19 : vector<8x1xf32> to vector<8x8xf32>
    %21 = arith.mulf %16, %20 : vector<8x8xf32>
    %22 = arith.truncf %21 : vector<8x8xf32> to vector<8x8xbf16>
    %cst_14 = arith.constant dense<0.000000e+00> : vector<8x8xf32>
    %23 = tpu.matmul %22, %8, %cst_14 {dimension_numbers = #tpu.dot_dimension_numbers<[1], [0], [0], [1], [0, 0, 1, 1], [], []>} : vector<8x8xbf16>, vector<8x8xbf16>, vector<8x8xf32> -> vector<8x8xf32>
    %c0_15 = arith.constant 0 : index
    %c0_16 = arith.constant 0 : index
    %c0_17 = arith.constant 0 : index
    %c0_18 = arith.constant 0 : index
    %24 = vector.load %arg4[%c0_15, %c0_16, %c0_17, %c0_18] : memref<1x8x4x8xf32, #tpu.memory_space<vmem>>, vector<1x8x1x8xf32>
    %25 = vector.shape_cast %24 : vector<1x8x1x8xf32> to vector<8x8xf32>
    %26 = vector.shape_cast %23 : vector<8x8xf32> to vector<1x8x1x8xf32>
    tpu.vector_store %arg4[%c0_15, %c0_16, %c0_17, %c0_18], %26 {strides = array<i32>} : memref<1x8x4x8xf32, #tpu.memory_space<vmem>>, vector<1x8x1x8xf32>,
    %c0_19 = arith.constant 0 : index
    %c0_20 = arith.constant 0 : index
    %c1 = arith.constant 1 : index
    %c0_21 = arith.constant 0 : index
    %27 = vector.load %arg1[%c0_19, %c0_20, %c1, %c0_21] : memref<1x8x4x8xf32, #tpu.memory_space<vmem>>, vector<1x8x1x8xf32>
    %28 = vector.shape_cast %27 : vector<1x8x1x8xf32> to vector<8x8xf32>
    %29 = arith.truncf %28 : vector<8x8xf32> to vector<8x8xbf16>
    %c0_22 = arith.constant 0 : index
    %c0_23 = arith.constant 0 : index
    %c1_24 = arith.constant 1 : index
    %c0_25 = arith.constant 0 : index
    %30 = vector.load %arg2[%c0_22, %c0_23, %c1_24, %c0_25] : memref<1x8x4x8xf32, #tpu.memory_space<vmem>>, vector<1x8x1x8xf32>
    %31 = vector.shape_cast %30 : vector<1x8x1x8xf32> to vector<8x8xf32>
    %32 = arith.truncf %31 : vector<8x8xf32> to vector<8x8xbf16>
    %c0_26 = arith.constant 0 : index
    %c0_27 = arith.constant 0 : index
    %c1_28 = arith.constant 1 : index
    %c0_29 = arith.constant 0 : index
    %33 = vector.load %arg3[%c0_26, %c0_27, %c1_28, %c0_29] : memref<1x8x4x8xf32, #tpu.memory_space<vmem>>, vector<1x8x1x8xf32>
    %34 = vector.shape_cast %33 : vector<1x8x1x8xf32> to vector<8x8xf32>
    %35 = arith.truncf %34 : vector<8x8xf32> to vector<8x8xbf16>
    %cst_30 = arith.constant dense<0.000000e+00> : vector<8x8xf32>
    %36 = tpu.matmul %29, %32, %cst_30 {dimension_numbers = #tpu.dot_dimension_numbers<[1], [1], [0], [0], [0, 0, 1, 0], [], []>} : vector<8x8xbf16>, vector<8x8xbf16>, vector<8x8xf32> -> vector<8x8xf32>
    %cst_31 = arith.constant 0.353553385 : f32
    %37 = vector.broadcast %cst_31 : f32 to vector<8x8xf32>
    %38 = arith.mulf %36, %37 : vector<8x8xf32>
    %cst_32 = arith.constant dense<0xFF800000> : vector<8xf32>
    %39 = vector.multi_reduction <maximumf>, %38, %cst_32 [1] : vector<8x8xf32> to vector<8xf32>
    %40 = vector.shape_cast %39 : vector<8xf32> to vector<8x1xf32>
    %41 = vector.broadcast %40 : vector<8x1xf32> to vector<8x8xf32>
    %42 = arith.subf %38, %41 : vector<8x8xf32>
    %43 = math.exp %42 : vector<8x8xf32>
    %cst_33 = arith.constant dense<0.000000e+00> : vector<8xf32>
    %44 = vector.multi_reduction <add>, %43, %cst_33 [1] : vector<8x8xf32> to vector<8xf32>
    %45 = vector.shape_cast %44 : vector<8xf32> to vector<8x1xf32>
    %46 = tpu.reciprocal %45 {approx = true} : vector<8x1xf32> -> vector<8x1xf32>
    %47 = vector.broadcast %46 : vector<8x1xf32> to vector<8x8xf32>
    %48 = arith.mulf %43, %47 : vector<8x8xf32>
    %49 = arith.truncf %48 : vector<8x8xf32> to vector<8x8xbf16>
    %cst_34 = arith.constant dense<0.000000e+00> : vector<8x8xf32>
    %50 = tpu.matmul %49, %35, %cst_34 {dimension_numbers = #tpu.dot_dimension_numbers<[1], [0], [0], [1], [0, 0, 1, 1], [], []>} : vector<8x8xbf16>, vector<8x8xbf16>, vector<8x8xf32> -> vector<8x8xf32>
    %c0_35 = arith.constant 0 : index
    %c0_36 = arith.constant 0 : index
    %c1_37 = arith.constant 1 : index
    %c0_38 = arith.constant 0 : index
    %51 = vector.load %arg4[%c0_35, %c0_36, %c1_37, %c0_38] : memref<1x8x4x8xf32, #tpu.memory_space<vmem>>, vector<1x8x1x8xf32>
    %52 = vector.shape_cast %51 : vector<1x8x1x8xf32> to vector<8x8xf32>
    %53 = vector.shape_cast %50 : vector<8x8xf32> to vector<1x8x1x8xf32>
    tpu.vector_store %arg4[%c0_35, %c0_36, %c1_37, %c0_38], %53 {strides = array<i32>} : memref<1x8x4x8xf32, #tpu.memory_space<vmem>>, vector<1x8x1x8xf32>,
    %c0_39 = arith.constant 0 : index
    %c0_40 = arith.constant 0 : index
    %c2 = arith.constant 2 : index
    %c0_41 = arith.constant 0 : index
    %54 = vector.load %arg1[%c0_39, %c0_40, %c2, %c0_41] : memref<1x8x4x8xf32, #tpu.memory_space<vmem>>, vector<1x8x1x8xf32>
    %55 = vector.shape_cast %54 : vector<1x8x1x8xf32> to vector<8x8xf32>
    %56 = arith.truncf %55 : vector<8x8xf32> to vector<8x8xbf16>
    %c0_42 = arith.constant 0 : index
    %c0_43 = arith.constant 0 : index
    %c2_44 = arith.constant 2 : index
    %c0_45 = arith.constant 0 : index
    %57 = vector.load %arg2[%c0_42, %c0_43, %c2_44, %c0_45] : memref<1x8x4x8xf32, #tpu.memory_space<vmem>>, vector<1x8x1x8xf32>
    %58 = vector.shape_cast %57 : vector<1x8x1x8xf32> to vector<8x8xf32>
    %59 = arith.truncf %58 : vector<8x8xf32> to vector<8x8xbf16>
    %c0_46 = arith.constant 0 : index
    %c0_47 = arith.constant 0 : index
    %c2_48 = arith.constant 2 : index
    %c0_49 = arith.constant 0 : index
    %60 = vector.load %arg3[%c0_46, %c0_47, %c2_48, %c0_49] : memref<1x8x4x8xf32, #tpu.memory_space<vmem>>, vector<1x8x1x8xf32>
    %61 = vector.shape_cast %60 : vector<1x8x1x8xf32> to vector<8x8xf32>
    %62 = arith.truncf %61 : vector<8x8xf32> to vector<8x8xbf16>
    %cst_50 = arith.constant dense<0.000000e+00> : vector<8x8xf32>
    %63 = tpu.matmul %56, %59, %cst_50 {dimension_numbers = #tpu.dot_dimension_numbers<[1], [1], [0], [0], [0, 0, 1, 0], [], []>} : vector<8x8xbf16>, vector<8x8xbf16>, vector<8x8xf32> -> vector<8x8xf32>
    %cst_51 = arith.constant 0.353553385 : f32
    %64 = vector.broadcast %cst_51 : f32 to vector<8x8xf32>
    %65 = arith.mulf %63, %64 : vector<8x8xf32>
    %cst_52 = arith.constant dense<0xFF800000> : vector<8xf32>
    %66 = vector.multi_reduction <maximumf>, %65, %cst_52 [1] : vector<8x8xf32> to vector<8xf32>
    %67 = vector.shape_cast %66 : vector<8xf32> to vector<8x1xf32>
    %68 = vector.broadcast %67 : vector<8x1xf32> to vector<8x8xf32>
    %69 = arith.subf %65, %68 : vector<8x8xf32>
    %70 = math.exp %69 : vector<8x8xf32>
    %cst_53 = arith.constant dense<0.000000e+00> : vector<8xf32>
    %71 = vector.multi_reduction <add>, %70, %cst_53 [1] : vector<8x8xf32> to vector<8xf32>
    %72 = vector.shape_cast %71 : vector<8xf32> to vector<8x1xf32>
    %73 = tpu.reciprocal %72 {approx = true} : vector<8x1xf32> -> vector<8x1xf32>
    %74 = vector.broadcast %73 : vector<8x1xf32> to vector<8x8xf32>
    %75 = arith.mulf %70, %74 : vector<8x8xf32>
    %76 = arith.truncf %75 : vector<8x8xf32> to vector<8x8xbf16>
    %cst_54 = arith.constant dense<0.000000e+00> : vector<8x8xf32>
    %77 = tpu.matmul %76, %62, %cst_54 {dimension_numbers = #tpu.dot_dimension_numbers<[1], [0], [0], [1], [0, 0, 1, 1], [], []>} : vector<8x8xbf16>, vector<8x8xbf16>, vector<8x8xf32> -> vector<8x8xf32>
    %c0_55 = arith.constant 0 : index
    %c0_56 = arith.constant 0 : index
    %c2_57 = arith.constant 2 : index
    %c0_58 = arith.constant 0 : index
    %78 = vector.load %arg4[%c0_55, %c0_56, %c2_57, %c0_58] : memref<1x8x4x8xf32, #tpu.memory_space<vmem>>, vector<1x8x1x8xf32>
    %79 = vector.shape_cast %78 : vector<1x8x1x8xf32> to vector<8x8xf32>
    %80 = vector.shape_cast %77 : vector<8x8xf32> to vector<1x8x1x8xf32>
    tpu.vector_store %arg4[%c0_55, %c0_56, %c2_57, %c0_58], %80 {strides = array<i32>} : memref<1x8x4x8xf32, #tpu.memory_space<vmem>>, vector<1x8x1x8xf32>,
    %c0_59 = arith.constant 0 : index
    %c0_60 = arith.constant 0 : index
    %c3 = arith.constant 3 : index
    %c0_61 = arith.constant 0 : index
    %81 = vector.load %arg1[%c0_59, %c0_60, %c3, %c0_61] : memref<1x8x4x8xf32, #tpu.memory_space<vmem>>, vector<1x8x1x8xf32>
    %82 = vector.shape_cast %81 : vector<1x8x1x8xf32> to vector<8x8xf32>
    %83 = arith.truncf %82 : vector<8x8xf32> to vector<8x8xbf16>
    %c0_62 = arith.constant 0 : index
    %c0_63 = arith.constant 0 : index
    %c3_64 = arith.constant 3 : index
    %c0_65 = arith.constant 0 : index
    %84 = vector.load %arg2[%c0_62, %c0_63, %c3_64, %c0_65] : memref<1x8x4x8xf32, #tpu.memory_space<vmem>>, vector<1x8x1x8xf32>
    %85 = vector.shape_cast %84 : vector<1x8x1x8xf32> to vector<8x8xf32>
    %86 = arith.truncf %85 : vector<8x8xf32> to vector<8x8xbf16>
    %c0_66 = arith.constant 0 : index
    %c0_67 = arith.constant 0 : index
    %c3_68 = arith.constant 3 : index
    %c0_69 = arith.constant 0 : index
    %87 = vector.load %arg3[%c0_66, %c0_67, %c3_68, %c0_69] : memref<1x8x4x8xf32, #tpu.memory_space<vmem>>, vector<1x8x1x8xf32>
    %88 = vector.shape_cast %87 : vector<1x8x1x8xf32> to vector<8x8xf32>
    %89 = arith.truncf %88 : vector<8x8xf32> to vector<8x8xbf16>
    %cst_70 = arith.constant dense<0.000000e+00> : vector<8x8xf32>
    %90 = tpu.matmul %83, %86, %cst_70 {dimension_numbers = #tpu.dot_dimension_numbers<[1], [1], [0], [0], [0, 0, 1, 0], [], []>} : vector<8x8xbf16>, vector<8x8xbf16>, vector<8x8xf32> -> vector<8x8xf32>
    %cst_71 = arith.constant 0.353553385 : f32
    %91 = vector.broadcast %cst_71 : f32 to vector<8x8xf32>
    %92 = arith.mulf %90, %91 : vector<8x8xf32>
    %cst_72 = arith.constant dense<0xFF800000> : vector<8xf32>
    %93 = vector.multi_reduction <maximumf>, %92, %cst_72 [1] : vector<8x8xf32> to vector<8xf32>
    %94 = vector.shape_cast %93 : vector<8xf32> to vector<8x1xf32>
    %95 = vector.broadcast %94 : vector<8x1xf32> to vector<8x8xf32>
    %96 = arith.subf %92, %95 : vector<8x8xf32>
    %97 = math.exp %96 : vector<8x8xf32>
    %cst_73 = arith.constant dense<0.000000e+00> : vector<8xf32>
    %98 = vector.multi_reduction <add>, %97, %cst_73 [1] : vector<8x8xf32> to vector<8xf32>
    %99 = vector.shape_cast %98 : vector<8xf32> to vector<8x1xf32>
    %100 = tpu.reciprocal %99 {approx = true} : vector<8x1xf32> -> vector<8x1xf32>
    %101 = vector.broadcast %100 : vector<8x1xf32> to vector<8x8xf32>
    %102 = arith.mulf %97, %101 : vector<8x8xf32>
    %103 = arith.truncf %102 : vector<8x8xf32> to vector<8x8xbf16>
    %cst_74 = arith.constant dense<0.000000e+00> : vector<8x8xf32>
    %104 = tpu.matmul %103, %89, %cst_74 {dimension_numbers = #tpu.dot_dimension_numbers<[1], [0], [0], [1], [0, 0, 1, 1], [], []>} : vector<8x8xbf16>, vector<8x8xbf16>, vector<8x8xf32> -> vector<8x8xf32>
    %c0_75 = arith.constant 0 : index
    %c0_76 = arith.constant 0 : index
    %c3_77 = arith.constant 3 : index
    %c0_78 = arith.constant 0 : index
    %105 = vector.load %arg4[%c0_75, %c0_76, %c3_77, %c0_78] : memref<1x8x4x8xf32, #tpu.memory_space<vmem>>, vector<1x8x1x8xf32>
    %106 = vector.shape_cast %105 : vector<1x8x1x8xf32> to vector<8x8xf32>
    %107 = vector.shape_cast %104 : vector<8x8xf32> to vector<1x8x1x8xf32>
    tpu.vector_store %arg4[%c0_75, %c0_76, %c3_77, %c0_78], %107 {strides = array<i32>} : memref<1x8x4x8xf32, #tpu.memory_space<vmem>>, vector<1x8x1x8xf32>,
    return
  }
  func.func @transform_0(%arg0: i32) -> (i32, i32, i32, i32) {
    %c0_i32 = arith.constant 0 : i32
    %c0_i32_0 = arith.constant 0 : i32
    %c0_i32_1 = arith.constant 0 : i32
    %c0_i32_2 = arith.constant 0 : i32
    return %arg0, %c0_i32, %c0_i32_0, %c0_i32_1 : i32, i32, i32, i32
  }
  func.func @transform_1(%arg0: i32) -> (i32, i32, i32, i32) {
    %c0_i32 = arith.constant 0 : i32
    %c0_i32_0 = arith.constant 0 : i32
    %c0_i32_1 = arith.constant 0 : i32
    %c0_i32_2 = arith.constant 0 : i32
    return %arg0, %c0_i32, %c0_i32_0, %c0_i32_1 : i32, i32, i32, i32
  }
  func.func @transform_2(%arg0: i32) -> (i32, i32, i32, i32) {
    %c0_i32 = arith.constant 0 : i32
    %c0_i32_0 = arith.constant 0 : i32
    %c0_i32_1 = arith.constant 0 : i32
    %c0_i32_2 = arith.constant 0 : i32
    return %arg0, %c0_i32, %c0_i32_0, %c0_i32_1 : i32, i32, i32, i32
  }
  func.func @transform_3(%arg0: i32) -> (i32, i32, i32, i32) {
    %c0_i32 = arith.constant 0 : i32
    %c0_i32_0 = arith.constant 0 : i32
    %c0_i32_1 = arith.constant 0 : i32
    %c0_i32_2 = arith.constant 0 : i32
    return %arg0, %c0_i32, %c0_i32_0, %c0_i32_1 : i32, i32, i32, i32
  }
}

module attributes {stable_mosaic.version = 11 : i64} {
  func.func @linear_kernel(%arg0: i32, %arg1: i32, %arg2: i32, %arg3: memref<16x32xf32, #tpu.memory_space<vmem>>, %arg4: memref<32x64xbf16, #tpu.memory_space<vmem>>, %arg5: memref<1x64xf32, #tpu.memory_space<vmem>>, %arg6: memref<16x64xf32, #tpu.memory_space<vmem>>, %arg7: memref<16x64xf32, #tpu.memory_space<vmem>>) attributes {dimension_semantics = [#tpu.dimension_semantics<parallel>, #tpu.dimension_semantics<parallel>, #tpu.dimension_semantics<arbitrary>], iteration_bounds = array<i64: 1, 1, 1>, scalar_prefetch = 0 : i64, scratch_operands = 1 : i64, tpu.core_type = #tpu.core_type<tc>, window_params = [{transform_indices = @transform_0, window_bounds = array<i64: 16, 32>}, {transform_indices = @transform_1, window_bounds = array<i64: 32, 64>}, {transform_indices = @transform_2, window_bounds = array<i64: 1, 64>}, {transform_indices = @transform_3, window_bounds = array<i64: 16, 64>}]} {
    %c0_i32 = arith.constant 0 : i32
    %0 = arith.cmpi eq, %arg2, %c0_i32 : i32
    %1 = arith.extui %0 : i1 to i32
    %c0_i32_0 = arith.constant 0 : i32
    %2 = arith.cmpi ne, %1, %c0_i32_0 : i32
    scf.if %2 {
      %cst_10 = arith.constant 0.000000e+00 : f32
      %13 = vector.broadcast %cst_10 : f32 to vector<16x64xf32>
      %c0_11 = arith.constant 0 : index
      %c0_12 = arith.constant 0 : index
      %14 = vector.load %arg7[%c0_11, %c0_12] : memref<16x64xf32, #tpu.memory_space<vmem>>, vector<16x64xf32>
      tpu.vector_store %arg7[%c0_11, %c0_12], %13 {strides = array<i32>} : memref<16x64xf32, #tpu.memory_space<vmem>>, vector<16x64xf32>,
    } else {
    }
    %c0 = arith.constant 0 : index
    %c0_1 = arith.constant 0 : index
    %3 = vector.load %arg7[%c0, %c0_1] : memref<16x64xf32, #tpu.memory_space<vmem>>, vector<16x64xf32>
    %c0_2 = arith.constant 0 : index
    %c0_3 = arith.constant 0 : index
    %4 = vector.load %arg3[%c0_2, %c0_3] : memref<16x32xf32, #tpu.memory_space<vmem>>, vector<16x32xf32>
    %5 = arith.truncf %4 : vector<16x32xf32> to vector<16x32xbf16>
    %c0_4 = arith.constant 0 : index
    %c0_5 = arith.constant 0 : index
    %6 = vector.load %arg4[%c0_4, %c0_5] : memref<32x64xbf16, #tpu.memory_space<vmem>>, vector<32x64xbf16>
    %cst = arith.constant dense<0.000000e+00> : vector<16x64xf32>
    %7 = tpu.matmul %5, %6, %cst {dimension_numbers = #tpu.dot_dimension_numbers<[1], [0], [0], [1], [0, 0, 1, 1], [], []>} : vector<16x32xbf16>, vector<32x64xbf16>, vector<16x64xf32> -> vector<16x64xf32>
    %8 = arith.addf %3, %7 : vector<16x64xf32>
    %c0_6 = arith.constant 0 : index
    %c0_7 = arith.constant 0 : index
    %9 = vector.load %arg7[%c0_6, %c0_7] : memref<16x64xf32, #tpu.memory_space<vmem>>, vector<16x64xf32>
    tpu.vector_store %arg7[%c0_6, %c0_7], %8 {strides = array<i32>} : memref<16x64xf32, #tpu.memory_space<vmem>>, vector<16x64xf32>,
    %c0_i32_8 = arith.constant 0 : i32
    %10 = arith.cmpi eq, %arg2, %c0_i32_8 : i32
    %11 = arith.extui %10 : i1 to i32
    %c0_i32_9 = arith.constant 0 : i32
    %12 = arith.cmpi ne, %11, %c0_i32_9 : i32
    scf.if %12 {
      %c0_10 = arith.constant 0 : index
      %c0_11 = arith.constant 0 : index
      %13 = vector.load %arg7[%c0_10, %c0_11] : memref<16x64xf32, #tpu.memory_space<vmem>>, vector<16x64xf32>
      %c0_12 = arith.constant 0 : index
      %c0_13 = arith.constant 0 : index
      %14 = vector.load %arg5[%c0_12, %c0_13] : memref<1x64xf32, #tpu.memory_space<vmem>>, vector<1x64xf32>
      %15 = vector.broadcast %14 : vector<1x64xf32> to vector<16x64xf32>
      %16 = arith.addf %13, %15 : vector<16x64xf32>
      %c0_14 = arith.constant 0 : index
      %c0_15 = arith.constant 0 : index
      %17 = vector.load %arg6[%c0_14, %c0_15] : memref<16x64xf32, #tpu.memory_space<vmem>>, vector<16x64xf32>
      tpu.vector_store %arg6[%c0_14, %c0_15], %16 {strides = array<i32>} : memref<16x64xf32, #tpu.memory_space<vmem>>, vector<16x64xf32>,
    } else {
    }
    return
  }
  func.func @transform_0(%arg0: i32, %arg1: i32, %arg2: i32) -> (i32, i32) {
    %c0_i32 = arith.constant 0 : i32
    return %arg0, %arg2 : i32, i32
  }
  func.func @transform_1(%arg0: i32, %arg1: i32, %arg2: i32) -> (i32, i32) {
    %c0_i32 = arith.constant 0 : i32
    return %arg2, %arg1 : i32, i32
  }
  func.func @transform_2(%arg0: i32, %arg1: i32, %arg2: i32) -> (i32, i32) {
    %c0_i32 = arith.constant 0 : i32
    %c0_i32_0 = arith.constant 0 : i32
    return %c0_i32, %arg1 : i32, i32
  }
  func.func @transform_3(%arg0: i32, %arg1: i32, %arg2: i32) -> (i32, i32) {
    %c0_i32 = arith.constant 0 : i32
    return %arg0, %arg1 : i32, i32
  }
}

module attributes {stable_mosaic.version = 11 : i64} {
  func.func @linear_kernel(%arg0: i32, %arg1: i32, %arg2: i32, %arg3: memref<16x128xf32, #tpu.memory_space<vmem>>, %arg4: memref<128x32xbf16, #tpu.memory_space<vmem>>, %arg5: memref<1x32xf32, #tpu.memory_space<vmem>>, %arg6: memref<16x32xf32, #tpu.memory_space<vmem>>, %arg7: memref<16x32xf32, #tpu.memory_space<vmem>>) attributes {dimension_semantics = [#tpu.dimension_semantics<parallel>, #tpu.dimension_semantics<parallel>, #tpu.dimension_semantics<arbitrary>], iteration_bounds = array<i64: 1, 1, 1>, scalar_prefetch = 0 : i64, scratch_operands = 1 : i64, tpu.core_type = #tpu.core_type<tc>, window_params = [{transform_indices = @transform_0, window_bounds = array<i64: 16, 128>}, {transform_indices = @transform_1, window_bounds = array<i64: 128, 32>}, {transform_indices = @transform_2, window_bounds = array<i64: 1, 32>}, {transform_indices = @transform_3, window_bounds = array<i64: 16, 32>}]} {
    %c0_i32 = arith.constant 0 : i32
    %0 = arith.cmpi eq, %arg2, %c0_i32 : i32
    %1 = arith.extui %0 : i1 to i32
    %c0_i32_0 = arith.constant 0 : i32
    %2 = arith.cmpi ne, %1, %c0_i32_0 : i32
    scf.if %2 {
      %cst_10 = arith.constant 0.000000e+00 : f32
      %13 = vector.broadcast %cst_10 : f32 to vector<16x32xf32>
      %c0_11 = arith.constant 0 : index
      %c0_12 = arith.constant 0 : index
      %14 = vector.load %arg7[%c0_11, %c0_12] : memref<16x32xf32, #tpu.memory_space<vmem>>, vector<16x32xf32>
      tpu.vector_store %arg7[%c0_11, %c0_12], %13 {strides = array<i32>} : memref<16x32xf32, #tpu.memory_space<vmem>>, vector<16x32xf32>,
    } else {
    }
    %c0 = arith.constant 0 : index
    %c0_1 = arith.constant 0 : index
    %3 = vector.load %arg7[%c0, %c0_1] : memref<16x32xf32, #tpu.memory_space<vmem>>, vector<16x32xf32>
    %c0_2 = arith.constant 0 : index
    %c0_3 = arith.constant 0 : index
    %4 = vector.load %arg3[%c0_2, %c0_3] : memref<16x128xf32, #tpu.memory_space<vmem>>, vector<16x128xf32>
    %5 = arith.truncf %4 : vector<16x128xf32> to vector<16x128xbf16>
    %c0_4 = arith.constant 0 : index
    %c0_5 = arith.constant 0 : index
    %6 = vector.load %arg4[%c0_4, %c0_5] : memref<128x32xbf16, #tpu.memory_space<vmem>>, vector<128x32xbf16>
    %cst = arith.constant dense<0.000000e+00> : vector<16x32xf32>
    %7 = tpu.matmul %5, %6, %cst {dimension_numbers = #tpu.dot_dimension_numbers<[1], [0], [0], [1], [0, 0, 1, 1], [], []>} : vector<16x128xbf16>, vector<128x32xbf16>, vector<16x32xf32> -> vector<16x32xf32>
    %8 = arith.addf %3, %7 : vector<16x32xf32>
    %c0_6 = arith.constant 0 : index
    %c0_7 = arith.constant 0 : index
    %9 = vector.load %arg7[%c0_6, %c0_7] : memref<16x32xf32, #tpu.memory_space<vmem>>, vector<16x32xf32>
    tpu.vector_store %arg7[%c0_6, %c0_7], %8 {strides = array<i32>} : memref<16x32xf32, #tpu.memory_space<vmem>>, vector<16x32xf32>,
    %c0_i32_8 = arith.constant 0 : i32
    %10 = arith.cmpi eq, %arg2, %c0_i32_8 : i32
    %11 = arith.extui %10 : i1 to i32
    %c0_i32_9 = arith.constant 0 : i32
    %12 = arith.cmpi ne, %11, %c0_i32_9 : i32
    scf.if %12 {
      %c0_10 = arith.constant 0 : index
      %c0_11 = arith.constant 0 : index
      %13 = vector.load %arg7[%c0_10, %c0_11] : memref<16x32xf32, #tpu.memory_space<vmem>>, vector<16x32xf32>
      %c0_12 = arith.constant 0 : index
      %c0_13 = arith.constant 0 : index
      %14 = vector.load %arg5[%c0_12, %c0_13] : memref<1x32xf32, #tpu.memory_space<vmem>>, vector<1x32xf32>
      %15 = vector.broadcast %14 : vector<1x32xf32> to vector<16x32xf32>
      %16 = arith.addf %13, %15 : vector<16x32xf32>
      %c0_14 = arith.constant 0 : index
      %c0_15 = arith.constant 0 : index
      %17 = vector.load %arg6[%c0_14, %c0_15] : memref<16x32xf32, #tpu.memory_space<vmem>>, vector<16x32xf32>
      tpu.vector_store %arg6[%c0_14, %c0_15], %16 {strides = array<i32>} : memref<16x32xf32, #tpu.memory_space<vmem>>, vector<16x32xf32>,
    } else {
    }
    return
  }
  func.func @transform_0(%arg0: i32, %arg1: i32, %arg2: i32) -> (i32, i32) {
    %c0_i32 = arith.constant 0 : i32
    return %arg0, %arg2 : i32, i32
  }
  func.func @transform_1(%arg0: i32, %arg1: i32, %arg2: i32) -> (i32, i32) {
    %c0_i32 = arith.constant 0 : i32
    return %arg2, %arg1 : i32, i32
  }
  func.func @transform_2(%arg0: i32, %arg1: i32, %arg2: i32) -> (i32, i32) {
    %c0_i32 = arith.constant 0 : i32
    %c0_i32_0 = arith.constant 0 : i32
    return %c0_i32, %arg1 : i32, i32
  }
  func.func @transform_3(%arg0: i32, %arg1: i32, %arg2: i32) -> (i32, i32) {
    %c0_i32 = arith.constant 0 : i32
    return %arg0, %arg1 : i32, i32
  }
}

module attributes {stable_mosaic.version = 11 : i64} {
  func.func @linear_kernel(%arg0: i32, %arg1: i32, %arg2: i32, %arg3: memref<16x32xf32, #tpu.memory_space<vmem>>, %arg4: memref<32x64xbf16, #tpu.memory_space<vmem>>, %arg5: memref<1x64xf32, #tpu.memory_space<vmem>>, %arg6: memref<16x64xf32, #tpu.memory_space<vmem>>, %arg7: memref<16x64xf32, #tpu.memory_space<vmem>>) attributes {dimension_semantics = [#tpu.dimension_semantics<parallel>, #tpu.dimension_semantics<parallel>, #tpu.dimension_semantics<arbitrary>], iteration_bounds = array<i64: 1, 1, 1>, scalar_prefetch = 0 : i64, scratch_operands = 1 : i64, tpu.core_type = #tpu.core_type<tc>, window_params = [{transform_indices = @transform_0, window_bounds = array<i64: 16, 32>}, {transform_indices = @transform_1, window_bounds = array<i64: 32, 64>}, {transform_indices = @transform_2, window_bounds = array<i64: 1, 64>}, {transform_indices = @transform_3, window_bounds = array<i64: 16, 64>}]} {
    %c0_i32 = arith.constant 0 : i32
    %0 = arith.cmpi eq, %arg2, %c0_i32 : i32
    %1 = arith.extui %0 : i1 to i32
    %c0_i32_0 = arith.constant 0 : i32
    %2 = arith.cmpi ne, %1, %c0_i32_0 : i32
    scf.if %2 {
      %cst_10 = arith.constant 0.000000e+00 : f32
      %13 = vector.broadcast %cst_10 : f32 to vector<16x64xf32>
      %c0_11 = arith.constant 0 : index
      %c0_12 = arith.constant 0 : index
      %14 = vector.load %arg7[%c0_11, %c0_12] : memref<16x64xf32, #tpu.memory_space<vmem>>, vector<16x64xf32>
      tpu.vector_store %arg7[%c0_11, %c0_12], %13 {strides = array<i32>} : memref<16x64xf32, #tpu.memory_space<vmem>>, vector<16x64xf32>,
    } else {
    }
    %c0 = arith.constant 0 : index
    %c0_1 = arith.constant 0 : index
    %3 = vector.load %arg7[%c0, %c0_1] : memref<16x64xf32, #tpu.memory_space<vmem>>, vector<16x64xf32>
    %c0_2 = arith.constant 0 : index
    %c0_3 = arith.constant 0 : index
    %4 = vector.load %arg3[%c0_2, %c0_3] : memref<16x32xf32, #tpu.memory_space<vmem>>, vector<16x32xf32>
    %5 = arith.truncf %4 : vector<16x32xf32> to vector<16x32xbf16>
    %c0_4 = arith.constant 0 : index
    %c0_5 = arith.constant 0 : index
    %6 = vector.load %arg4[%c0_4, %c0_5] : memref<32x64xbf16, #tpu.memory_space<vmem>>, vector<32x64xbf16>
    %cst = arith.constant dense<0.000000e+00> : vector<16x64xf32>
    %7 = tpu.matmul %5, %6, %cst {dimension_numbers = #tpu.dot_dimension_numbers<[1], [0], [0], [1], [0, 0, 1, 1], [], []>} : vector<16x32xbf16>, vector<32x64xbf16>, vector<16x64xf32> -> vector<16x64xf32>
    %8 = arith.addf %3, %7 : vector<16x64xf32>
    %c0_6 = arith.constant 0 : index
    %c0_7 = arith.constant 0 : index
    %9 = vector.load %arg7[%c0_6, %c0_7] : memref<16x64xf32, #tpu.memory_space<vmem>>, vector<16x64xf32>
    tpu.vector_store %arg7[%c0_6, %c0_7], %8 {strides = array<i32>} : memref<16x64xf32, #tpu.memory_space<vmem>>, vector<16x64xf32>,
    %c0_i32_8 = arith.constant 0 : i32
    %10 = arith.cmpi eq, %arg2, %c0_i32_8 : i32
    %11 = arith.extui %10 : i1 to i32
    %c0_i32_9 = arith.constant 0 : i32
    %12 = arith.cmpi ne, %11, %c0_i32_9 : i32
    scf.if %12 {
      %c0_10 = arith.constant 0 : index
      %c0_11 = arith.constant 0 : index
      %13 = vector.load %arg7[%c0_10, %c0_11] : memref<16x64xf32, #tpu.memory_space<vmem>>, vector<16x64xf32>
      %c0_12 = arith.constant 0 : index
      %c0_13 = arith.constant 0 : index
      %14 = vector.load %arg5[%c0_12, %c0_13] : memref<1x64xf32, #tpu.memory_space<vmem>>, vector<1x64xf32>
      %15 = vector.broadcast %14 : vector<1x64xf32> to vector<16x64xf32>
      %16 = arith.addf %13, %15 : vector<16x64xf32>
      %cst_14 = arith.constant dense<0xFF800000> : vector<16xf32>
      %17 = vector.multi_reduction <maximumf>, %16, %cst_14 [1] : vector<16x64xf32> to vector<16xf32>
      %18 = vector.shape_cast %17 : vector<16xf32> to vector<16x1xf32>
      %19 = vector.broadcast %18 : vector<16x1xf32> to vector<16x64xf32>
      %20 = arith.subf %16, %19 : vector<16x64xf32>
      %21 = math.exp %20 : vector<16x64xf32>
      %cst_15 = arith.constant dense<0.000000e+00> : vector<16xf32>
      %22 = vector.multi_reduction <add>, %21, %cst_15 [1] : vector<16x64xf32> to vector<16xf32>
      %23 = vector.shape_cast %22 : vector<16xf32> to vector<16x1xf32>
      %24 = math.log %23 : vector<16x1xf32>
      %25 = vector.broadcast %24 : vector<16x1xf32> to vector<16x64xf32>
      %26 = arith.subf %20, %25 : vector<16x64xf32>
      %c0_16 = arith.constant 0 : index
      %c0_17 = arith.constant 0 : index
      %27 = vector.load %arg6[%c0_16, %c0_17] : memref<16x64xf32, #tpu.memory_space<vmem>>, vector<16x64xf32>
      tpu.vector_store %arg6[%c0_16, %c0_17], %26 {strides = array<i32>} : memref<16x64xf32, #tpu.memory_space<vmem>>, vector<16x64xf32>,
    } else {
    }
    return
  }
  func.func @transform_0(%arg0: i32, %arg1: i32, %arg2: i32) -> (i32, i32) {
    %c0_i32 = arith.constant 0 : i32
    return %arg0, %arg2 : i32, i32
  }
  func.func @transform_1(%arg0: i32, %arg1: i32, %arg2: i32) -> (i32, i32) {
    %c0_i32 = arith.constant 0 : i32
    return %arg2, %arg1 : i32, i32
  }
  func.func @transform_2(%arg0: i32, %arg1: i32, %arg2: i32) -> (i32, i32) {
    %c0_i32 = arith.constant 0 : i32
    %c0_i32_0 = arith.constant 0 : i32
    return %c0_i32, %arg1 : i32, i32
  }
  func.func @transform_3(%arg0: i32, %arg1: i32, %arg2: i32) -> (i32, i32) {
    %c0_i32 = arith.constant 0 : i32
    return %arg0, %arg1 : i32, i32
  }
}

</mosaic_0001>

<llo_original>
// kernel: decoder_forward.23
$region0: #{decoder_forward.23}
  #allocation0 [shape = 'u32[]', space=smem, size = 0x4, offset = 0x4, fixed_abs, tag = 'smem constant byte address 0x4 - core index']
  #allocation1 [shape = 'u32[144,128]{1,0:T(1,128)}', space=vmem, size = 0x12000, scoped, tag = 'internal scratch']
  #allocation2 [shape = 'f32[16,128]{1,0:T(8,128)}', space=vmem, size = 0x2000, scoped, tag = 'scratch operand']
  %s0 = inlined_call_operand.vmem [shape: f32[16,32], index: 0, kind: input, shape index: {}]
  %s1 = inlined_call_operand.vmem [shape: bf16[32,128], index: 1, kind: input, shape index: {}]
  %s2 = inlined_call_operand.vmem [shape: f32[1,128], index: 2, kind: input, shape index: {}]
  %s3 = inlined_call_operand.vmem [shape: f32[16,128], index: 3, kind: output, shape index: {}]
  %s4 = sld [smem:[#allocation0]]
  $region30: #{decoder_forward.23} parent=0
    _
  %s6 = ssub.s32 1, %s4
  %s7 = scalar_select 0, %s6, %s4
  // Predicated region
  $region2: #{decoder_forward.23} parent=0 // pred_check
    _
  $region3: #{decoder_forward.23} parent=0 // pred_check_branch
    %9 = sbr.rel (0) target = $region5
  $region4: #{decoder_forward.23} parent=0 // pred_region
    _
  $region5: #{decoder_forward.23} parent=0 // pred_fallthru
    _
  // Predicated region
  $region6: #{decoder_forward.23} parent=0 // pred_check
    _
  $region7: #{decoder_forward.23} parent=0 // pred_check_branch
    %11 = sbr.rel (0) target = $region9
  $region8: #{decoder_forward.23} parent=0 // pred_region
    _
  $region9: #{decoder_forward.23} parent=0 // pred_fallthru
    _
  // Predicated region
  $region10: #{decoder_forward.23} parent=0 // pred_check
    _
  $region11: #{decoder_forward.23} parent=0 // pred_check_branch
    %13 = sbr.rel (0) target = $region13
  $region12: #{decoder_forward.23} parent=0 // pred_region
    _
  $region13: #{decoder_forward.23} parent=0 // pred_fallthru
    _
  %p15 = scmp.eq.s32.totalorder 0, 0
  // Predicated region
  $region14: #{decoder_forward.23} parent=0 // pred_check
    %p16 = pneg %p15
  $region15: #{decoder_forward.23} parent=0 // pred_check_branch
    %18 = sbr.rel (%p16) target = $region17
  $region16: #{decoder_forward.23} parent=0 // pred_region
    %19 = vst [vmem:[#allocation2] sm:$0xff] 0.0
    %20 = vst [vmem:[#allocation2 + $0x8] sm:$0xff] 0.0
  $region17: #{decoder_forward.23} parent=0 // pred_fallthru
    _
  %v21 = vld [vmem:[#allocation2] sm:$0xff]
  %v22 = vld [vmem:[#allocation2 + $0x8] sm:$0xff]
  %v23 = vld [vmem:[%s0] sm:$0xff]
  %v24 = vld [vmem:[%s0 + $0x8] sm:$0xff]
  %v25 = vpack.c.bf16 %v24, %v23
  %v26 = vld [vmem:[%s1] sm:$0xf]
  %v27 = vld [vmem:[%s1 + $0x4] sm:$0xf]
  %v28 = vld [vmem:[%s1 + $0x8] sm:$0xf]
  %v29 = vld [vmem:[%s1 + $0xc] sm:$0xf]
  %v34 = vunpack.c.l.b16 %v26
  %v35 = vunpack.c.l.b16 %v27
  %v36 = vunpack.c.l.b16 %v28
  %v37 = vunpack.c.l.b16 %v29
  %v38 = vpack.c.b16 %v35, %v34
  %v39 = vpack.c.b16 %v37, %v36
  %vm42 = vcmask 261120
  %v44 = vsel %vm42, %v25, 0
  %46 = vmatprep.subr.bf16.mxu0 0
  %47 = vmatpush1.bf16.msra.mxu0 %v38
  %48 = vmatprep.subr.bf16.mxu0 0
  %49 = vmatpush1.bf16.msra.mxu0 %v39
  %50 = vmatprep.subr.bf16.mxu0 0
  %51 = vmatpush1.bf16.msra.mxu0 0
  %52 = vmatprep.subr.bf16.mxu0 0
  %53 = vmatpush1.bf16.msra.mxu0 0
  %54 = vmatprep.subr.bf16.mxu0 0
  %55 = vmatpush1.bf16.msra.mxu0 0
  %56 = vmatprep.subr.bf16.mxu0 0
  %57 = vmatpush1.bf16.msra.mxu0 0
  %58 = vmatprep.subr.bf16.mxu0 0
  %59 = vmatpush1.bf16.msra.mxu0 0
  %60 = vmatprep.subr.bf16.mxu0 0
  %61 = vmatpush1.bf16.msra.mxu0 0
  %62 = vmatprep.subr.bf16.mxu0 0
  %63 = vmatpush1.bf16.msra.mxu0 0
  %64 = vmatprep.subr.bf16.mxu0 0
  %65 = vmatpush1.bf16.msra.mxu0 0
  %66 = vmatprep.subr.bf16.mxu0 0
  %67 = vmatpush1.bf16.msra.mxu0 0
  %68 = vmatprep.subr.bf16.mxu0 0
  %69 = vmatpush1.bf16.msra.mxu0 0
  %70 = vmatprep.subr.bf16.mxu0 0
  %71 = vmatpush1.bf16.msra.mxu0 0
  %72 = vmatprep.subr.bf16.mxu0 0
  %73 = vmatpush1.bf16.msra.mxu0 0
  %74 = vmatprep.subr.bf16.mxu0 0
  %75 = vmatpush1.bf16.msra.mxu0 0
  %76 = vmatprep.subr.bf16.mxu0 0
  %77 = vmatpush1.bf16.msra.mxu0 0
  %78 = vmatprep.mubr.bf16.mxu0 0
  %79 = vmatmul.mubr.bf16.gmra.mrb[0].mxu0 %v44
  %v80 = vpop.f32.mrb[0].mxu0
  %v81 = vadd.f32 0.0, %v80
  %v82 = vpop.f32.mrb[0].mxu0
  %v83 = vpop.f32.mrb[0].mxu0
  %v84 = vadd.f32 0.0, %v83
  %v85 = vpop.f32.mrb[0].mxu0
  %86 = vdwg.mxu0
  %v87 = vadd.f32 %v21, %v81
  %v88 = vadd.f32 %v22, %v84
  %89 = vst [vmem:[#allocation2] sm:$0xff] %v87
  %90 = vst [vmem:[#allocation2 + $0x8] sm:$0xff] %v88
  // Predicated region
  $region18: #{decoder_forward.23} parent=0 // pred_check
    %p91 = pneg %p15
  $region19: #{decoder_forward.23} parent=0 // pred_check_branch
    %93 = sbr.rel (%p91) target = $region21
  $region20: #{decoder_forward.23} parent=0 // pred_region
    %v94 = vld [vmem:[#allocation2] sm:$0xff]
    %v95 = vld [vmem:[#allocation2 + $0x8] sm:$0xff]
    %v96 = vld [vmem:[%s2] sm:$0x1]
    %v98 = vlaneseq
    %v99 = vshrl.u32 %v98, 7
    %v100 = vsub.s32 0, %v99
    %v101 = vrot.slane %v96, %v100
    %v103 = vadd.f32 %v94, %v101
    %v104 = vadd.f32 %v95, %v101
    %105 = vst [vmem:[%s3] sm:$0xff] %v103
    %106 = vst [vmem:[%s3 + $0x8] sm:$0xff] %v104
  $region21: #{decoder_forward.23} parent=0 // pred_fallthru
    _
  // Predicated region
  $region22: #{decoder_forward.23} parent=0 // pred_check
    _
  $region23: #{decoder_forward.23} parent=0 // pred_check_branch
    %108 = sbr.rel (0) target = $region25
  $region24: #{decoder_forward.23} parent=0 // pred_region
    _
  $region25: #{decoder_forward.23} parent=0 // pred_fallthru
    _
  // Predicated region
  $region26: #{decoder_forward.23} parent=0 // pred_check
    _
  $region27: #{decoder_forward.23} parent=0 // pred_check_branch
    %110 = sbr.rel (0) target = $region29
  $region28: #{decoder_forward.23} parent=0 // pred_region
    _
  $region29: #{decoder_forward.23} parent=0 // pred_fallthru
    _

// kernel: decoder_forward.25
$region0: #{decoder_forward.25}
  #allocation0 [shape = 'u32[]', space=smem, size = 0x4, offset = 0x4, fixed_abs, tag = 'smem constant byte address 0x4 - core index']
  #allocation1 [shape = 'u32[144,128]{1,0:T(1,128)}', space=vmem, size = 0x12000, scoped, tag = 'internal scratch']
  #allocation2 [shape = 'f32[16,32]{1,0:T(8,128)}', space=vmem, size = 0x2000, scoped, tag = 'scratch operand']
  %s0 = inlined_call_operand.vmem [shape: f32[16,32], index: 0, kind: input, shape index: {}]
  %s1 = inlined_call_operand.vmem [shape: bf16[32,32], index: 1, kind: input, shape index: {}]
  %s2 = inlined_call_operand.vmem [shape: f32[1,32], index: 2, kind: input, shape index: {}]
  %s3 = inlined_call_operand.vmem [shape: f32[16,32], index: 3, kind: output, shape index: {}]
  %s4 = sld [smem:[#allocation0]]
  $region30: #{decoder_forward.25} parent=0
    _
  %s6 = ssub.s32 1, %s4
  %s7 = scalar_select 0, %s6, %s4
  // Predicated region
  $region2: #{decoder_forward.25} parent=0 // pred_check
    _
  $region3: #{decoder_forward.25} parent=0 // pred_check_branch
    %9 = sbr.rel (0) target = $region5
  $region4: #{decoder_forward.25} parent=0 // pred_region
    _
  $region5: #{decoder_forward.25} parent=0 // pred_fallthru
    _
  // Predicated region
  $region6: #{decoder_forward.25} parent=0 // pred_check
    _
  $region7: #{decoder_forward.25} parent=0 // pred_check_branch
    %11 = sbr.rel (0) target = $region9
  $region8: #{decoder_forward.25} parent=0 // pred_region
    _
  $region9: #{decoder_forward.25} parent=0 // pred_fallthru
    _
  // Predicated region
  $region10: #{decoder_forward.25} parent=0 // pred_check
    _
  $region11: #{decoder_forward.25} parent=0 // pred_check_branch
    %13 = sbr.rel (0) target = $region13
  $region12: #{decoder_forward.25} parent=0 // pred_region
    _
  $region13: #{decoder_forward.25} parent=0 // pred_fallthru
    _
  %p15 = scmp.eq.s32.totalorder 0, 0
  // Predicated region
  $region14: #{decoder_forward.25} parent=0 // pred_check
    %p16 = pneg %p15
  $region15: #{decoder_forward.25} parent=0 // pred_check_branch
    %18 = sbr.rel (%p16) target = $region17
  $region16: #{decoder_forward.25} parent=0 // pred_region
    %vm19 = vcmask 261120
    %20 = vst.msk [vmem:[#allocation2] sm:$0xff] %vm19, 0.0
    %21 = vst.msk [vmem:[#allocation2 + $0x8] sm:$0xff] %vm19, 0.0
  $region17: #{decoder_forward.25} parent=0 // pred_fallthru
    _
  %v22 = vld [vmem:[#allocation2] sm:$0xff]
  %v23 = vld [vmem:[#allocation2 + $0x8] sm:$0xff]
  %v24 = vld [vmem:[%s0] sm:$0xff]
  %v25 = vld [vmem:[%s0 + $0x8] sm:$0xff]
  %v26 = vpack.c.bf16 %v25, %v24
  %v27 = vld [vmem:[%s1] sm:$0xf]
  %v28 = vld [vmem:[%s1 + $0x4] sm:$0xf]
  %v29 = vld [vmem:[%s1 + $0x8] sm:$0xf]
  %v30 = vld [vmem:[%s1 + $0xc] sm:$0xf]
  %v35 = vunpack.c.l.b16 %v27
  %v36 = vunpack.c.l.b16 %v28
  %v37 = vunpack.c.l.b16 %v29
  %v38 = vunpack.c.l.b16 %v30
  %v39 = vpack.c.b16 %v36, %v35
  %v40 = vpack.c.b16 %v38, %v37
  %vm43 = vcmask 261120
  %v45 = vsel %vm43, %v26, 0
  %47 = vmatprep.subr.bf16.mxu0 0
  %48 = vmatpush1.bf16.msra.mxu0 %v39
  %49 = vmatprep.subr.bf16.mxu0 0
  %50 = vmatpush1.bf16.msra.mxu0 %v40
  %51 = vmatprep.subr.bf16.mxu0 0
  %52 = vmatpush1.bf16.msra.mxu0 0
  %53 = vmatprep.subr.bf16.mxu0 0
  %54 = vmatpush1.bf16.msra.mxu0 0
  %55 = vmatprep.subr.bf16.mxu0 0
  %56 = vmatpush1.bf16.msra.mxu0 0
  %57 = vmatprep.subr.bf16.mxu0 0
  %58 = vmatpush1.bf16.msra.mxu0 0
  %59 = vmatprep.subr.bf16.mxu0 0
  %60 = vmatpush1.bf16.msra.mxu0 0
  %61 = vmatprep.subr.bf16.mxu0 0
  %62 = vmatpush1.bf16.msra.mxu0 0
  %63 = vmatprep.subr.bf16.mxu0 0
  %64 = vmatpush1.bf16.msra.mxu0 0
  %65 = vmatprep.subr.bf16.mxu0 0
  %66 = vmatpush1.bf16.msra.mxu0 0
  %67 = vmatprep.subr.bf16.mxu0 0
  %68 = vmatpush1.bf16.msra.mxu0 0
  %69 = vmatprep.subr.bf16.mxu0 0
  %70 = vmatpush1.bf16.msra.mxu0 0
  %71 = vmatprep.subr.bf16.mxu0 0
  %72 = vmatpush1.bf16.msra.mxu0 0
  %73 = vmatprep.subr.bf16.mxu0 0
  %74 = vmatpush1.bf16.msra.mxu0 0
  %75 = vmatprep.subr.bf16.mxu0 0
  %76 = vmatpush1.bf16.msra.mxu0 0
  %77 = vmatprep.subr.bf16.mxu0 0
  %78 = vmatpush1.bf16.msra.mxu0 0
  %79 = vmatprep.mubr.bf16.mxu0 0
  %80 = vmatmul.mubr.bf16.gmra.mrb[0].mxu0 %v45
  %v81 = vpop.f32.mrb[0].mxu0
  %v82 = vadd.f32 0.0, %v81
  %v83 = vpop.f32.mrb[0].mxu0
  %v84 = vpop.f32.mrb[0].mxu0
  %v85 = vadd.f32 0.0, %v84
  %v86 = vpop.f32.mrb[0].mxu0
  %87 = vdwg.mxu0
  %v88 = vadd.f32 %v22, %v82
  %v89 = vadd.f32 %v23, %v85
  %90 = vst.msk [vmem:[#allocation2] sm:$0xff] %vm43, %v88
  %91 = vst.msk [vmem:[#allocation2 + $0x8] sm:$0xff] %vm43, %v89
  // Predicated region
  $region18: #{decoder_forward.25} parent=0 // pred_check
    %p92 = pneg %p15
  $region19: #{decoder_forward.25} parent=0 // pred_check_branch
    %94 = sbr.rel (%p92) target = $region21
  $region20: #{decoder_forward.25} parent=0 // pred_region
    %v95 = vld [vmem:[#allocation2] sm:$0xff]
    %v96 = vld [vmem:[#allocation2 + $0x8] sm:$0xff]
    %v97 = vld [vmem:[%s2] sm:$0x1]
    %v99 = vlaneseq
    %v100 = vshrl.u32 %v99, 7
    %v101 = vsub.s32 0, %v100
    %v102 = vrot.slane %v97, %v101
    %v104 = vadd.f32 %v95, %v102
    %v105 = vadd.f32 %v96, %v102
    %106 = vst.msk [vmem:[%s3] sm:$0xff] %vm43, %v104
    %107 = vst.msk [vmem:[%s3 + $0x8] sm:$0xff] %vm43, %v105
  $region21: #{decoder_forward.25} parent=0 // pred_fallthru
    _
  // Predicated region
  $region22: #{decoder_forward.25} parent=0 // pred_check
    _
  $region23: #{decoder_forward.25} parent=0 // pred_check_branch
    %109 = sbr.rel (0) target = $region25
  $region24: #{decoder_forward.25} parent=0 // pred_region
    _
  $region25: #{decoder_forward.25} parent=0 // pred_fallthru
    _
  // Predicated region
  $region26: #{decoder_forward.25} parent=0 // pred_check
    _
  $region27: #{decoder_forward.25} parent=0 // pred_check_branch
    %111 = sbr.rel (0) target = $region29
  $region28: #{decoder_forward.25} parent=0 // pred_region
    _
  $region29: #{decoder_forward.25} parent=0 // pred_fallthru
    _

// kernel: decoder_forward.26
$region0: #{decoder_forward.26}
  #allocation0 [shape = 'u32[]', space=smem, size = 0x4, offset = 0x4, fixed_abs, tag = 'smem constant byte address 0x4 - core index']
  #allocation1 [shape = 'u32[144,128]{1,0:T(1,128)}', space=vmem, size = 0x12000, scoped, tag = 'internal scratch']
  %s0 = inlined_call_operand.vmem [shape: f32[16,32], index: 0, kind: input, shape index: {}]
  %s1 = inlined_call_operand.vmem [shape: f32[16,32], index: 1, kind: input, shape index: {}]
  %s2 = inlined_call_operand.vmem [shape: f32[1,32], index: 2, kind: input, shape index: {}]
  %s3 = inlined_call_operand.vmem [shape: f32[1,32], index: 3, kind: input, shape index: {}]
  %s4 = inlined_call_operand.vmem [shape: f32[16,32], index: 4, kind: output, shape index: {}]
  %s5 = sld [smem:[#allocation0]]
  $region26: #{decoder_forward.26} parent=0
    _
  %s7 = ssub.s32 1, %s5
  %s8 = scalar_select 0, %s7, %s5
  // Predicated region
  $region2: #{decoder_forward.26} parent=0 // pred_check
    _
  $region3: #{decoder_forward.26} parent=0 // pred_check_branch
    %10 = sbr.rel (0) target = $region5
  $region4: #{decoder_forward.26} parent=0 // pred_region
    _
  $region5: #{decoder_forward.26} parent=0 // pred_fallthru
    _
  // Predicated region
  $region6: #{decoder_forward.26} parent=0 // pred_check
    _
  $region7: #{decoder_forward.26} parent=0 // pred_check_branch
    %12 = sbr.rel (0) target = $region9
  $region8: #{decoder_forward.26} parent=0 // pred_region
    _
  $region9: #{decoder_forward.26} parent=0 // pred_fallthru
    _
  // Predicated region
  $region10: #{decoder_forward.26} parent=0 // pred_check
    _
  $region11: #{decoder_forward.26} parent=0 // pred_check_branch
    %14 = sbr.rel (0) target = $region13
  $region12: #{decoder_forward.26} parent=0 // pred_region
    _
  $region13: #{decoder_forward.26} parent=0 // pred_fallthru
    _
  // Predicated region
  $region14: #{decoder_forward.26} parent=0 // pred_check
    _
  $region15: #{decoder_forward.26} parent=0 // pred_check_branch
    %16 = sbr.rel (0) target = $region17
  $region16: #{decoder_forward.26} parent=0 // pred_region
    _
  $region17: #{decoder_forward.26} parent=0 // pred_fallthru
    _
  %v17 = vld [vmem:[%s0] sm:$0xff]
  %v18 = vld [vmem:[%s0 + $0x8] sm:$0xff]
  %v19 = vld [vmem:[%s1] sm:$0xff]
  %v20 = vld [vmem:[%s1 + $0x8] sm:$0xff]
  %v21 = vadd.f32 %v17, %v19
  %v22 = vadd.f32 %v18, %v20
  %vm23 = vcmask 261120
  %v24 = vsel %vm23, %v21, 0.0
  %25 = vadd.xlane.f32.xlu0 %v24
  %v26 = vpop.xlane.xlu0 %25
  %v27 = vsel %vm23, %v22, 0.0
  %28 = vadd.xlane.f32.xlu0 %v27
  %v29 = vpop.xlane.xlu0 %28
  %v30 = vrcp.pop 32.0
  %v31 = vmul.f32 %v26, %v30
  %v32 = vmul.f32 %v29, %v30
  %v33 = vsub.f32 %v21, %v31
  %v34 = vsub.f32 %v22, %v32
  %v35 = vmul.f32 %v33, %v33
  %v36 = vmul.f32 %v34, %v34
  %v37 = vsel %vm23, %v35, 0.0
  %38 = vadd.xlane.f32.xlu0 %v37
  %v39 = vpop.xlane.xlu0 %38
  %v40 = vsel %vm23, %v36, 0.0
  %41 = vadd.xlane.f32.xlu0 %v40
  %v42 = vpop.xlane.xlu0 %41
  %v43 = vmul.f32 %v39, %v30
  %v44 = vmul.f32 %v42, %v30
  %v45 = vadd.f32 %v43, 1e-05
  %v46 = vadd.f32 %v44, 1e-05
  %v47 = vrsqrt.pop %v45
  %v48 = vrsqrt.pop %v46
  %v49 = vmul.f32 %v33, %v47
  %v50 = vmul.f32 %v34, %v48
  %v51 = vld [vmem:[%s2] sm:$0x1]
  %v53 = vlaneseq
  %v54 = vshrl.u32 %v53, 7
  %v55 = vsub.s32 0, %v54
  %v56 = vrot.slane %v51, %v55
  %v58 = vmul.f32 %v49, %v56
  %v59 = vmul.f32 %v50, %v56
  %v60 = vld [vmem:[%s3] sm:$0x1]
  %v62 = vlaneseq
  %v63 = vshrl.u32 %v62, 7
  %v64 = vsub.s32 0, %v63
  %v65 = vrot.slane %v60, %v64
  %v67 = vadd.f32 %v58, %v65
  %v68 = vadd.f32 %v59, %v65
  %69 = vst.msk [vmem:[%s4] sm:$0xff] %vm23, %v67
  %70 = vst.msk [vmem:[%s4 + $0x8] sm:$0xff] %vm23, %v68
  // Predicated region
  $region18: #{decoder_forward.26} parent=0 // pred_check
    _
  $region19: #{decoder_forward.26} parent=0 // pred_check_branch
    %72 = sbr.rel (0) target = $region21
  $region20: #{decoder_forward.26} parent=0 // pred_region
    _
  $region21: #{decoder_forward.26} parent=0 // pred_fallthru
    _
  // Predicated region
  $region22: #{decoder_forward.26} parent=0 // pred_check
    _
  $region23: #{decoder_forward.26} parent=0 // pred_check_branch
    %74 = sbr.rel (0) target = $region25
  $region24: #{decoder_forward.26} parent=0 // pred_region
    _
  $region25: #{decoder_forward.26} parent=0 // pred_fallthru
    _

// kernel: decoder_forward.31
$region0: #{decoder_forward.31}
  #allocation0 [shape = 'u32[]', space=smem, size = 0x4, offset = 0x4, fixed_abs, tag = 'smem constant byte address 0x4 - core index']
  #allocation1 [shape = 'u32[144,128]{1,0:T(1,128)}', space=vmem, size = 0x12000, scoped, tag = 'internal scratch']
  #allocation2 [shape = 'f32[16,128]{1,0:T(8,128)}', space=vmem, size = 0x2000, scoped, tag = 'scratch operand']
  %s0 = inlined_call_operand.vmem [shape: f32[16,32], index: 0, kind: input, shape index: {}]
  %s1 = inlined_call_operand.vmem [shape: bf16[32,128], index: 1, kind: input, shape index: {}]
  %s2 = inlined_call_operand.vmem [shape: f32[1,128], index: 2, kind: input, shape index: {}]
  %s3 = inlined_call_operand.vmem [shape: f32[16,128], index: 3, kind: output, shape index: {}]
  %s4 = sld [smem:[#allocation0]]
  $region30: #{decoder_forward.31} parent=0
    _
  %s6 = ssub.s32 1, %s4
  %s7 = scalar_select 0, %s6, %s4
  // Predicated region
  $region2: #{decoder_forward.31} parent=0 // pred_check
    _
  $region3: #{decoder_forward.31} parent=0 // pred_check_branch
    %9 = sbr.rel (0) target = $region5
  $region4: #{decoder_forward.31} parent=0 // pred_region
    _
  $region5: #{decoder_forward.31} parent=0 // pred_fallthru
    _
  // Predicated region
  $region6: #{decoder_forward.31} parent=0 // pred_check
    _
  $region7: #{decoder_forward.31} parent=0 // pred_check_branch
    %11 = sbr.rel (0) target = $region9
  $region8: #{decoder_forward.31} parent=0 // pred_region
    _
  $region9: #{decoder_forward.31} parent=0 // pred_fallthru
    _
  // Predicated region
  $region10: #{decoder_forward.31} parent=0 // pred_check
    _
  $region11: #{decoder_forward.31} parent=0 // pred_check_branch
    %13 = sbr.rel (0) target = $region13
  $region12: #{decoder_forward.31} parent=0 // pred_region
    _
  $region13: #{decoder_forward.31} parent=0 // pred_fallthru
    _
  %p15 = scmp.eq.s32.totalorder 0, 0
  // Predicated region
  $region14: #{decoder_forward.31} parent=0 // pred_check
    %p16 = pneg %p15
  $region15: #{decoder_forward.31} parent=0 // pred_check_branch
    %18 = sbr.rel (%p16) target = $region17
  $region16: #{decoder_forward.31} parent=0 // pred_region
    %19 = vst [vmem:[#allocation2] sm:$0xff] 0.0
    %20 = vst [vmem:[#allocation2 + $0x8] sm:$0xff] 0.0
  $region17: #{decoder_forward.31} parent=0 // pred_fallthru
    _
  %v21 = vld [vmem:[#allocation2] sm:$0xff]
  %v22 = vld [vmem:[#allocation2 + $0x8] sm:$0xff]
  %v23 = vld [vmem:[%s0] sm:$0xff]
  %v24 = vld [vmem:[%s0 + $0x8] sm:$0xff]
  %v25 = vpack.c.bf16 %v24, %v23
  %v26 = vld [vmem:[%s1] sm:$0xf]
  %v27 = vld [vmem:[%s1 + $0x4] sm:$0xf]
  %v28 = vld [vmem:[%s1 + $0x8] sm:$0xf]
  %v29 = vld [vmem:[%s1 + $0xc] sm:$0xf]
  %v34 = vunpack.c.l.b16 %v26
  %v35 = vunpack.c.l.b16 %v27
  %v36 = vunpack.c.l.b16 %v28
  %v37 = vunpack.c.l.b16 %v29
  %v38 = vpack.c.b16 %v35, %v34
  %v39 = vpack.c.b16 %v37, %v36
  %vm42 = vcmask 261120
  %v44 = vsel %vm42, %v25, 0
  %46 = vmatprep.subr.bf16.mxu0 0
  %47 = vmatpush1.bf16.msra.mxu0 %v38
  %48 = vmatprep.subr.bf16.mxu0 0
  %49 = vmatpush1.bf16.msra.mxu0 %v39
  %50 = vmatprep.subr.bf16.mxu0 0
  %51 = vmatpush1.bf16.msra.mxu0 0
  %52 = vmatprep.subr.bf16.mxu0 0
  %53 = vmatpush1.bf16.msra.mxu0 0
  %54 = vmatprep.subr.bf16.mxu0 0
  %55 = vmatpush1.bf16.msra.mxu0 0
  %56 = vmatprep.subr.bf16.mxu0 0
  %57 = vmatpush1.bf16.msra.mxu0 0
  %58 = vmatprep.subr.bf16.mxu0 0
  %59 = vmatpush1.bf16.msra.mxu0 0
  %60 = vmatprep.subr.bf16.mxu0 0
  %61 = vmatpush1.bf16.msra.mxu0 0
  %62 = vmatprep.subr.bf16.mxu0 0
  %63 = vmatpush1.bf16.msra.mxu0 0
  %64 = vmatprep.subr.bf16.mxu0 0
  %65 = vmatpush1.bf16.msra.mxu0 0
  %66 = vmatprep.subr.bf16.mxu0 0
  %67 = vmatpush1.bf16.msra.mxu0 0
  %68 = vmatprep.subr.bf16.mxu0 0
  %69 = vmatpush1.bf16.msra.mxu0 0
  %70 = vmatprep.subr.bf16.mxu0 0
  %71 = vmatpush1.bf16.msra.mxu0 0
  %72 = vmatprep.subr.bf16.mxu0 0
  %73 = vmatpush1.bf16.msra.mxu0 0
  %74 = vmatprep.subr.bf16.mxu0 0
  %75 = vmatpush1.bf16.msra.mxu0 0
  %76 = vmatprep.subr.bf16.mxu0 0
  %77 = vmatpush1.bf16.msra.mxu0 0
  %78 = vmatprep.mubr.bf16.mxu0 0
  %79 = vmatmul.mubr.bf16.gmra.mrb[0].mxu0 %v44
  %v80 = vpop.f32.mrb[0].mxu0
  %v81 = vadd.f32 0.0, %v80
  %v82 = vpop.f32.mrb[0].mxu0
  %v83 = vpop.f32.mrb[0].mxu0
  %v84 = vadd.f32 0.0, %v83
  %v85 = vpop.f32.mrb[0].mxu0
  %86 = vdwg.mxu0
  %v87 = vadd.f32 %v21, %v81
  %v88 = vadd.f32 %v22, %v84
  %89 = vst [vmem:[#allocation2] sm:$0xff] %v87
  %90 = vst [vmem:[#allocation2 + $0x8] sm:$0xff] %v88
  // Predicated region
  $region18: #{decoder_forward.31} parent=0 // pred_check
    %p91 = pneg %p15
  $region19: #{decoder_forward.31} parent=0 // pred_check_branch
    %93 = sbr.rel (%p91) target = $region21
  $region20: #{decoder_forward.31} parent=0 // pred_region
    %v94 = vld [vmem:[#allocation2] sm:$0xff]
    %v95 = vld [vmem:[#allocation2 + $0x8] sm:$0xff]
    %v96 = vld [vmem:[%s2] sm:$0x1]
    %v98 = vlaneseq
    %v99 = vshrl.u32 %v98, 7
    %v100 = vsub.s32 0, %v99
    %v101 = vrot.slane %v96, %v100
    %v103 = vadd.f32 %v94, %v101
    %v104 = vadd.f32 %v95, %v101
    %v105 = vmax.f32 %v103, 0.0
    %v106 = vmax.f32 %v104, 0.0
    %107 = vst [vmem:[%s3] sm:$0xff] %v105
    %108 = vst [vmem:[%s3 + $0x8] sm:$0xff] %v106
  $region21: #{decoder_forward.31} parent=0 // pred_fallthru
    _
  // Predicated region
  $region22: #{decoder_forward.31} parent=0 // pred_check
    _
  $region23: #{decoder_forward.31} parent=0 // pred_check_branch
    %110 = sbr.rel (0) target = $region25
  $region24: #{decoder_forward.31} parent=0 // pred_region
    _
  $region25: #{decoder_forward.31} parent=0 // pred_fallthru
    _
  // Predicated region
  $region26: #{decoder_forward.31} parent=0 // pred_check
    _
  $region27: #{decoder_forward.31} parent=0 // pred_check_branch
    %112 = sbr.rel (0) target = $region29
  $region28: #{decoder_forward.31} parent=0 // pred_region
    _
  $region29: #{decoder_forward.31} parent=0 // pred_fallthru
    _

// kernel: decoder_forward.27
$region0: #{decoder_forward.27}
  #allocation0 [shape = 'u32[]', space=smem, size = 0x4, offset = 0x4, fixed_abs, tag = 'smem constant byte address 0x4 - core index']
  #allocation1 [shape = 'u32[144,128]{1,0:T(1,128)}', space=vmem, size = 0x12000, scoped, tag = 'internal scratch']
  #allocation2 [shape = 'f32[16,64]{1,0:T(8,128)}', space=vmem, size = 0x2000, scoped, tag = 'scratch operand']
  %s0 = inlined_call_operand.vmem [shape: f32[16,32], index: 0, kind: input, shape index: {}]
  %s1 = inlined_call_operand.vmem [shape: bf16[32,64], index: 1, kind: input, shape index: {}]
  %s2 = inlined_call_operand.vmem [shape: f32[1,64], index: 2, kind: input, shape index: {}]
  %s3 = inlined_call_operand.vmem [shape: f32[16,64], index: 3, kind: output, shape index: {}]
  %s4 = sld [smem:[#allocation0]]
  $region30: #{decoder_forward.27} parent=0
    _
  %s6 = ssub.s32 1, %s4
  %s7 = scalar_select 0, %s6, %s4
  // Predicated region
  $region2: #{decoder_forward.27} parent=0 // pred_check
    _
  $region3: #{decoder_forward.27} parent=0 // pred_check_branch
    %9 = sbr.rel (0) target = $region5
  $region4: #{decoder_forward.27} parent=0 // pred_region
    _
  $region5: #{decoder_forward.27} parent=0 // pred_fallthru
    _
  // Predicated region
  $region6: #{decoder_forward.27} parent=0 // pred_check
    _
  $region7: #{decoder_forward.27} parent=0 // pred_check_branch
    %11 = sbr.rel (0) target = $region9
  $region8: #{decoder_forward.27} parent=0 // pred_region
    _
  $region9: #{decoder_forward.27} parent=0 // pred_fallthru
    _
  // Predicated region
  $region10: #{decoder_forward.27} parent=0 // pred_check
    _
  $region11: #{decoder_forward.27} parent=0 // pred_check_branch
    %13 = sbr.rel (0) target = $region13
  $region12: #{decoder_forward.27} parent=0 // pred_region
    _
  $region13: #{decoder_forward.27} parent=0 // pred_fallthru
    _
  %p15 = scmp.eq.s32.totalorder 0, 0
  // Predicated region
  $region14: #{decoder_forward.27} parent=0 // pred_check
    %p16 = pneg %p15
  $region15: #{decoder_forward.27} parent=0 // pred_check_branch
    %18 = sbr.rel (%p16) target = $region17
  $region16: #{decoder_forward.27} parent=0 // pred_region
    %vm19 = vcmask 523264
    %20 = vst.msk [vmem:[#allocation2] sm:$0xff] %vm19, 0.0
    %21 = vst.msk [vmem:[#allocation2 + $0x8] sm:$0xff] %vm19, 0.0
  $region17: #{decoder_forward.27} parent=0 // pred_fallthru
    _
  %v22 = vld [vmem:[#allocation2] sm:$0xff]
  %v23 = vld [vmem:[#allocation2 + $0x8] sm:$0xff]
  %v24 = vld [vmem:[%s0] sm:$0xff]
  %v25 = vld [vmem:[%s0 + $0x8] sm:$0xff]
  %v26 = vpack.c.bf16 %v25, %v24
  %v27 = vld [vmem:[%s1] sm:$0xf]
  %v28 = vld [vmem:[%s1 + $0x4] sm:$0xf]
  %v29 = vld [vmem:[%s1 + $0x8] sm:$0xf]
  %v30 = vld [vmem:[%s1 + $0xc] sm:$0xf]
  %v35 = vunpack.c.l.b16 %v27
  %v36 = vunpack.c.l.b16 %v28
  %v37 = vunpack.c.l.b16 %v29
  %v38 = vunpack.c.l.b16 %v30
  %v39 = vpack.c.b16 %v36, %v35
  %v40 = vpack.c.b16 %v38, %v37
  %vm43 = vcmask 261120
  %v45 = vsel %vm43, %v26, 0
  %47 = vmatprep.subr.bf16.mxu0 0
  %48 = vmatpush1.bf16.msra.mxu0 %v39
  %49 = vmatprep.subr.bf16.mxu0 0
  %50 = vmatpush1.bf16.msra.mxu0 %v40
  %51 = vmatprep.subr.bf16.mxu0 0
  %52 = vmatpush1.bf16.msra.mxu0 0
  %53 = vmatprep.subr.bf16.mxu0 0
  %54 = vmatpush1.bf16.msra.mxu0 0
  %55 = vmatprep.subr.bf16.mxu0 0
  %56 = vmatpush1.bf16.msra.mxu0 0
  %57 = vmatprep.subr.bf16.mxu0 0
  %58 = vmatpush1.bf16.msra.mxu0 0
  %59 = vmatprep.subr.bf16.mxu0 0
  %60 = vmatpush1.bf16.msra.mxu0 0
  %61 = vmatprep.subr.bf16.mxu0 0
  %62 = vmatpush1.bf16.msra.mxu0 0
  %63 = vmatprep.subr.bf16.mxu0 0
  %64 = vmatpush1.bf16.msra.mxu0 0
  %65 = vmatprep.subr.bf16.mxu0 0
  %66 = vmatpush1.bf16.msra.mxu0 0
  %67 = vmatprep.subr.bf16.mxu0 0
  %68 = vmatpush1.bf16.msra.mxu0 0
  %69 = vmatprep.subr.bf16.mxu0 0
  %70 = vmatpush1.bf16.msra.mxu0 0
  %71 = vmatprep.subr.bf16.mxu0 0
  %72 = vmatpush1.bf16.msra.mxu0 0
  %73 = vmatprep.subr.bf16.mxu0 0
  %74 = vmatpush1.bf16.msra.mxu0 0
  %75 = vmatprep.subr.bf16.mxu0 0
  %76 = vmatpush1.bf16.msra.mxu0 0
  %77 = vmatprep.subr.bf16.mxu0 0
  %78 = vmatpush1.bf16.msra.mxu0 0
  %79 = vmatprep.mubr.bf16.mxu0 0
  %80 = vmatmul.mubr.bf16.gmra.mrb[0].mxu0 %v45
  %v81 = vpop.f32.mrb[0].mxu0
  %v82 = vadd.f32 0.0, %v81
  %v83 = vpop.f32.mrb[0].mxu0
  %v84 = vpop.f32.mrb[0].mxu0
  %v85 = vadd.f32 0.0, %v84
  %v86 = vpop.f32.mrb[0].mxu0
  %87 = vdwg.mxu0
  %v88 = vadd.f32 %v22, %v82
  %v89 = vadd.f32 %v23, %v85
  %vm90 = vcmask 523264
  %91 = vst.msk [vmem:[#allocation2] sm:$0xff] %vm90, %v88
  %92 = vst.msk [vmem:[#allocation2 + $0x8] sm:$0xff] %vm90, %v89
  // Predicated region
  $region18: #{decoder_forward.27} parent=0 // pred_check
    %p93 = pneg %p15
  $region19: #{decoder_forward.27} parent=0 // pred_check_branch
    %95 = sbr.rel (%p93) target = $region21
  $region20: #{decoder_forward.27} parent=0 // pred_region
    %v96 = vld [vmem:[#allocation2] sm:$0xff]
    %v97 = vld [vmem:[#allocation2 + $0x8] sm:$0xff]
    %v98 = vld [vmem:[%s2] sm:$0x1]
    %v100 = vlaneseq
    %v101 = vshrl.u32 %v100, 7
    %v102 = vsub.s32 0, %v101
    %v103 = vrot.slane %v98, %v102
    %v105 = vadd.f32 %v96, %v103
    %v106 = vadd.f32 %v97, %v103
    %107 = vst.msk [vmem:[%s3] sm:$0xff] %vm90, %v105
    %108 = vst.msk [vmem:[%s3 + $0x8] sm:$0xff] %vm90, %v106
  $region21: #{decoder_forward.27} parent=0 // pred_fallthru
    _
  // Predicated region
  $region22: #{decoder_forward.27} parent=0 // pred_check
    _
  $region23: #{decoder_forward.27} parent=0 // pred_check_branch
    %110 = sbr.rel (0) target = $region25
  $region24: #{decoder_forward.27} parent=0 // pred_region
    _
  $region25: #{decoder_forward.27} parent=0 // pred_fallthru
    _
  // Predicated region
  $region26: #{decoder_forward.27} parent=0 // pred_check
    _
  $region27: #{decoder_forward.27} parent=0 // pred_check_branch
    %112 = sbr.rel (0) target = $region29
  $region28: #{decoder_forward.27} parent=0 // pred_region
    _
  $region29: #{decoder_forward.27} parent=0 // pred_fallthru
    _

// kernel: decoder_forward.24
$region0: #{decoder_forward.24}
  #allocation0 [shape = 'u32[]', space=smem, size = 0x4, offset = 0x4, fixed_abs, tag = 'smem constant byte address 0x4 - core index']
  #allocation1 [shape = 'u32[144,128]{1,0:T(1,128)}', space=vmem, size = 0x12000, scoped, tag = 'internal scratch']
  %s0 = inlined_call_operand.vmem [shape: f32[2,8,4,8], index: 0, kind: input, shape index: {}]
  %s1 = inlined_call_operand.vmem [shape: f32[2,8,4,8], index: 1, kind: input, shape index: {}]
  %s2 = inlined_call_operand.vmem [shape: f32[2,8,4,8], index: 2, kind: input, shape index: {}]
  %s3 = inlined_call_operand.vmem [shape: f32[2,8,4,8], index: 3, kind: output, shape index: {}]
  %s4 = sld [smem:[#allocation0]]
  $region45: #{decoder_forward.24} parent=0
    _
  %s6 = ssub.s32 1, %s4
  %s7 = scalar_select 0, %s6, %s4
  loop: start=0, step=1, limit=4
  $region2: #{decoder_forward.24} parent=0 // loop_pre_header
    _
  $region3: #{decoder_forward.24} parent=0 // loop_header
    %s9 = sphi 0, %s13
    %p10 = scmp.ge.s32.totalorder %s9, 4
    %s19 = sphi 0, %s21
    %s22 = sphi 0, %s19
    %s23 = sphi 0, %s22
    %s39 = sphi 0, %s23
    %s45 = sphi 0, %s47
    %s48 = sphi 0, %s45
    %s49 = sphi 0, %s48
    %s65 = sphi 0, %s49
    %s71 = sphi 0, %s73
    %s74 = sphi 0, %s71
    %s75 = sphi 0, %s74
    %s91 = sphi 0, %s75
    %s97 = sphi 0, %s99
    %s100 = sphi 0, %s97
    %s101 = sphi 0, %s100
    %s117 = sphi 0, %s101
  $region4: #{decoder_forward.24} parent=0 // loop_header_branch
    %12 = sbr.rel (%p10) target = $region8
  $region5: #{decoder_forward.24} parent=0 // loop_body
    %s14 = ssub.s32 %s9, 1
    %s15 = ssub.s32 %s9, 2
    %s16 = sadd.s32 %s9, 1
    %s17 = ssub.s32 %s9, %s16
    %p18 = scmp.eq.s32.totalorder %s17, 0
    %s20 = sadd.s32 %s19, 1
    %s21 = scalar_select %p18, %s19, %s20
    %p24 = pneg %p18
    %p25 = scmp.eq.s32.totalorder %s9, 1
    %p26 = por %p24, %p25
    %p27 = scmp.ne.s32.totalorder %s19, %s22
    %p28 = scmp.eq.s32.totalorder %s9, 0
    %p29 = por %p27, %p28
    %p30 = scmp.ne.s32.totalorder %s19, %s22
    %p31 = scmp.eq.s32.totalorder %s14, 1
    %p32 = por %p30, %p31
    %p33 = scmp.ne.s32.totalorder %s22, %s23
    %p34 = scmp.eq.s32.totalorder %s14, 0
    %p35 = por %p33, %p34
    %p36 = scmp.ne.s32.totalorder %s22, %s23
    %p37 = scmp.eq.s32.totalorder %s15, 1
    %p38 = por %p36, %p37
    %p40 = scmp.ne.s32.totalorder %s23, %s39
    %p41 = scmp.eq.s32.totalorder %s15, 0
    %p42 = por %p40, %p41
    %s43 = ssub.s32 %s9, %s16
    %p44 = scmp.eq.s32.totalorder %s43, 0
    %s46 = sadd.s32 %s45, 1
    %s47 = scalar_select %p44, %s45, %s46
    %p50 = pneg %p44
    %p51 = scmp.eq.s32.totalorder %s9, 1
    %p52 = por %p50, %p51
    %p53 = scmp.ne.s32.totalorder %s45, %s48
    %p54 = scmp.eq.s32.totalorder %s9, 0
    %p55 = por %p53, %p54
    %p56 = scmp.ne.s32.totalorder %s45, %s48
    %p57 = scmp.eq.s32.totalorder %s14, 1
    %p58 = por %p56, %p57
    %p59 = scmp.ne.s32.totalorder %s48, %s49
    %p60 = scmp.eq.s32.totalorder %s14, 0
    %p61 = por %p59, %p60
    %p62 = scmp.ne.s32.totalorder %s48, %s49
    %p63 = scmp.eq.s32.totalorder %s15, 1
    %p64 = por %p62, %p63
    %p66 = scmp.ne.s32.totalorder %s49, %s65
    %p67 = scmp.eq.s32.totalorder %s15, 0
    %p68 = por %p66, %p67
    %s69 = ssub.s32 %s9, %s16
    %p70 = scmp.eq.s32.totalorder %s69, 0
    %s72 = sadd.s32 %s71, 1
    %s73 = scalar_select %p70, %s71, %s72
    %p76 = pneg %p70
    %p77 = scmp.eq.s32.totalorder %s9, 1
    %p78 = por %p76, %p77
    %p79 = scmp.ne.s32.totalorder %s71, %s74
    %p80 = scmp.eq.s32.totalorder %s9, 0
    %p81 = por %p79, %p80
    %p82 = scmp.ne.s32.totalorder %s71, %s74
    %p83 = scmp.eq.s32.totalorder %s14, 1
    %p84 = por %p82, %p83
    %p85 = scmp.ne.s32.totalorder %s74, %s75
    %p86 = scmp.eq.s32.totalorder %s14, 0
    %p87 = por %p85, %p86
    %p88 = scmp.ne.s32.totalorder %s74, %s75
    %p89 = scmp.eq.s32.totalorder %s15, 1
    %p90 = por %p88, %p89
    %p92 = scmp.ne.s32.totalorder %s75, %s91
    %p93 = scmp.eq.s32.totalorder %s15, 0
    %p94 = por %p92, %p93
    %s95 = ssub.s32 %s9, %s16
    %p96 = scmp.eq.s32.totalorder %s95, 0
    %s98 = sadd.s32 %s97, 1
    %s99 = scalar_select %p96, %s97, %s98
    %p102 = pneg %p96
    %p103 = scmp.eq.s32.totalorder %s9, 1
    %p104 = por %p102, %p103
    %p105 = scmp.ne.s32.totalorder %s97, %s100
    %p106 = scmp.eq.s32.totalorder %s9, 0
    %p107 = por %p105, %p106
    %p108 = scmp.ne.s32.totalorder %s97, %s100
    %p109 = scmp.eq.s32.totalorder %s14, 1
    %p110 = por %p108, %p109
    %p111 = scmp.ne.s32.totalorder %s100, %s101
    %p112 = scmp.eq.s32.totalorder %s14, 0
    %p113 = por %p111, %p112
    %p114 = scmp.ne.s32.totalorder %s100, %s101
    %p115 = scmp.eq.s32.totalorder %s15, 1
    %p116 = por %p114, %p115
    %p118 = scmp.ne.s32.totalorder %s101, %s117
    %p119 = scmp.eq.s32.totalorder %s15, 0
    %p120 = por %p118, %p119
    %p121 = scmp.le.s32.totalorder 1, %s9
    %p122 = scmp.lt.s32.totalorder %s9, 3
    %p123 = pnand %p121, %p122
    %p124 = pneg %p123
    // Predicated region
    $region9: #{decoder_forward.24} parent=5 // pred_check
      _
    $region10: #{decoder_forward.24} parent=5 // pred_check_branch
      %126 = sbr.rel (%p123) target = $region12
    $region11: #{decoder_forward.24} parent=5 // pred_region
      %s127 = ssub.s32 %s9, 1
    $region12: #{decoder_forward.24} parent=5 // pred_fallthru
      _
    %p128 = scmp.lt.s32.totalorder %s9, 2
    // Predicated region
    $region13: #{decoder_forward.24} parent=5 // pred_check
      %p129 = pneg %p128
    $region14: #{decoder_forward.24} parent=5 // pred_check_branch
      %131 = sbr.rel (%p129) target = $region16
    $region15: #{decoder_forward.24} parent=5 // pred_region
      // Predicated region
      $region17: #{decoder_forward.24} parent=15 // pred_check
        %p132 = pneg %p29
      $region18: #{decoder_forward.24} parent=15 // pred_check_branch
        %134 = sbr.rel (%p132) target = $region20
      $region19: #{decoder_forward.24} parent=15 // pred_region
        %p135 = scmp.lt.s32.totalorder %s9, 1
        %s136 = scalar_select %p135, %s9, 1
        %s137 = smul.addr %s136, 8
        %s138 = smul.addr %s137, 4
        %s139 = scalar_lea.vmem %s0, %s138
      $region20: #{decoder_forward.24} parent=15 // pred_fallthru
        _
      // Predicated region
      $region21: #{decoder_forward.24} parent=15 // pred_check
        %p140 = pneg %p55
      $region22: #{decoder_forward.24} parent=15 // pred_check_branch
        %142 = sbr.rel (%p140) target = $region24
      $region23: #{decoder_forward.24} parent=15 // pred_region
        %p143 = scmp.lt.s32.totalorder %s9, 1
        %s144 = scalar_select %p143, %s9, 1
        %s145 = smul.addr %s144, 8
        %s146 = smul.addr %s145, 4
        %s147 = scalar_lea.vmem %s1, %s146
      $region24: #{decoder_forward.24} parent=15 // pred_fallthru
        _
      // Predicated region
      $region25: #{decoder_forward.24} parent=15 // pred_check
        %p148 = pneg %p81
      $region26: #{decoder_forward.24} parent=15 // pred_check_branch
        %150 = sbr.rel (%p148) target = $region28
      $region27: #{decoder_forward.24} parent=15 // pred_region
        %p151 = scmp.lt.s32.totalorder %s9, 1
        %s152 = scalar_select %p151, %s9, 1
        %s153 = smul.addr %s152, 8
        %s154 = smul.addr %s153, 4
        %s155 = scalar_lea.vmem %s2, %s154
      $region28: #{decoder_forward.24} parent=15 // pred_fallthru
        _
    $region16: #{decoder_forward.24} parent=5 // pred_fallthru
      _
    %p156 = scmp.le.s32.totalorder 1, %s9
    %p157 = scmp.lt.s32.totalorder %s9, 3
    %p158 = pnand %p156, %p157
    %p159 = pneg %p158
    // Predicated region
    $region29: #{decoder_forward.24} parent=5 // pred_check
      _
    $region30: #{decoder_forward.24} parent=5 // pred_check_branch
      %161 = sbr.rel (%p158) target = $region32
    $region31: #{decoder_forward.24} parent=5 // pred_region
      %s162 = ssub.s32 %s9, 1
      %p163 = scmp.lt.s32.totalorder %s14, 1
      %s164 = scalar_select %p163, %s14, 1
      %s165 = smul.addr %s164, 8
      %s166 = smul.addr %s165, 4
      %s167 = scalar_lea.vmem %s0, %s166
      %p168 = pneg %p35
      %p169 = pneg %p32
      %p170 = scmp.lt.s32.totalorder %s14, 1
      %s171 = scalar_select %p170, %s14, 1
      %s172 = smul.addr %s171, 8
      %s173 = smul.addr %s172, 4
      %s174 = scalar_lea.vmem %s1, %s173
      %p175 = pneg %p61
      %p176 = pneg %p58
      %p177 = scmp.lt.s32.totalorder %s14, 1
      %s178 = scalar_select %p177, %s14, 1
      %s179 = smul.addr %s178, 8
      %s180 = smul.addr %s179, 4
      %s181 = scalar_lea.vmem %s2, %s180
      %p182 = pneg %p87
      %p183 = pneg %p84
      %p184 = pneg %p113
      %p185 = pneg %p110
      %p186 = scmp.lt.s32.totalorder %s14, 1
      %s187 = scalar_select %p186, %s14, 1
      %s188 = smul.addr %s187, 8
      %s189 = smul.addr %s188, 4
      %s190 = scalar_lea.vmem %s3, %s189
      %p191 = scmp.lt.s32.totalorder %s14, 1
      %s192 = scalar_select %p191, %s14, 1
      %s193 = smul.addr %s192, 8
      %s194 = smul.addr %s193, 4
      %s195 = scalar_lea.vmem %s0, %s194
      %p196 = scmp.lt.s32.totalorder %s14, 1
      %s197 = scalar_select %p196, %s14, 1
      %s198 = smul.addr %s197, 8
      %s199 = smul.addr %s198, 4
      %s200 = scalar_lea.vmem %s1, %s199
      %p201 = scmp.lt.s32.totalorder %s14, 1
      %s202 = scalar_select %p201, %s14, 1
      %s203 = smul.addr %s202, 8
      %s204 = smul.addr %s203, 4
      %s205 = scalar_lea.vmem %s2, %s204
      %p206 = scmp.lt.s32.totalorder %s14, 1
      %s207 = scalar_select %p206, %s14, 1
      %s208 = smul.addr %s207, 8
      %s209 = smul.addr %s208, 4
      %s210 = scalar_lea.vmem %s3, %s209
      %v212 = vlaneseq
      %v213 = vshrl.u32 %v212, 7
      %v214 = vlaneseq
      %v215 = vand.u32 %v214, 127
      %vm216 = vcmp.le.s32.totalorder %v215, %v213
      %v217 = vld [vmem:[%s195] sm:$0x1]
      %v218 = vld [vmem:[%s195 + $0x4] sm:$0x1]
      %v219 = vld [vmem:[%s195 + $0x8] sm:$0x1]
      %v220 = vld [vmem:[%s195 + $0xc] sm:$0x1]
      %v221 = vld [vmem:[%s195 + $0x10] sm:$0x1]
      %v222 = vld [vmem:[%s195 + $0x14] sm:$0x1]
      %v223 = vld [vmem:[%s195 + $0x18] sm:$0x1]
      %v224 = vld [vmem:[%s195 + $0x1c] sm:$0x1]
      %v225 = vpack.c.bf16 %v217, %v217
      %v226 = vpack.c.bf16 %v218, %v218
      %v227 = vpack.c.bf16 %v219, %v219
      %v228 = vpack.c.bf16 %v220, %v220
      %v229 = vpack.c.bf16 %v221, %v221
      %v230 = vpack.c.bf16 %v222, %v222
      %v231 = vpack.c.bf16 %v223, %v223
      %v232 = vpack.c.bf16 %v224, %v224
      %v233 = vld [vmem:[%s200] sm:$0x1]
      %v234 = vld [vmem:[%s200 + $0x4] sm:$0x1]
      %v235 = vld [vmem:[%s200 + $0x8] sm:$0x1]
      %v236 = vld [vmem:[%s200 + $0xc] sm:$0x1]
      %v237 = vld [vmem:[%s200 + $0x10] sm:$0x1]
      %v238 = vld [vmem:[%s200 + $0x14] sm:$0x1]
      %v239 = vld [vmem:[%s200 + $0x18] sm:$0x1]
      %v240 = vld [vmem:[%s200 + $0x1c] sm:$0x1]
      %v241 = vpack.c.bf16 %v233, %v233
      %v242 = vpack.c.bf16 %v234, %v234
      %v243 = vpack.c.bf16 %v235, %v235
      %v244 = vpack.c.bf16 %v236, %v236
      %v245 = vpack.c.bf16 %v237, %v237
      %v246 = vpack.c.bf16 %v238, %v238
      %v247 = vpack.c.bf16 %v239, %v239
      %v248 = vpack.c.bf16 %v240, %v240
      %v249 = vld [vmem:[%s205] sm:$0x1]
      %v250 = vld [vmem:[%s205 + $0x4] sm:$0x1]
      %v251 = vld [vmem:[%s205 + $0x8] sm:$0x1]
      %v252 = vld [vmem:[%s205 + $0xc] sm:$0x1]
      %v253 = vld [vmem:[%s205 + $0x10] sm:$0x1]
      %v254 = vld [vmem:[%s205 + $0x14] sm:$0x1]
      %v255 = vld [vmem:[%s205 + $0x18] sm:$0x1]
      %v256 = vld [vmem:[%s205 + $0x1c] sm:$0x1]
      %v257 = vpack.c.bf16 %v249, %v249
      %v258 = vpack.c.bf16 %v250, %v250
      %v259 = vpack.c.bf16 %v251, %v251
      %v260 = vpack.c.bf16 %v252, %v252
      %v261 = vpack.c.bf16 %v253, %v253
      %v262 = vpack.c.bf16 %v254, %v254
      %v263 = vpack.c.bf16 %v255, %v255
      %v264 = vpack.c.bf16 %v256, %v256
      %v273 = vunpack.c.l.b16 %v225
      %v274 = vunpack.c.l.b16 %v226
      %v275 = vunpack.c.l.b16 %v227
      %v276 = vunpack.c.l.b16 %v228
      %v277 = vunpack.c.l.b16 %v229
      %v278 = vunpack.c.l.b16 %v230
      %v279 = vunpack.c.l.b16 %v231
      %v280 = vunpack.c.l.b16 %v232
      %v281 = vrot.slane %v274, 7
      %vm282 = vcmask 1041409
      %v283 = vsel %vm282, %v281, %v273
      %v284 = vrot.slane %v275, 6
      %vm285 = vcmask 1042434
      %v286 = vsel %vm285, %v284, %v283
      %v287 = vrot.slane %v276, 5
      %vm288 = vcmask 1043459
      %v289 = vsel %vm288, %v287, %v286
      %v290 = vrot.slane %v277, 4
      %vm291 = vcmask 1044484
      %v292 = vsel %vm291, %v290, %v289
      %v293 = vrot.slane %v278, 3
      %vm294 = vcmask 1045509
      %v295 = vsel %vm294, %v293, %v292
      %v296 = vrot.slane %v279, 2
      %vm297 = vcmask 1046534
      %v298 = vsel %vm297, %v296, %v295
      %v299 = vrot.slane %v280, 1
      %vm300 = vcmask 1047559
      %v301 = vsel %vm300, %v299, %v298
      %v302 = vpack.c.b16 %v301, %v301
      %v311 = vunpack.c.l.b16 %v241
      %v312 = vunpack.c.l.b16 %v242
      %v313 = vunpack.c.l.b16 %v243
      %v314 = vunpack.c.l.b16 %v244
      %v315 = vunpack.c.l.b16 %v245
      %v316 = vunpack.c.l.b16 %v246
      %v317 = vunpack.c.l.b16 %v247
      %v318 = vunpack.c.l.b16 %v248
      %v319 = vrot.slane %v312, 7
      %v320 = vsel %vm282, %v319, %v311
      %v321 = vrot.slane %v313, 6
      %v322 = vsel %vm285, %v321, %v320
      %v323 = vrot.slane %v314, 5
      %v324 = vsel %vm288, %v323, %v322
      %v325 = vrot.slane %v315, 4
      %v326 = vsel %vm291, %v325, %v324
      %v327 = vrot.slane %v316, 3
      %v328 = vsel %vm294, %v327, %v326
      %v329 = vrot.slane %v317, 2
      %v330 = vsel %vm297, %v329, %v328
      %v331 = vrot.slane %v318, 1
      %v332 = vsel %vm300, %v331, %v330
      %v333 = vpack.c.b16 %v332, %v332
      %vm334 = vcmask 64512
      %v336 = vsel %vm334, %v302, 0
      %v339 = vsel %vm334, %v333, 0
      %341 = vmatprep.subr.bf16.mxu0 0
      %342 = vmatpush1.bf16.xpose.msra.mxu0 %v339
      %343 = vmatprep.subr.bf16.mxu0 0
      %344 = vmatpush1.bf16.xpose.msra.mxu0 0
      %345 = vmatprep.subr.bf16.mxu0 0
      %346 = vmatpush1.bf16.xpose.msra.mxu0 0
      %347 = vmatprep.subr.bf16.mxu0 0
      %348 = vmatpush1.bf16.xpose.msra.mxu0 0
      %349 = vmatprep.subr.bf16.mxu0 0
      %350 = vmatpush1.bf16.xpose.msra.mxu0 0
      %351 = vmatprep.subr.bf16.mxu0 0
      %352 = vmatpush1.bf16.xpose.msra.mxu0 0
      %353 = vmatprep.subr.bf16.mxu0 0
      %354 = vmatpush1.bf16.xpose.msra.mxu0 0
      %355 = vmatprep.subr.bf16.mxu0 0
      %356 = vmatpush1.bf16.xpose.msra.mxu0 0
      %357 = vmatprep.subr.bf16.mxu0 0
      %358 = vmatpush1.bf16.xpose.msra.mxu0 0
      %359 = vmatprep.subr.bf16.mxu0 0
      %360 = vmatpush1.bf16.xpose.msra.mxu0 0
      %361 = vmatprep.subr.bf16.mxu0 0
      %362 = vmatpush1.bf16.xpose.msra.mxu0 0
      %363 = vmatprep.subr.bf16.mxu0 0
      %364 = vmatpush1.bf16.xpose.msra.mxu0 0
      %365 = vmatprep.subr.bf16.mxu0 0
      %366 = vmatpush1.bf16.xpose.msra.mxu0 0
      %367 = vmatprep.subr.bf16.mxu0 0
      %368 = vmatpush1.bf16.xpose.msra.mxu0 0
      %369 = vmatprep.subr.bf16.mxu0 0
      %370 = vmatpush1.bf16.xpose.msra.mxu0 0
      %371 = vmatprep.subr.bf16.mxu0 0
      %372 = vmatpush1.bf16.xpose.msra.mxu0 0
      %373 = vmatprep.mubr.bf16.mxu0 0
      %374 = vmatmul.mubr.bf16.gmra.mrb[0].mxu0 %v336
      %v375 = vpop.f32.mrb[0].mxu0
      %v376 = vadd.f32 0.0, %v375
      %v377 = vpop.f32.mrb[0].mxu0
      %v378 = vpop.f32.mrb[0].mxu0
      %v379 = vpop.f32.mrb[0].mxu0
      %380 = vdwg.mxu0
      %v381 = vmul.f32 %v376, 0.35355338
      %v382 = vsel %vm216, %v381, -1e+30
      %v383 = vsel %vm334, %v382, -inf
      %384 = vmax.xlane.f32.xlu0 %v383
      %v385 = vpop.xlane.xlu0 %384
      %v386 = vsub.f32 %v382, %v385
      %v387 = vmul.f32 %v386, 1.442695
      %v388 = vpow.pop %v387
      %v389 = vsel %vm334, %v388, 0.0
      %390 = vadd.xlane.f32.xlu0 %v389
      %v391 = vpop.xlane.xlu0 %390
      %v392 = vrcp.pop %v391
      %v393 = vmul.f32 %v388, %v392
      %v394 = vpack.c.bf16 %v393, %v393
      %v403 = vunpack.c.l.b16 %v257
      %v404 = vunpack.c.l.b16 %v258
      %v405 = vunpack.c.l.b16 %v259
      %v406 = vunpack.c.l.b16 %v260
      %v407 = vunpack.c.l.b16 %v261
      %v408 = vunpack.c.l.b16 %v262
      %v409 = vunpack.c.l.b16 %v263
      %v410 = vunpack.c.l.b16 %v264
      %v411 = vrot.slane %v404, 7
      %v412 = vsel %vm282, %v411, %v403
      %v413 = vrot.slane %v405, 6
      %v414 = vsel %vm285, %v413, %v412
      %v415 = vrot.slane %v406, 5
      %v416 = vsel %vm288, %v415, %v414
      %v417 = vrot.slane %v407, 4
      %v418 = vsel %vm291, %v417, %v416
      %v419 = vrot.slane %v408, 3
      %v420 = vsel %vm294, %v419, %v418
      %v421 = vrot.slane %v409, 2
      %v422 = vsel %vm297, %v421, %v420
      %v423 = vrot.slane %v410, 1
      %v424 = vsel %vm300, %v423, %v422
      %v425 = vpack.c.b16 %v424, %v424
      %v427 = vsel %vm334, %v394, 0
      %vm429 = vcmask 1043456
      %v431 = vsel %vm429, %v425, 0
      %433 = vmatprep.subr.bf16.mxu0 0
      %434 = vmatpush1.bf16.msra.mxu0 %v431
      %435 = vmatprep.subr.bf16.mxu0 0
      %436 = vmatpush1.bf16.msra.mxu0 0
      %437 = vmatprep.subr.bf16.mxu0 0
      %438 = vmatpush1.bf16.msra.mxu0 0
      %439 = vmatprep.subr.bf16.mxu0 0
      %440 = vmatpush1.bf16.msra.mxu0 0
      %441 = vmatprep.subr.bf16.mxu0 0
      %442 = vmatpush1.bf16.msra.mxu0 0
      %443 = vmatprep.subr.bf16.mxu0 0
      %444 = vmatpush1.bf16.msra.mxu0 0
      %445 = vmatprep.subr.bf16.mxu0 0
      %446 = vmatpush1.bf16.msra.mxu0 0
      %447 = vmatprep.subr.bf16.mxu0 0
      %448 = vmatpush1.bf16.msra.mxu0 0
      %449 = vmatprep.subr.bf16.mxu0 0
      %450 = vmatpush1.bf16.msra.mxu0 0
      %451 = vmatprep.subr.bf16.mxu0 0
      %452 = vmatpush1.bf16.msra.mxu0 0
      %453 = vmatprep.subr.bf16.mxu0 0
      %454 = vmatpush1.bf16.msra.mxu0 0
      %455 = vmatprep.subr.bf16.mxu0 0
      %456 = vmatpush1.bf16.msra.mxu0 0
      %457 = vmatprep.subr.bf16.mxu0 0
      %458 = vmatpush1.bf16.msra.mxu0 0
      %459 = vmatprep.subr.bf16.mxu0 0
      %460 = vmatpush1.bf16.msra.mxu0 0
      %461 = vmatprep.subr.bf16.mxu0 0
      %462 = vmatpush1.bf16.msra.mxu0 0
      %463 = vmatprep.subr.bf16.mxu0 0
      %464 = vmatpush1.bf16.msra.mxu0 0
      %465 = vmatprep.mubr.bf16.mxu0 0
      %466 = vmatmul.mubr.bf16.gmra.mrb[0].mxu0 %v427
      %v467 = vpop.f32.mrb[0].mxu0
      %v468 = vadd.f32 0.0, %v467
      %v469 = vpop.f32.mrb[0].mxu0
      %v470 = vpop.f32.mrb[0].mxu0
      %v471 = vpop.f32.mrb[0].mxu0
      %472 = vdwg.mxu0
      %v474 = vcombine.high %v468, %v468
      %v476 = vunpack.c.l.s4 1966171168
      %v477 = vunpack.c.0.s8 %v476
      %v478 = vlaneseq
      %v479 = vshrl.u32 %v478, 7
      %v480 = vsub.s32 %v477, %v479
      %v481 = vrot.slane %v468, %v480
      %v483 = vunpack.c.l.s4 1966171168
      %v484 = vunpack.c.0.s8 %v483
      %v485 = vlaneseq
      %v486 = vshrl.u32 %v485, 7
      %v487 = vsub.s32 %v484, %v486
      %v488 = vrot.slane %v474, %v487
      %v489 = vcombine.high %v481, %v481
      %v490 = vcombine.high %v488, %v488
      %v492 = vunpack.c.l.s4 1966171168
      %v493 = vunpack.c.0.s8 %v492
      %v494 = vlaneseq
      %v495 = vshrl.u32 %v494, 7
      %v496 = vsub.s32 %v493, %v495
      %v497 = vrot.slane %v481, %v496
      %v499 = vunpack.c.l.s4 1966171168
      %v500 = vunpack.c.0.s8 %v499
      %v501 = vlaneseq
      %v502 = vshrl.u32 %v501, 7
      %v503 = vsub.s32 %v500, %v502
      %v504 = vrot.slane %v488, %v503
      %v506 = vunpack.c.l.s4 1966171168
      %v507 = vunpack.c.0.s8 %v506
      %v508 = vlaneseq
      %v509 = vshrl.u32 %v508, 7
      %v510 = vsub.s32 %v507, %v509
      %v511 = vrot.slane %v489, %v510
      %v513 = vunpack.c.l.s4 1966171168
      %v514 = vunpack.c.0.s8 %v513
      %v515 = vlaneseq
      %v516 = vshrl.u32 %v515, 7
      %v517 = vsub.s32 %v514, %v516
      %v518 = vrot.slane %v490, %v517
      %v519 = vcombine.high %v497, %v497
      %v520 = vcombine.high %v504, %v504
      %v521 = vcombine.high %v511, %v511
      %v522 = vcombine.high %v518, %v518
      %vm531 = vcmask 57344
      %532 = vst.msk [vmem:[%s210] sm:$0x1] %vm531, %v497
      %533 = vst.msk [vmem:[%s210 + $0x4] sm:$0x1] %vm531, %v511
      %534 = vst.msk [vmem:[%s210 + $0x8] sm:$0x1] %vm531, %v519
      %535 = vst.msk [vmem:[%s210 + $0xc] sm:$0x1] %vm531, %v521
      %536 = vst.msk [vmem:[%s210 + $0x10] sm:$0x1] %vm531, %v504
      %537 = vst.msk [vmem:[%s210 + $0x14] sm:$0x1] %vm531, %v518
      %538 = vst.msk [vmem:[%s210 + $0x18] sm:$0x1] %vm531, %v520
      %539 = vst.msk [vmem:[%s210 + $0x1c] sm:$0x1] %vm531, %v522
      %v540 = vld [vmem:[%s195 + $0x1] sm:$0x1]
      %v541 = vld [vmem:[%s195 + $0x5] sm:$0x1]
      %v542 = vld [vmem:[%s195 + $0x9] sm:$0x1]
      %v543 = vld [vmem:[%s195 + $0xd] sm:$0x1]
      %v544 = vld [vmem:[%s195 + $0x11] sm:$0x1]
      %v545 = vld [vmem:[%s195 + $0x15] sm:$0x1]
      %v546 = vld [vmem:[%s195 + $0x19] sm:$0x1]
      %v547 = vld [vmem:[%s195 + $0x1d] sm:$0x1]
      %v548 = vpack.c.bf16 %v540, %v540
      %v549 = vpack.c.bf16 %v541, %v541
      %v550 = vpack.c.bf16 %v542, %v542
      %v551 = vpack.c.bf16 %v543, %v543
      %v552 = vpack.c.bf16 %v544, %v544
      %v553 = vpack.c.bf16 %v545, %v545
      %v554 = vpack.c.bf16 %v546, %v546
      %v555 = vpack.c.bf16 %v547, %v547
      %v556 = vld [vmem:[%s200 + $0x1] sm:$0x1]
      %v557 = vld [vmem:[%s200 + $0x5] sm:$0x1]
      %v558 = vld [vmem:[%s200 + $0x9] sm:$0x1]
      %v559 = vld [vmem:[%s200 + $0xd] sm:$0x1]
      %v560 = vld [vmem:[%s200 + $0x11] sm:$0x1]
      %v561 = vld [vmem:[%s200 + $0x15] sm:$0x1]
      %v562 = vld [vmem:[%s200 + $0x19] sm:$0x1]
      %v563 = vld [vmem:[%s200 + $0x1d] sm:$0x1]
      %v564 = vpack.c.bf16 %v556, %v556
      %v565 = vpack.c.bf16 %v557, %v557
      %v566 = vpack.c.bf16 %v558, %v558
      %v567 = vpack.c.bf16 %v559, %v559
      %v568 = vpack.c.bf16 %v560, %v560
      %v569 = vpack.c.bf16 %v561, %v561
      %v570 = vpack.c.bf16 %v562, %v562
      %v571 = vpack.c.bf16 %v563, %v563
      %v572 = vld [vmem:[%s205 + $0x1] sm:$0x1]
      %v573 = vld [vmem:[%s205 + $0x5] sm:$0x1]
      %v574 = vld [vmem:[%s205 + $0x9] sm:$0x1]
      %v575 = vld [vmem:[%s205 + $0xd] sm:$0x1]
      %v576 = vld [vmem:[%s205 + $0x11] sm:$0x1]
      %v577 = vld [vmem:[%s205 + $0x15] sm:$0x1]
      %v578 = vld [vmem:[%s205 + $0x19] sm:$0x1]
      %v579 = vld [vmem:[%s205 + $0x1d] sm:$0x1]
      %v580 = vpack.c.bf16 %v572, %v572
      %v581 = vpack.c.bf16 %v573, %v573
      %v582 = vpack.c.bf16 %v574, %v574
      %v583 = vpack.c.bf16 %v575, %v575
      %v584 = vpack.c.bf16 %v576, %v576
      %v585 = vpack.c.bf16 %v577, %v577
      %v586 = vpack.c.bf16 %v578, %v578
      %v587 = vpack.c.bf16 %v579, %v579
      %v596 = vunpack.c.l.b16 %v548
      %v597 = vunpack.c.l.b16 %v549
      %v598 = vunpack.c.l.b16 %v550
      %v599 = vunpack.c.l.b16 %v551
      %v600 = vunpack.c.l.b16 %v552
      %v601 = vunpack.c.l.b16 %v553
      %v602 = vunpack.c.l.b16 %v554
      %v603 = vunpack.c.l.b16 %v555
      %v604 = vrot.slane %v597, 7
      %v605 = vsel %vm282, %v604, %v596
      %v606 = vrot.slane %v598, 6
      %v607 = vsel %vm285, %v606, %v605
      %v608 = vrot.slane %v599, 5
      %v609 = vsel %vm288, %v608, %v607
      %v610 = vrot.slane %v600, 4
      %v611 = vsel %vm291, %v610, %v609
      %v612 = vrot.slane %v601, 3
      %v613 = vsel %vm294, %v612, %v611
      %v614 = vrot.slane %v602, 2
      %v615 = vsel %vm297, %v614, %v613
      %v616 = vrot.slane %v603, 1
      %v617 = vsel %vm300, %v616, %v615
      %v618 = vpack.c.b16 %v617, %v617
      %v627 = vunpack.c.l.b16 %v564
      %v628 = vunpack.c.l.b16 %v565
      %v629 = vunpack.c.l.b16 %v566
      %v630 = vunpack.c.l.b16 %v567
      %v631 = vunpack.c.l.b16 %v568
      %v632 = vunpack.c.l.b16 %v569
      %v633 = vunpack.c.l.b16 %v570
      %v634 = vunpack.c.l.b16 %v571
      %v635 = vrot.slane %v628, 7
      %v636 = vsel %vm282, %v635, %v627
      %v637 = vrot.slane %v629, 6
      %v638 = vsel %vm285, %v637, %v636
      %v639 = vrot.slane %v630, 5
      %v640 = vsel %vm288, %v639, %v638
      %v641 = vrot.slane %v631, 4
      %v642 = vsel %vm291, %v641, %v640
      %v643 = vrot.slane %v632, 3
      %v644 = vsel %vm294, %v643, %v642
      %v645 = vrot.slane %v633, 2
      %v646 = vsel %vm297, %v645, %v644
      %v647 = vrot.slane %v634, 1
      %v648 = vsel %vm300, %v647, %v646
      %v649 = vpack.c.b16 %v648, %v648
      %v651 = vsel %vm334, %v618, 0
      %v654 = vsel %vm334, %v649, 0
      %656 = vmatprep.subr.bf16.mxu0 0
      %657 = vmatpush1.bf16.xpose.msra.mxu0 %v654
      %658 = vmatprep.subr.bf16.mxu0 0
      %659 = vmatpush1.bf16.xpose.msra.mxu0 0
      %660 = vmatprep.subr.bf16.mxu0 0
      %661 = vmatpush1.bf16.xpose.msra.mxu0 0
      %662 = vmatprep.subr.bf16.mxu0 0
      %663 = vmatpush1.bf16.xpose.msra.mxu0 0
      %664 = vmatprep.subr.bf16.mxu0 0
      %665 = vmatpush1.bf16.xpose.msra.mxu0 0
      %666 = vmatprep.subr.bf16.mxu0 0
      %667 = vmatpush1.bf16.xpose.msra.mxu0 0
      %668 = vmatprep.subr.bf16.mxu0 0
      %669 = vmatpush1.bf16.xpose.msra.mxu0 0
      %670 = vmatprep.subr.bf16.mxu0 0
      %671 = vmatpush1.bf16.xpose.msra.mxu0 0
      %672 = vmatprep.subr.bf16.mxu0 0
      %673 = vmatpush1.bf16.xpose.msra.mxu0 0
      %674 = vmatprep.subr.bf16.mxu0 0
      %675 = vmatpush1.bf16.xpose.msra.mxu0 0
      %676 = vmatprep.subr.bf16.mxu0 0
      %677 = vmatpush1.bf16.xpose.msra.mxu0 0
      %678 = vmatprep.subr.bf16.mxu0 0
      %679 = vmatpush1.bf16.xpose.msra.mxu0 0
      %680 = vmatprep.subr.bf16.mxu0 0
      %681 = vmatpush1.bf16.xpose.msra.mxu0 0
      %682 = vmatprep.subr.bf16.mxu0 0
      %683 = vmatpush1.bf16.xpose.msra.mxu0 0
      %684 = vmatprep.subr.bf16.mxu0 0
      %685 = vmatpush1.bf16.xpose.msra.mxu0 0
      %686 = vmatprep.subr.bf16.mxu0 0
      %687 = vmatpush1.bf16.xpose.msra.mxu0 0
      %688 = vmatprep.mubr.bf16.mxu0 0
      %689 = vmatmul.mubr.bf16.gmra.mrb[0].mxu0 %v651
      %v690 = vpop.f32.mrb[0].mxu0
      %v691 = vadd.f32 0.0, %v690
      %v692 = vpop.f32.mrb[0].mxu0
      %v693 = vpop.f32.mrb[0].mxu0
      %v694 = vpop.f32.mrb[0].mxu0
      %695 = vdwg.mxu0
      %v696 = vmul.f32 %v691, 0.35355338
      %v697 = vsel %vm216, %v696, -1e+30
      %v698 = vsel %vm334, %v697, -inf
      %699 = vmax.xlane.f32.xlu0 %v698
      %v700 = vpop.xlane.xlu0 %699
      %v701 = vsub.f32 %v697, %v700
      %v702 = vmul.f32 %v701, 1.442695
      %v703 = vpow.pop %v702
      %v704 = vsel %vm334, %v703, 0.0
      %705 = vadd.xlane.f32.xlu0 %v704
      %v706 = vpop.xlane.xlu0 %705
      %v707 = vrcp.pop %v706
      %v708 = vmul.f32 %v703, %v707
      %v709 = vpack.c.bf16 %v708, %v708
      %v718 = vunpack.c.l.b16 %v580
      %v719 = vunpack.c.l.b16 %v581
      %v720 = vunpack.c.l.b16 %v582
      %v721 = vunpack.c.l.b16 %v583
      %v722 = vunpack.c.l.b16 %v584
      %v723 = vunpack.c.l.b16 %v585
      %v724 = vunpack.c.l.b16 %v586
      %v725 = vunpack.c.l.b16 %v587
      %v726 = vrot.slane %v719, 7
      %v727 = vsel %vm282, %v726, %v718
      %v728 = vrot.slane %v720, 6
      %v729 = vsel %vm285, %v728, %v727
      %v730 = vrot.slane %v721, 5
      %v731 = vsel %vm288, %v730, %v729
      %v732 = vrot.slane %v722, 4
      %v733 = vsel %vm291, %v732, %v731
      %v734 = vrot.slane %v723, 3
      %v735 = vsel %vm294, %v734, %v733
      %v736 = vrot.slane %v724, 2
      %v737 = vsel %vm297, %v736, %v735
      %v738 = vrot.slane %v725, 1
      %v739 = vsel %vm300, %v738, %v737
      %v740 = vpack.c.b16 %v739, %v739
      %v742 = vsel %vm334, %v709, 0
      %v745 = vsel %vm429, %v740, 0
      %747 = vmatprep.subr.bf16.mxu0 0
      %748 = vmatpush1.bf16.msra.mxu0 %v745
      %749 = vmatprep.subr.bf16.mxu0 0
      %750 = vmatpush1.bf16.msra.mxu0 0
      %751 = vmatprep.subr.bf16.mxu0 0
      %752 = vmatpush1.bf16.msra.mxu0 0
      %753 = vmatprep.subr.bf16.mxu0 0
      %754 = vmatpush1.bf16.msra.mxu0 0
      %755 = vmatprep.subr.bf16.mxu0 0
      %756 = vmatpush1.bf16.msra.mxu0 0
      %757 = vmatprep.subr.bf16.mxu0 0
      %758 = vmatpush1.bf16.msra.mxu0 0
      %759 = vmatprep.subr.bf16.mxu0 0
      %760 = vmatpush1.bf16.msra.mxu0 0
      %761 = vmatprep.subr.bf16.mxu0 0
      %762 = vmatpush1.bf16.msra.mxu0 0
      %763 = vmatprep.subr.bf16.mxu0 0
      %764 = vmatpush1.bf16.msra.mxu0 0
      %765 = vmatprep.subr.bf16.mxu0 0
      %766 = vmatpush1.bf16.msra.mxu0 0
      %767 = vmatprep.subr.bf16.mxu0 0
      %768 = vmatpush1.bf16.msra.mxu0 0
      %769 = vmatprep.subr.bf16.mxu0 0
      %770 = vmatpush1.bf16.msra.mxu0 0
      %771 = vmatprep.subr.bf16.mxu0 0
      %772 = vmatpush1.bf16.msra.mxu0 0
      %773 = vmatprep.subr.bf16.mxu0 0
      %774 = vmatpush1.bf16.msra.mxu0 0
      %775 = vmatprep.subr.bf16.mxu0 0
      %776 = vmatpush1.bf16.msra.mxu0 0
      %777 = vmatprep.subr.bf16.mxu0 0
      %778 = vmatpush1.bf16.msra.mxu0 0
      %779 = vmatprep.mubr.bf16.mxu0 0
      %780 = vmatmul.mubr.bf16.gmra.mrb[0].mxu0 %v742
      %v781 = vpop.f32.mrb[0].mxu0
      %v782 = vadd.f32 0.0, %v781
      %v783 = vpop.f32.mrb[0].mxu0
      %v784 = vpop.f32.mrb[0].mxu0
      %v785 = vpop.f32.mrb[0].mxu0
      %786 = vdwg.mxu0
      %v788 = vcombine.high %v782, %v782
      %v790 = vunpack.c.l.s4 1966171168
      %v791 = vunpack.c.0.s8 %v790
      %v792 = vlaneseq
      %v793 = vshrl.u32 %v792, 7
      %v794 = vsub.s32 %v791, %v793
      %v795 = vrot.slane %v782, %v794
      %v797 = vunpack.c.l.s4 1966171168
      %v798 = vunpack.c.0.s8 %v797
      %v799 = vlaneseq
      %v800 = vshrl.u32 %v799, 7
      %v801 = vsub.s32 %v798, %v800
      %v802 = vrot.slane %v788, %v801
      %v803 = vcombine.high %v795, %v795
      %v804 = vcombine.high %v802, %v802
      %v806 = vunpack.c.l.s4 1966171168
      %v807 = vunpack.c.0.s8 %v806
      %v808 = vlaneseq
      %v809 = vshrl.u32 %v808, 7
      %v810 = vsub.s32 %v807, %v809
      %v811 = vrot.slane %v795, %v810
      %v813 = vunpack.c.l.s4 1966171168
      %v814 = vunpack.c.0.s8 %v813
      %v815 = vlaneseq
      %v816 = vshrl.u32 %v815, 7
      %v817 = vsub.s32 %v814, %v816
      %v818 = vrot.slane %v802, %v817
      %v820 = vunpack.c.l.s4 1966171168
      %v821 = vunpack.c.0.s8 %v820
      %v822 = vlaneseq
      %v823 = vshrl.u32 %v822, 7
      %v824 = vsub.s32 %v821, %v823
      %v825 = vrot.slane %v803, %v824
      %v827 = vunpack.c.l.s4 1966171168
      %v828 = vunpack.c.0.s8 %v827
      %v829 = vlaneseq
      %v830 = vshrl.u32 %v829, 7
      %v831 = vsub.s32 %v828, %v830
      %v832 = vrot.slane %v804, %v831
      %v833 = vcombine.high %v811, %v811
      %v834 = vcombine.high %v818, %v818
      %v835 = vcombine.high %v825, %v825
      %v836 = vcombine.high %v832, %v832
      %845 = vst.msk [vmem:[%s210 + $0x1] sm:$0x1] %vm531, %v811
      %846 = vst.msk [vmem:[%s210 + $0x5] sm:$0x1] %vm531, %v825
      %847 = vst.msk [vmem:[%s210 + $0x9] sm:$0x1] %vm531, %v833
      %848 = vst.msk [vmem:[%s210 + $0xd] sm:$0x1] %vm531, %v835
      %849 = vst.msk [vmem:[%s210 + $0x11] sm:$0x1] %vm531, %v818
      %850 = vst.msk [vmem:[%s210 + $0x15] sm:$0x1] %vm531, %v832
      %851 = vst.msk [vmem:[%s210 + $0x19] sm:$0x1] %vm531, %v834
      %852 = vst.msk [vmem:[%s210 + $0x1d] sm:$0x1] %vm531, %v836
      %v853 = vld [vmem:[%s195 + $0x2] sm:$0x1]
      %v854 = vld [vmem:[%s195 + $0x6] sm:$0x1]
      %v855 = vld [vmem:[%s195 + $0xa] sm:$0x1]
      %v856 = vld [vmem:[%s195 + $0xe] sm:$0x1]
      %v857 = vld [vmem:[%s195 + $0x12] sm:$0x1]
      %v858 = vld [vmem:[%s195 + $0x16] sm:$0x1]
      %v859 = vld [vmem:[%s195 + $0x1a] sm:$0x1]
      %v860 = vld [vmem:[%s195 + $0x1e] sm:$0x1]
      %v861 = vpack.c.bf16 %v853, %v853
      %v862 = vpack.c.bf16 %v854, %v854
      %v863 = vpack.c.bf16 %v855, %v855
      %v864 = vpack.c.bf16 %v856, %v856
      %v865 = vpack.c.bf16 %v857, %v857
      %v866 = vpack.c.bf16 %v858, %v858
      %v867 = vpack.c.bf16 %v859, %v859
      %v868 = vpack.c.bf16 %v860, %v860
      %v869 = vld [vmem:[%s200 + $0x2] sm:$0x1]
      %v870 = vld [vmem:[%s200 + $0x6] sm:$0x1]
      %v871 = vld [vmem:[%s200 + $0xa] sm:$0x1]
      %v872 = vld [vmem:[%s200 + $0xe] sm:$0x1]
      %v873 = vld [vmem:[%s200 + $0x12] sm:$0x1]
      %v874 = vld [vmem:[%s200 + $0x16] sm:$0x1]
      %v875 = vld [vmem:[%s200 + $0x1a] sm:$0x1]
      %v876 = vld [vmem:[%s200 + $0x1e] sm:$0x1]
      %v877 = vpack.c.bf16 %v869, %v869
      %v878 = vpack.c.bf16 %v870, %v870
      %v879 = vpack.c.bf16 %v871, %v871
      %v880 = vpack.c.bf16 %v872, %v872
      %v881 = vpack.c.bf16 %v873, %v873
      %v882 = vpack.c.bf16 %v874, %v874
      %v883 = vpack.c.bf16 %v875, %v875
      %v884 = vpack.c.bf16 %v876, %v876
      %v885 = vld [vmem:[%s205 + $0x2] sm:$0x1]
      %v886 = vld [vmem:[%s205 + $0x6] sm:$0x1]
      %v887 = vld [vmem:[%s205 + $0xa] sm:$0x1]
      %v888 = vld [vmem:[%s205 + $0xe] sm:$0x1]
      %v889 = vld [vmem:[%s205 + $0x12] sm:$0x1]
      %v890 = vld [vmem:[%s205 + $0x16] sm:$0x1]
      %v891 = vld [vmem:[%s205 + $0x1a] sm:$0x1]
      %v892 = vld [vmem:[%s205 + $0x1e] sm:$0x1]
      %v893 = vpack.c.bf16 %v885, %v885
      %v894 = vpack.c.bf16 %v886, %v886
      %v895 = vpack.c.bf16 %v887, %v887
      %v896 = vpack.c.bf16 %v888, %v888
      %v897 = vpack.c.bf16 %v889, %v889
      %v898 = vpack.c.bf16 %v890, %v890
      %v899 = vpack.c.bf16 %v891, %v891
      %v900 = vpack.c.bf16 %v892, %v892
      %v909 = vunpack.c.l.b16 %v861
      %v910 = vunpack.c.l.b16 %v862
      %v911 = vunpack.c.l.b16 %v863
      %v912 = vunpack.c.l.b16 %v864
      %v913 = vunpack.c.l.b16 %v865
      %v914 = vunpack.c.l.b16 %v866
      %v915 = vunpack.c.l.b16 %v867
      %v916 = vunpack.c.l.b16 %v868
      %v917 = vrot.slane %v910, 7
      %v918 = vsel %vm282, %v917, %v909
      %v919 = vrot.slane %v911, 6
      %v920 = vsel %vm285, %v919, %v918
      %v921 = vrot.slane %v912, 5
      %v922 = vsel %vm288, %v921, %v920
      %v923 = vrot.slane %v913, 4
      %v924 = vsel %vm291, %v923, %v922
      %v925 = vrot.slane %v914, 3
      %v926 = vsel %vm294, %v925, %v924
      %v927 = vrot.slane %v915, 2
      %v928 = vsel %vm297, %v927, %v926
      %v929 = vrot.slane %v916, 1
      %v930 = vsel %vm300, %v929, %v928
      %v931 = vpack.c.b16 %v930, %v930
      %v940 = vunpack.c.l.b16 %v877
      %v941 = vunpack.c.l.b16 %v878
      %v942 = vunpack.c.l.b16 %v879
      %v943 = vunpack.c.l.b16 %v880
      %v944 = vunpack.c.l.b16 %v881
      %v945 = vunpack.c.l.b16 %v882
      %v946 = vunpack.c.l.b16 %v883
      %v947 = vunpack.c.l.b16 %v884
      %v948 = vrot.slane %v941, 7
      %v949 = vsel %vm282, %v948, %v940
      %v950 = vrot.slane %v942, 6
      %v951 = vsel %vm285, %v950, %v949
      %v952 = vrot.slane %v943, 5
      %v953 = vsel %vm288, %v952, %v951
      %v954 = vrot.slane %v944, 4
      %v955 = vsel %vm291, %v954, %v953
      %v956 = vrot.slane %v945, 3
      %v957 = vsel %vm294, %v956, %v955
      %v958 = vrot.slane %v946, 2
      %v959 = vsel %vm297, %v958, %v957
      %v960 = vrot.slane %v947, 1
      %v961 = vsel %vm300, %v960, %v959
      %v962 = vpack.c.b16 %v961, %v961
      %v964 = vsel %vm334, %v931, 0
      %v967 = vsel %vm334, %v962, 0
      %969 = vmatprep.subr.bf16.mxu0 0
      %970 = vmatpush1.bf16.xpose.msra.mxu0 %v967
      %971 = vmatprep.subr.bf16.mxu0 0
      %972 = vmatpush1.bf16.xpose.msra.mxu0 0
      %973 = vmatprep.subr.bf16.mxu0 0
      %974 = vmatpush1.bf16.xpose.msra.mxu0 0
      %975 = vmatprep.subr.bf16.mxu0 0
      %976 = vmatpush1.bf16.xpose.msra.mxu0 0
      %977 = vmatprep.subr.bf16.mxu0 0
      %978 = vmatpush1.bf16.xpose.msra.mxu0 0
      %979 = vmatprep.subr.bf16.mxu0 0
      %980 = vmatpush1.bf16.xpose.msra.mxu0 0
      %981 = vmatprep.subr.bf16.mxu0 0
      %982 = vmatpush1.bf16.xpose.msra.mxu0 0
      %983 = vmatprep.subr.bf16.mxu0 0
      %984 = vmatpush1.bf16.xpose.msra.mxu0 0
      %985 = vmatprep.subr.bf16.mxu0 0
      %986 = vmatpush1.bf16.xpose.msra.mxu0 0
      %987 = vmatprep.subr.bf16.mxu0 0
      %988 = vmatpush1.bf16.xpose.msra.mxu0 0
      %989 = vmatprep.subr.bf16.mxu0 0
      %990 = vmatpush1.bf16.xpose.msra.mxu0 0
      %991 = vmatprep.subr.bf16.mxu0 0
      %992 = vmatpush1.bf16.xpose.msra.mxu0 0
      %993 = vmatprep.subr.bf16.mxu0 0
      %994 = vmatpush1.bf16.xpose.msra.mxu0 0
      %995 = vmatprep.subr.bf16.mxu0 0
      %996 = vmatpush1.bf16.xpose.msra.mxu0 0
      %997 = vmatprep.subr.bf16.mxu0 0
      %998 = vmatpush1.bf16.xpose.msra.mxu0 0
      %999 = vmatprep.subr.bf16.mxu0 0
      %1000 = vmatpush1.bf16.xpose.msra.mxu0 0
      %1001 = vmatprep.mubr.bf16.mxu0 0
      %1002 = vmatmul.mubr.bf16.gmra.mrb[0].mxu0 %v964
      %v1003 = vpop.f32.mrb[0].mxu0
      %v1004 = vadd.f32 0.0, %v1003
      %v1005 = vpop.f32.mrb[0].mxu0
      %v1006 = vpop.f32.mrb[0].mxu0
      %v1007 = vpop.f32.mrb[0].mxu0
      %1008 = vdwg.mxu0
      %v1009 = vmul.f32 %v1004, 0.35355338
      %v1010 = vsel %vm216, %v1009, -1e+30
      %v1011 = vsel %vm334, %v1010, -inf
      %1012 = vmax.xlane.f32.xlu0 %v1011
      %v1013 = vpop.xlane.xlu0 %1012
      %v1014 = vsub.f32 %v1010, %v1013
      %v1015 = vmul.f32 %v1014, 1.442695
      %v1016 = vpow.pop %v1015
      %v1017 = vsel %vm334, %v1016, 0.0
      %1018 = vadd.xlane.f32.xlu0 %v1017
      %v1019 = vpop.xlane.xlu0 %1018
      %v1020 = vrcp.pop %v1019
      %v1021 = vmul.f32 %v1016, %v1020
      %v1022 = vpack.c.bf16 %v1021, %v1021
      %v1031 = vunpack.c.l.b16 %v893
      %v1032 = vunpack.c.l.b16 %v894
      %v1033 = vunpack.c.l.b16 %v895
      %v1034 = vunpack.c.l.b16 %v896
      %v1035 = vunpack.c.l.b16 %v897
      %v1036 = vunpack.c.l.b16 %v898
      %v1037 = vunpack.c.l.b16 %v899
      %v1038 = vunpack.c.l.b16 %v900
      %v1039 = vrot.slane %v1032, 7
      %v1040 = vsel %vm282, %v1039, %v1031
      %v1041 = vrot.slane %v1033, 6
      %v1042 = vsel %vm285, %v1041, %v1040
      %v1043 = vrot.slane %v1034, 5
      %v1044 = vsel %vm288, %v1043, %v1042
      %v1045 = vrot.slane %v1035, 4
      %v1046 = vsel %vm291, %v1045, %v1044
      %v1047 = vrot.slane %v1036, 3
      %v1048 = vsel %vm294, %v1047, %v1046
      %v1049 = vrot.slane %v1037, 2
      %v1050 = vsel %vm297, %v1049, %v1048
      %v1051 = vrot.slane %v1038, 1
      %v1052 = vsel %vm300, %v1051, %v1050
      %v1053 = vpack.c.b16 %v1052, %v1052
      %v1055 = vsel %vm334, %v1022, 0
      %v1058 = vsel %vm429, %v1053, 0
      %1060 = vmatprep.subr.bf16.mxu0 0
      %1061 = vmatpush1.bf16.msra.mxu0 %v1058
      %1062 = vmatprep.subr.bf16.mxu0 0
      %1063 = vmatpush1.bf16.msra.mxu0 0
      %1064 = vmatprep.subr.bf16.mxu0 0
      %1065 = vmatpush1.bf16.msra.mxu0 0
      %1066 = vmatprep.subr.bf16.mxu0 0
      %1067 = vmatpush1.bf16.msra.mxu0 0
      %1068 = vmatprep.subr.bf16.mxu0 0
      %1069 = vmatpush1.bf16.msra.mxu0 0
      %1070 = vmatprep.subr.bf16.mxu0 0
      %1071 = vmatpush1.bf16.msra.mxu0 0
      %1072 = vmatprep.subr.bf16.mxu0 0
      %1073 = vmatpush1.bf16.msra.mxu0 0
      %1074 = vmatprep.subr.bf16.mxu0 0
      %1075 = vmatpush1.bf16.msra.mxu0 0
      %1076 = vmatprep.subr.bf16.mxu0 0
      %1077 = vmatpush1.bf16.msra.mxu0 0
      %1078 = vmatprep.subr.bf16.mxu0 0
      %1079 = vmatpush1.bf16.msra.mxu0 0
      %1080 = vmatprep.subr.bf16.mxu0 0
      %1081 = vmatpush1.bf16.msra.mxu0 0
      %1082 = vmatprep.subr.bf16.mxu0 0
      %1083 = vmatpush1.bf16.msra.mxu0 0
      %1084 = vmatprep.subr.bf16.mxu0 0
      %1085 = vmatpush1.bf16.msra.mxu0 0
      %1086 = vmatprep.subr.bf16.mxu0 0
      %1087 = vmatpush1.bf16.msra.mxu0 0
      %1088 = vmatprep.subr.bf16.mxu0 0
      %1089 = vmatpush1.bf16.msra.mxu0 0
      %1090 = vmatprep.subr.bf16.mxu0 0
      %1091 = vmatpush1.bf16.msra.mxu0 0
      %1092 = vmatprep.mubr.bf16.mxu0 0
      %1093 = vmatmul.mubr.bf16.gmra.mrb[0].mxu0 %v1055
      %v1094 = vpop.f32.mrb[0].mxu0
      %v1095 = vadd.f32 0.0, %v1094
      %v1096 = vpop.f32.mrb[0].mxu0
      %v1097 = vpop.f32.mrb[0].mxu0
      %v1098 = vpop.f32.mrb[0].mxu0
      %1099 = vdwg.mxu0
      %v1101 = vcombine.high %v1095, %v1095
      %v1103 = vunpack.c.l.s4 1966171168
      %v1104 = vunpack.c.0.s8 %v1103
      %v1105 = vlaneseq
      %v1106 = vshrl.u32 %v1105, 7
      %v1107 = vsub.s32 %v1104, %v1106
      %v1108 = vrot.slane %v1095, %v1107
      %v1110 = vunpack.c.l.s4 1966171168
      %v1111 = vunpack.c.0.s8 %v1110
      %v1112 = vlaneseq
      %v1113 = vshrl.u32 %v1112, 7
      %v1114 = vsub.s32 %v1111, %v1113
      %v1115 = vrot.slane %v1101, %v1114
      %v1116 = vcombine.high %v1108, %v1108
      %v1117 = vcombine.high %v1115, %v1115
      %v1119 = vunpack.c.l.s4 1966171168
      %v1120 = vunpack.c.0.s8 %v1119
      %v1121 = vlaneseq
      %v1122 = vshrl.u32 %v1121, 7
      %v1123 = vsub.s32 %v1120, %v1122
      %v1124 = vrot.slane %v1108, %v1123
      %v1126 = vunpack.c.l.s4 1966171168
      %v1127 = vunpack.c.0.s8 %v1126
      %v1128 = vlaneseq
      %v1129 = vshrl.u32 %v1128, 7
      %v1130 = vsub.s32 %v1127, %v1129
      %v1131 = vrot.slane %v1115, %v1130
      %v1133 = vunpack.c.l.s4 1966171168
      %v1134 = vunpack.c.0.s8 %v1133
      %v1135 = vlaneseq
      %v1136 = vshrl.u32 %v1135, 7
      %v1137 = vsub.s32 %v1134, %v1136
      %v1138 = vrot.slane %v1116, %v1137
      %v1140 = vunpack.c.l.s4 1966171168
      %v1141 = vunpack.c.0.s8 %v1140
      %v1142 = vlaneseq
      %v1143 = vshrl.u32 %v1142, 7
      %v1144 = vsub.s32 %v1141, %v1143
      %v1145 = vrot.slane %v1117, %v1144
      %v1146 = vcombine.high %v1124, %v1124
      %v1147 = vcombine.high %v1131, %v1131
      %v1148 = vcombine.high %v1138, %v1138
      %v1149 = vcombine.high %v1145, %v1145
      %1158 = vst.msk [vmem:[%s210 + $0x2] sm:$0x1] %vm531, %v1124
      %1159 = vst.msk [vmem:[%s210 + $0x6] sm:$0x1] %vm531, %v1138
      %1160 = vst.msk [vmem:[%s210 + $0xa] sm:$0x1] %vm531, %v1146
      %1161 = vst.msk [vmem:[%s210 + $0xe] sm:$0x1] %vm531, %v1148
      %1162 = vst.msk [vmem:[%s210 + $0x12] sm:$0x1] %vm531, %v1131
      %1163 = vst.msk [vmem:[%s210 + $0x16] sm:$0x1] %vm531, %v1145
      %1164 = vst.msk [vmem:[%s210 + $0x1a] sm:$0x1] %vm531, %v1147
      %1165 = vst.msk [vmem:[%s210 + $0x1e] sm:$0x1] %vm531, %v1149
      %v1166 = vld [vmem:[%s195 + $0x3] sm:$0x1]
      %v1167 = vld [vmem:[%s195 + $0x7] sm:$0x1]
      %v1168 = vld [vmem:[%s195 + $0xb] sm:$0x1]
      %v1169 = vld [vmem:[%s195 + $0xf] sm:$0x1]
      %v1170 = vld [vmem:[%s195 + $0x13] sm:$0x1]
      %v1171 = vld [vmem:[%s195 + $0x17] sm:$0x1]
      %v1172 = vld [vmem:[%s195 + $0x1b] sm:$0x1]
      %v1173 = vld [vmem:[%s195 + $0x1f] sm:$0x1]
      %v1174 = vpack.c.bf16 %v1166, %v1166
      %v1175 = vpack.c.bf16 %v1167, %v1167
      %v1176 = vpack.c.bf16 %v1168, %v1168
      %v1177 = vpack.c.bf16 %v1169, %v1169
      %v1178 = vpack.c.bf16 %v1170, %v1170
      %v1179 = vpack.c.bf16 %v1171, %v1171
      %v1180 = vpack.c.bf16 %v1172, %v1172
      %v1181 = vpack.c.bf16 %v1173, %v1173
      %v1182 = vld [vmem:[%s200 + $0x3] sm:$0x1]
      %v1183 = vld [vmem:[%s200 + $0x7] sm:$0x1]
      %v1184 = vld [vmem:[%s200 + $0xb] sm:$0x1]
      %v1185 = vld [vmem:[%s200 + $0xf] sm:$0x1]
      %v1186 = vld [vmem:[%s200 + $0x13] sm:$0x1]
      %v1187 = vld [vmem:[%s200 + $0x17] sm:$0x1]
      %v1188 = vld [vmem:[%s200 + $0x1b] sm:$0x1]
      %v1189 = vld [vmem:[%s200 + $0x1f] sm:$0x1]
      %v1190 = vpack.c.bf16 %v1182, %v1182
      %v1191 = vpack.c.bf16 %v1183, %v1183
      %v1192 = vpack.c.bf16 %v1184, %v1184
      %v1193 = vpack.c.bf16 %v1185, %v1185
      %v1194 = vpack.c.bf16 %v1186, %v1186
      %v1195 = vpack.c.bf16 %v1187, %v1187
      %v1196 = vpack.c.bf16 %v1188, %v1188
      %v1197 = vpack.c.bf16 %v1189, %v1189
      %v1198 = vld [vmem:[%s205 + $0x3] sm:$0x1]
      %v1199 = vld [vmem:[%s205 + $0x7] sm:$0x1]
      %v1200 = vld [vmem:[%s205 + $0xb] sm:$0x1]
      %v1201 = vld [vmem:[%s205 + $0xf] sm:$0x1]
      %v1202 = vld [vmem:[%s205 + $0x13] sm:$0x1]
      %v1203 = vld [vmem:[%s205 + $0x17] sm:$0x1]
      %v1204 = vld [vmem:[%s205 + $0x1b] sm:$0x1]
      %v1205 = vld [vmem:[%s205 + $0x1f] sm:$0x1]
      %v1206 = vpack.c.bf16 %v1198, %v1198
      %v1207 = vpack.c.bf16 %v1199, %v1199
      %v1208 = vpack.c.bf16 %v1200, %v1200
      %v1209 = vpack.c.bf16 %v1201, %v1201
      %v1210 = vpack.c.bf16 %v1202, %v1202
      %v1211 = vpack.c.bf16 %v1203, %v1203
      %v1212 = vpack.c.bf16 %v1204, %v1204
      %v1213 = vpack.c.bf16 %v1205, %v1205
      %v1222 = vunpack.c.l.b16 %v1174
      %v1223 = vunpack.c.l.b16 %v1175
      %v1224 = vunpack.c.l.b16 %v1176
      %v1225 = vunpack.c.l.b16 %v1177
      %v1226 = vunpack.c.l.b16 %v1178
      %v1227 = vunpack.c.l.b16 %v1179
      %v1228 = vunpack.c.l.b16 %v1180
      %v1229 = vunpack.c.l.b16 %v1181
      %v1230 = vrot.slane %v1223, 7
      %v1231 = vsel %vm282, %v1230, %v1222
      %v1232 = vrot.slane %v1224, 6
      %v1233 = vsel %vm285, %v1232, %v1231
      %v1234 = vrot.slane %v1225, 5
      %v1235 = vsel %vm288, %v1234, %v1233
      %v1236 = vrot.slane %v1226, 4
      %v1237 = vsel %vm291, %v1236, %v1235
      %v1238 = vrot.slane %v1227, 3
      %v1239 = vsel %vm294, %v1238, %v1237
      %v1240 = vrot.slane %v1228, 2
      %v1241 = vsel %vm297, %v1240, %v1239
      %v1242 = vrot.slane %v1229, 1
      %v1243 = vsel %vm300, %v1242, %v1241
      %v1244 = vpack.c.b16 %v1243, %v1243
      %v1253 = vunpack.c.l.b16 %v1190
      %v1254 = vunpack.c.l.b16 %v1191
      %v1255 = vunpack.c.l.b16 %v1192
      %v1256 = vunpack.c.l.b16 %v1193
      %v1257 = vunpack.c.l.b16 %v1194
      %v1258 = vunpack.c.l.b16 %v1195
      %v1259 = vunpack.c.l.b16 %v1196
      %v1260 = vunpack.c.l.b16 %v1197
      %v1261 = vrot.slane %v1254, 7
      %v1262 = vsel %vm282, %v1261, %v1253
      %v1263 = vrot.slane %v1255, 6
      %v1264 = vsel %vm285, %v1263, %v1262
      %v1265 = vrot.slane %v1256, 5
      %v1266 = vsel %vm288, %v1265, %v1264
      %v1267 = vrot.slane %v1257, 4
      %v1268 = vsel %vm291, %v1267, %v1266
      %v1269 = vrot.slane %v1258, 3
      %v1270 = vsel %vm294, %v1269, %v1268
      %v1271 = vrot.slane %v1259, 2
      %v1272 = vsel %vm297, %v1271, %v1270
      %v1273 = vrot.slane %v1260, 1
      %v1274 = vsel %vm300, %v1273, %v1272
      %v1275 = vpack.c.b16 %v1274, %v1274
      %v1277 = vsel %vm334, %v1244, 0
      %v1280 = vsel %vm334, %v1275, 0
      %1282 = vmatprep.subr.bf16.mxu0 0
      %1283 = vmatpush1.bf16.xpose.msra.mxu0 %v1280
      %1284 = vmatprep.subr.bf16.mxu0 0
      %1285 = vmatpush1.bf16.xpose.msra.mxu0 0
      %1286 = vmatprep.subr.bf16.mxu0 0
      %1287 = vmatpush1.bf16.xpose.msra.mxu0 0
      %1288 = vmatprep.subr.bf16.mxu0 0
      %1289 = vmatpush1.bf16.xpose.msra.mxu0 0
      %1290 = vmatprep.subr.bf16.mxu0 0
      %1291 = vmatpush1.bf16.xpose.msra.mxu0 0
      %1292 = vmatprep.subr.bf16.mxu0 0
      %1293 = vmatpush1.bf16.xpose.msra.mxu0 0
      %1294 = vmatprep.subr.bf16.mxu0 0
      %1295 = vmatpush1.bf16.xpose.msra.mxu0 0
      %1296 = vmatprep.subr.bf16.mxu0 0
      %1297 = vmatpush1.bf16.xpose.msra.mxu0 0
      %1298 = vmatprep.subr.bf16.mxu0 0
      %1299 = vmatpush1.bf16.xpose.msra.mxu0 0
      %1300 = vmatprep.subr.bf16.mxu0 0
      %1301 = vmatpush1.bf16.xpose.msra.mxu0 0
      %1302 = vmatprep.subr.bf16.mxu0 0
      %1303 = vmatpush1.bf16.xpose.msra.mxu0 0
      %1304 = vmatprep.subr.bf16.mxu0 0
      %1305 = vmatpush1.bf16.xpose.msra.mxu0 0
      %1306 = vmatprep.subr.bf16.mxu0 0
      %1307 = vmatpush1.bf16.xpose.msra.mxu0 0
      %1308 = vmatprep.subr.bf16.mxu0 0
      %1309 = vmatpush1.bf16.xpose.msra.mxu0 0
      %1310 = vmatprep.subr.bf16.mxu0 0
      %1311 = vmatpush1.bf16.xpose.msra.mxu0 0
      %1312 = vmatprep.subr.bf16.mxu0 0
      %1313 = vmatpush1.bf16.xpose.msra.mxu0 0
      %1314 = vmatprep.mubr.bf16.mxu0 0
      %1315 = vmatmul.mubr.bf16.gmra.mrb[0].mxu0 %v1277
      %v1316 = vpop.f32.mrb[0].mxu0
      %v1317 = vadd.f32 0.0, %v1316
      %v1318 = vpop.f32.mrb[0].mxu0
      %v1319 = vpop.f32.mrb[0].mxu0
      %v1320 = vpop.f32.mrb[0].mxu0
      %1321 = vdwg.mxu0
      %v1322 = vmul.f32 %v1317, 0.35355338
      %v1323 = vsel %vm216, %v1322, -1e+30
      %v1324 = vsel %vm334, %v1323, -inf
      %1325 = vmax.xlane.f32.xlu0 %v1324
      %v1326 = vpop.xlane.xlu0 %1325
      %v1327 = vsub.f32 %v1323, %v1326
      %v1328 = vmul.f32 %v1327, 1.442695
      %v1329 = vpow.pop %v1328
      %v1330 = vsel %vm334, %v1329, 0.0
      %1331 = vadd.xlane.f32.xlu0 %v1330
      %v1332 = vpop.xlane.xlu0 %1331
      %v1333 = vrcp.pop %v1332
      %v1334 = vmul.f32 %v1329, %v1333
      %v1335 = vpack.c.bf16 %v1334, %v1334
      %v1344 = vunpack.c.l.b16 %v1206
      %v1345 = vunpack.c.l.b16 %v1207
      %v1346 = vunpack.c.l.b16 %v1208
      %v1347 = vunpack.c.l.b16 %v1209
      %v1348 = vunpack.c.l.b16 %v1210
      %v1349 = vunpack.c.l.b16 %v1211
      %v1350 = vunpack.c.l.b16 %v1212
      %v1351 = vunpack.c.l.b16 %v1213
      %v1352 = vrot.slane %v1345, 7
      %v1353 = vsel %vm282, %v1352, %v1344
      %v1354 = vrot.slane %v1346, 6
      %v1355 = vsel %vm285, %v1354, %v1353
      %v1356 = vrot.slane %v1347, 5
      %v1357 = vsel %vm288, %v1356, %v1355
      %v1358 = vrot.slane %v1348, 4
      %v1359 = vsel %vm291, %v1358, %v1357
      %v1360 = vrot.slane %v1349, 3
      %v1361 = vsel %vm294, %v1360, %v1359
      %v1362 = vrot.slane %v1350, 2
      %v1363 = vsel %vm297, %v1362, %v1361
      %v1364 = vrot.slane %v1351, 1
      %v1365 = vsel %vm300, %v1364, %v1363
      %v1366 = vpack.c.b16 %v1365, %v1365
      %v1368 = vsel %vm334, %v1335, 0
      %v1371 = vsel %vm429, %v1366, 0
      %1373 = vmatprep.subr.bf16.mxu0 0
      %1374 = vmatpush1.bf16.msra.mxu0 %v1371
      %1375 = vmatprep.subr.bf16.mxu0 0
      %1376 = vmatpush1.bf16.msra.mxu0 0
      %1377 = vmatprep.subr.bf16.mxu0 0
      %1378 = vmatpush1.bf16.msra.mxu0 0
      %1379 = vmatprep.subr.bf16.mxu0 0
      %1380 = vmatpush1.bf16.msra.mxu0 0
      %1381 = vmatprep.subr.bf16.mxu0 0
      %1382 = vmatpush1.bf16.msra.mxu0 0
      %1383 = vmatprep.subr.bf16.mxu0 0
      %1384 = vmatpush1.bf16.msra.mxu0 0
      %1385 = vmatprep.subr.bf16.mxu0 0
      %1386 = vmatpush1.bf16.msra.mxu0 0
      %1387 = vmatprep.subr.bf16.mxu0 0
      %1388 = vmatpush1.bf16.msra.mxu0 0
      %1389 = vmatprep.subr.bf16.mxu0 0
      %1390 = vmatpush1.bf16.msra.mxu0 0
      %1391 = vmatprep.subr.bf16.mxu0 0
      %1392 = vmatpush1.bf16.msra.mxu0 0
      %1393 = vmatprep.subr.bf16.mxu0 0
      %1394 = vmatpush1.bf16.msra.mxu0 0
      %1395 = vmatprep.subr.bf16.mxu0 0
      %1396 = vmatpush1.bf16.msra.mxu0 0
      %1397 = vmatprep.subr.bf16.mxu0 0
      %1398 = vmatpush1.bf16.msra.mxu0 0
      %1399 = vmatprep.subr.bf16.mxu0 0
      %1400 = vmatpush1.bf16.msra.mxu0 0
      %1401 = vmatprep.subr.bf16.mxu0 0
      %1402 = vmatpush1.bf16.msra.mxu0 0
      %1403 = vmatprep.subr.bf16.mxu0 0
      %1404 = vmatpush1.bf16.msra.mxu0 0
      %1405 = vmatprep.mubr.bf16.mxu0 0
      %1406 = vmatmul.mubr.bf16.gmra.mrb[0].mxu0 %v1368
      %v1407 = vpop.f32.mrb[0].mxu0
      %v1408 = vadd.f32 0.0, %v1407
      %v1409 = vpop.f32.mrb[0].mxu0
      %v1410 = vpop.f32.mrb[0].mxu0
      %v1411 = vpop.f32.mrb[0].mxu0
      %1412 = vdwg.mxu0
      %v1414 = vcombine.high %v1408, %v1408
      %v1416 = vunpack.c.l.s4 1966171168
      %v1417 = vunpack.c.0.s8 %v1416
      %v1418 = vlaneseq
      %v1419 = vshrl.u32 %v1418, 7
      %v1420 = vsub.s32 %v1417, %v1419
      %v1421 = vrot.slane %v1408, %v1420
      %v1423 = vunpack.c.l.s4 1966171168
      %v1424 = vunpack.c.0.s8 %v1423
      %v1425 = vlaneseq
      %v1426 = vshrl.u32 %v1425, 7
      %v1427 = vsub.s32 %v1424, %v1426
      %v1428 = vrot.slane %v1414, %v1427
      %v1429 = vcombine.high %v1421, %v1421
      %v1430 = vcombine.high %v1428, %v1428
      %v1432 = vunpack.c.l.s4 1966171168
      %v1433 = vunpack.c.0.s8 %v1432
      %v1434 = vlaneseq
      %v1435 = vshrl.u32 %v1434, 7
      %v1436 = vsub.s32 %v1433, %v1435
      %v1437 = vrot.slane %v1421, %v1436
      %v1439 = vunpack.c.l.s4 1966171168
      %v1440 = vunpack.c.0.s8 %v1439
      %v1441 = vlaneseq
      %v1442 = vshrl.u32 %v1441, 7
      %v1443 = vsub.s32 %v1440, %v1442
      %v1444 = vrot.slane %v1428, %v1443
      %v1446 = vunpack.c.l.s4 1966171168
      %v1447 = vunpack.c.0.s8 %v1446
      %v1448 = vlaneseq
      %v1449 = vshrl.u32 %v1448, 7
      %v1450 = vsub.s32 %v1447, %v1449
      %v1451 = vrot.slane %v1429, %v1450
      %v1453 = vunpack.c.l.s4 1966171168
      %v1454 = vunpack.c.0.s8 %v1453
      %v1455 = vlaneseq
      %v1456 = vshrl.u32 %v1455, 7
      %v1457 = vsub.s32 %v1454, %v1456
      %v1458 = vrot.slane %v1430, %v1457
      %v1459 = vcombine.high %v1437, %v1437
      %v1460 = vcombine.high %v1444, %v1444
      %v1461 = vcombine.high %v1451, %v1451
      %v1462 = vcombine.high %v1458, %v1458
      %1471 = vst.msk [vmem:[%s210 + $0x3] sm:$0x1] %vm531, %v1437
      %1472 = vst.msk [vmem:[%s210 + $0x7] sm:$0x1] %vm531, %v1451
      %1473 = vst.msk [vmem:[%s210 + $0xb] sm:$0x1] %vm531, %v1459
      %1474 = vst.msk [vmem:[%s210 + $0xf] sm:$0x1] %vm531, %v1461
      %1475 = vst.msk [vmem:[%s210 + $0x13] sm:$0x1] %vm531, %v1444
      %1476 = vst.msk [vmem:[%s210 + $0x17] sm:$0x1] %vm531, %v1458
      %1477 = vst.msk [vmem:[%s210 + $0x1b] sm:$0x1] %vm531, %v1460
      %1478 = vst.msk [vmem:[%s210 + $0x1f] sm:$0x1] %vm531, %v1462
      %p1479 = scmp.lt.s32.totalorder %s14, 1
      %s1480 = scalar_select %p1479, %s14, 1
      %s1481 = smul.addr %s1480, 8
      %s1482 = smul.addr %s1481, 4
      %s1483 = scalar_lea.vmem %s3, %s1482
      // Predicated region
      $region33: #{decoder_forward.24} parent=31 // pred_check
        %p1484 = pneg %p110
      $region34: #{decoder_forward.24} parent=31 // pred_check_branch
        %1486 = sbr.rel (%p1484) target = $region36
      $region35: #{decoder_forward.24} parent=31 // pred_region
        _
      $region36: #{decoder_forward.24} parent=31 // pred_fallthru
        _
    $region32: #{decoder_forward.24} parent=5 // pred_fallthru
      _
    %p1487 = scmp.le.s32.totalorder 2, %s9
    // Predicated region
    $region37: #{decoder_forward.24} parent=5 // pred_check
      %p1488 = pneg %p1487
    $region38: #{decoder_forward.24} parent=5 // pred_check_branch
      %1490 = sbr.rel (%p1488) target = $region40
    $region39: #{decoder_forward.24} parent=5 // pred_region
      %s1491 = ssub.s32 %s9, 2
      // Predicated region
      $region41: #{decoder_forward.24} parent=39 // pred_check
        %p1492 = pneg %p116
      $region42: #{decoder_forward.24} parent=39 // pred_check_branch
        %1494 = sbr.rel (%p1492) target = $region44
      $region43: #{decoder_forward.24} parent=39 // pred_region
        %p1495 = scmp.lt.s32.totalorder %s15, 1
        %s1496 = scalar_select %p1495, %s15, 1
        %s1497 = smul.addr %s1496, 8
        %s1498 = smul.addr %s1497, 4
        %s1499 = scalar_lea.vmem %s3, %s1498
      $region44: #{decoder_forward.24} parent=39 // pred_fallthru
        _
    $region40: #{decoder_forward.24} parent=5 // pred_fallthru
      _
  $region6: #{decoder_forward.24} parent=0 // loop_footer
    %s13 = sadd.s32 1, %s9
  $region7: #{decoder_forward.24} parent=0 // loop_footer_branch
    %8 = sbr.rel target = $region3
  $region8: #{decoder_forward.24} parent=0 // loop_exit
    _

// kernel: decoder_forward.28
$region0: #{decoder_forward.28}
  #allocation0 [shape = 'u32[]', space=smem, size = 0x4, offset = 0x4, fixed_abs, tag = 'smem constant byte address 0x4 - core index']
  #allocation1 [shape = 'u32[144,128]{1,0:T(1,128)}', space=vmem, size = 0x12000, scoped, tag = 'internal scratch']
  %s0 = inlined_call_operand.vmem [shape: f32[2,8,4,8], index: 0, kind: input, shape index: {}]
  %s1 = inlined_call_operand.vmem [shape: f32[2,8,4,8], index: 1, kind: input, shape index: {}]
  %s2 = inlined_call_operand.vmem [shape: f32[2,8,4,8], index: 2, kind: input, shape index: {}]
  %s3 = inlined_call_operand.vmem [shape: f32[2,8,4,8], index: 3, kind: output, shape index: {}]
  %s4 = sld [smem:[#allocation0]]
  $region45: #{decoder_forward.28} parent=0
    _
  %s6 = ssub.s32 1, %s4
  %s7 = scalar_select 0, %s6, %s4
  loop: start=0, step=1, limit=4
  $region2: #{decoder_forward.28} parent=0 // loop_pre_header
    _
  $region3: #{decoder_forward.28} parent=0 // loop_header
    %s9 = sphi 0, %s13
    %p10 = scmp.ge.s32.totalorder %s9, 4
    %s19 = sphi 0, %s21
    %s22 = sphi 0, %s19
    %s23 = sphi 0, %s22
    %s39 = sphi 0, %s23
    %s45 = sphi 0, %s47
    %s48 = sphi 0, %s45
    %s49 = sphi 0, %s48
    %s65 = sphi 0, %s49
    %s71 = sphi 0, %s73
    %s74 = sphi 0, %s71
    %s75 = sphi 0, %s74
    %s91 = sphi 0, %s75
    %s97 = sphi 0, %s99
    %s100 = sphi 0, %s97
    %s101 = sphi 0, %s100
    %s117 = sphi 0, %s101
  $region4: #{decoder_forward.28} parent=0 // loop_header_branch
    %12 = sbr.rel (%p10) target = $region8
  $region5: #{decoder_forward.28} parent=0 // loop_body
    %s14 = ssub.s32 %s9, 1
    %s15 = ssub.s32 %s9, 2
    %s16 = sadd.s32 %s9, 1
    %s17 = ssub.s32 %s9, %s16
    %p18 = scmp.eq.s32.totalorder %s17, 0
    %s20 = sadd.s32 %s19, 1
    %s21 = scalar_select %p18, %s19, %s20
    %p24 = pneg %p18
    %p25 = scmp.eq.s32.totalorder %s9, 1
    %p26 = por %p24, %p25
    %p27 = scmp.ne.s32.totalorder %s19, %s22
    %p28 = scmp.eq.s32.totalorder %s9, 0
    %p29 = por %p27, %p28
    %p30 = scmp.ne.s32.totalorder %s19, %s22
    %p31 = scmp.eq.s32.totalorder %s14, 1
    %p32 = por %p30, %p31
    %p33 = scmp.ne.s32.totalorder %s22, %s23
    %p34 = scmp.eq.s32.totalorder %s14, 0
    %p35 = por %p33, %p34
    %p36 = scmp.ne.s32.totalorder %s22, %s23
    %p37 = scmp.eq.s32.totalorder %s15, 1
    %p38 = por %p36, %p37
    %p40 = scmp.ne.s32.totalorder %s23, %s39
    %p41 = scmp.eq.s32.totalorder %s15, 0
    %p42 = por %p40, %p41
    %s43 = ssub.s32 %s9, %s16
    %p44 = scmp.eq.s32.totalorder %s43, 0
    %s46 = sadd.s32 %s45, 1
    %s47 = scalar_select %p44, %s45, %s46
    %p50 = pneg %p44
    %p51 = scmp.eq.s32.totalorder %s9, 1
    %p52 = por %p50, %p51
    %p53 = scmp.ne.s32.totalorder %s45, %s48
    %p54 = scmp.eq.s32.totalorder %s9, 0
    %p55 = por %p53, %p54
    %p56 = scmp.ne.s32.totalorder %s45, %s48
    %p57 = scmp.eq.s32.totalorder %s14, 1
    %p58 = por %p56, %p57
    %p59 = scmp.ne.s32.totalorder %s48, %s49
    %p60 = scmp.eq.s32.totalorder %s14, 0
    %p61 = por %p59, %p60
    %p62 = scmp.ne.s32.totalorder %s48, %s49
    %p63 = scmp.eq.s32.totalorder %s15, 1
    %p64 = por %p62, %p63
    %p66 = scmp.ne.s32.totalorder %s49, %s65
    %p67 = scmp.eq.s32.totalorder %s15, 0
    %p68 = por %p66, %p67
    %s69 = ssub.s32 %s9, %s16
    %p70 = scmp.eq.s32.totalorder %s69, 0
    %s72 = sadd.s32 %s71, 1
    %s73 = scalar_select %p70, %s71, %s72
    %p76 = pneg %p70
    %p77 = scmp.eq.s32.totalorder %s9, 1
    %p78 = por %p76, %p77
    %p79 = scmp.ne.s32.totalorder %s71, %s74
    %p80 = scmp.eq.s32.totalorder %s9, 0
    %p81 = por %p79, %p80
    %p82 = scmp.ne.s32.totalorder %s71, %s74
    %p83 = scmp.eq.s32.totalorder %s14, 1
    %p84 = por %p82, %p83
    %p85 = scmp.ne.s32.totalorder %s74, %s75
    %p86 = scmp.eq.s32.totalorder %s14, 0
    %p87 = por %p85, %p86
    %p88 = scmp.ne.s32.totalorder %s74, %s75
    %p89 = scmp.eq.s32.totalorder %s15, 1
    %p90 = por %p88, %p89
    %p92 = scmp.ne.s32.totalorder %s75, %s91
    %p93 = scmp.eq.s32.totalorder %s15, 0
    %p94 = por %p92, %p93
    %s95 = ssub.s32 %s9, %s16
    %p96 = scmp.eq.s32.totalorder %s95, 0
    %s98 = sadd.s32 %s97, 1
    %s99 = scalar_select %p96, %s97, %s98
    %p102 = pneg %p96
    %p103 = scmp.eq.s32.totalorder %s9, 1
    %p104 = por %p102, %p103
    %p105 = scmp.ne.s32.totalorder %s97, %s100
    %p106 = scmp.eq.s32.totalorder %s9, 0
    %p107 = por %p105, %p106
    %p108 = scmp.ne.s32.totalorder %s97, %s100
    %p109 = scmp.eq.s32.totalorder %s14, 1
    %p110 = por %p108, %p109
    %p111 = scmp.ne.s32.totalorder %s100, %s101
    %p112 = scmp.eq.s32.totalorder %s14, 0
    %p113 = por %p111, %p112
    %p114 = scmp.ne.s32.totalorder %s100, %s101
    %p115 = scmp.eq.s32.totalorder %s15, 1
    %p116 = por %p114, %p115
    %p118 = scmp.ne.s32.totalorder %s101, %s117
    %p119 = scmp.eq.s32.totalorder %s15, 0
    %p120 = por %p118, %p119
    %p121 = scmp.le.s32.totalorder 1, %s9
    %p122 = scmp.lt.s32.totalorder %s9, 3
    %p123 = pnand %p121, %p122
    %p124 = pneg %p123
    // Predicated region
    $region9: #{decoder_forward.28} parent=5 // pred_check
      _
    $region10: #{decoder_forward.28} parent=5 // pred_check_branch
      %126 = sbr.rel (%p123) target = $region12
    $region11: #{decoder_forward.28} parent=5 // pred_region
      %s127 = ssub.s32 %s9, 1
    $region12: #{decoder_forward.28} parent=5 // pred_fallthru
      _
    %p128 = scmp.lt.s32.totalorder %s9, 2
    // Predicated region
    $region13: #{decoder_forward.28} parent=5 // pred_check
      %p129 = pneg %p128
    $region14: #{decoder_forward.28} parent=5 // pred_check_branch
      %131 = sbr.rel (%p129) target = $region16
    $region15: #{decoder_forward.28} parent=5 // pred_region
      // Predicated region
      $region17: #{decoder_forward.28} parent=15 // pred_check
        %p132 = pneg %p29
      $region18: #{decoder_forward.28} parent=15 // pred_check_branch
        %134 = sbr.rel (%p132) target = $region20
      $region19: #{decoder_forward.28} parent=15 // pred_region
        %p135 = scmp.lt.s32.totalorder %s9, 1
        %s136 = scalar_select %p135, %s9, 1
        %s137 = smul.addr %s136, 8
        %s138 = smul.addr %s137, 4
        %s139 = scalar_lea.vmem %s0, %s138
      $region20: #{decoder_forward.28} parent=15 // pred_fallthru
        _
      // Predicated region
      $region21: #{decoder_forward.28} parent=15 // pred_check
        %p140 = pneg %p55
      $region22: #{decoder_forward.28} parent=15 // pred_check_branch
        %142 = sbr.rel (%p140) target = $region24
      $region23: #{decoder_forward.28} parent=15 // pred_region
        %p143 = scmp.lt.s32.totalorder %s9, 1
        %s144 = scalar_select %p143, %s9, 1
        %s145 = smul.addr %s144, 8
        %s146 = smul.addr %s145, 4
        %s147 = scalar_lea.vmem %s1, %s146
      $region24: #{decoder_forward.28} parent=15 // pred_fallthru
        _
      // Predicated region
      $region25: #{decoder_forward.28} parent=15 // pred_check
        %p148 = pneg %p81
      $region26: #{decoder_forward.28} parent=15 // pred_check_branch
        %150 = sbr.rel (%p148) target = $region28
      $region27: #{decoder_forward.28} parent=15 // pred_region
        %p151 = scmp.lt.s32.totalorder %s9, 1
        %s152 = scalar_select %p151, %s9, 1
        %s153 = smul.addr %s152, 8
        %s154 = smul.addr %s153, 4
        %s155 = scalar_lea.vmem %s2, %s154
      $region28: #{decoder_forward.28} parent=15 // pred_fallthru
        _
    $region16: #{decoder_forward.28} parent=5 // pred_fallthru
      _
    %p156 = scmp.le.s32.totalorder 1, %s9
    %p157 = scmp.lt.s32.totalorder %s9, 3
    %p158 = pnand %p156, %p157
    %p159 = pneg %p158
    // Predicated region
    $region29: #{decoder_forward.28} parent=5 // pred_check
      _
    $region30: #{decoder_forward.28} parent=5 // pred_check_branch
      %161 = sbr.rel (%p158) target = $region32
    $region31: #{decoder_forward.28} parent=5 // pred_region
      %s162 = ssub.s32 %s9, 1
      %p163 = scmp.lt.s32.totalorder %s14, 1
      %s164 = scalar_select %p163, %s14, 1
      %s165 = smul.addr %s164, 8
      %s166 = smul.addr %s165, 4
      %s167 = scalar_lea.vmem %s0, %s166
      %p168 = pneg %p35
      %p169 = pneg %p32
      %p170 = scmp.lt.s32.totalorder %s14, 1
      %s171 = scalar_select %p170, %s14, 1
      %s172 = smul.addr %s171, 8
      %s173 = smul.addr %s172, 4
      %s174 = scalar_lea.vmem %s1, %s173
      %p175 = pneg %p61
      %p176 = pneg %p58
      %p177 = scmp.lt.s32.totalorder %s14, 1
      %s178 = scalar_select %p177, %s14, 1
      %s179 = smul.addr %s178, 8
      %s180 = smul.addr %s179, 4
      %s181 = scalar_lea.vmem %s2, %s180
      %p182 = pneg %p87
      %p183 = pneg %p84
      %p184 = pneg %p113
      %p185 = pneg %p110
      %p186 = scmp.lt.s32.totalorder %s14, 1
      %s187 = scalar_select %p186, %s14, 1
      %s188 = smul.addr %s187, 8
      %s189 = smul.addr %s188, 4
      %s190 = scalar_lea.vmem %s3, %s189
      %p191 = scmp.lt.s32.totalorder %s14, 1
      %s192 = scalar_select %p191, %s14, 1
      %s193 = smul.addr %s192, 8
      %s194 = smul.addr %s193, 4
      %s195 = scalar_lea.vmem %s0, %s194
      %p196 = scmp.lt.s32.totalorder %s14, 1
      %s197 = scalar_select %p196, %s14, 1
      %s198 = smul.addr %s197, 8
      %s199 = smul.addr %s198, 4
      %s200 = scalar_lea.vmem %s1, %s199
      %p201 = scmp.lt.s32.totalorder %s14, 1
      %s202 = scalar_select %p201, %s14, 1
      %s203 = smul.addr %s202, 8
      %s204 = smul.addr %s203, 4
      %s205 = scalar_lea.vmem %s2, %s204
      %p206 = scmp.lt.s32.totalorder %s14, 1
      %s207 = scalar_select %p206, %s14, 1
      %s208 = smul.addr %s207, 8
      %s209 = smul.addr %s208, 4
      %s210 = scalar_lea.vmem %s3, %s209
      %v212 = vld [vmem:[%s195] sm:$0x1]
      %v213 = vld [vmem:[%s195 + $0x4] sm:$0x1]
      %v214 = vld [vmem:[%s195 + $0x8] sm:$0x1]
      %v215 = vld [vmem:[%s195 + $0xc] sm:$0x1]
      %v216 = vld [vmem:[%s195 + $0x10] sm:$0x1]
      %v217 = vld [vmem:[%s195 + $0x14] sm:$0x1]
      %v218 = vld [vmem:[%s195 + $0x18] sm:$0x1]
      %v219 = vld [vmem:[%s195 + $0x1c] sm:$0x1]
      %v220 = vpack.c.bf16 %v212, %v212
      %v221 = vpack.c.bf16 %v213, %v213
      %v222 = vpack.c.bf16 %v214, %v214
      %v223 = vpack.c.bf16 %v215, %v215
      %v224 = vpack.c.bf16 %v216, %v216
      %v225 = vpack.c.bf16 %v217, %v217
      %v226 = vpack.c.bf16 %v218, %v218
      %v227 = vpack.c.bf16 %v219, %v219
      %v228 = vld [vmem:[%s200] sm:$0x1]
      %v229 = vld [vmem:[%s200 + $0x4] sm:$0x1]
      %v230 = vld [vmem:[%s200 + $0x8] sm:$0x1]
      %v231 = vld [vmem:[%s200 + $0xc] sm:$0x1]
      %v232 = vld [vmem:[%s200 + $0x10] sm:$0x1]
      %v233 = vld [vmem:[%s200 + $0x14] sm:$0x1]
      %v234 = vld [vmem:[%s200 + $0x18] sm:$0x1]
      %v235 = vld [vmem:[%s200 + $0x1c] sm:$0x1]
      %v236 = vpack.c.bf16 %v228, %v228
      %v237 = vpack.c.bf16 %v229, %v229
      %v238 = vpack.c.bf16 %v230, %v230
      %v239 = vpack.c.bf16 %v231, %v231
      %v240 = vpack.c.bf16 %v232, %v232
      %v241 = vpack.c.bf16 %v233, %v233
      %v242 = vpack.c.bf16 %v234, %v234
      %v243 = vpack.c.bf16 %v235, %v235
      %v244 = vld [vmem:[%s205] sm:$0x1]
      %v245 = vld [vmem:[%s205 + $0x4] sm:$0x1]
      %v246 = vld [vmem:[%s205 + $0x8] sm:$0x1]
      %v247 = vld [vmem:[%s205 + $0xc] sm:$0x1]
      %v248 = vld [vmem:[%s205 + $0x10] sm:$0x1]
      %v249 = vld [vmem:[%s205 + $0x14] sm:$0x1]
      %v250 = vld [vmem:[%s205 + $0x18] sm:$0x1]
      %v251 = vld [vmem:[%s205 + $0x1c] sm:$0x1]
      %v252 = vpack.c.bf16 %v244, %v244
      %v253 = vpack.c.bf16 %v245, %v245
      %v254 = vpack.c.bf16 %v246, %v246
      %v255 = vpack.c.bf16 %v247, %v247
      %v256 = vpack.c.bf16 %v248, %v248
      %v257 = vpack.c.bf16 %v249, %v249
      %v258 = vpack.c.bf16 %v250, %v250
      %v259 = vpack.c.bf16 %v251, %v251
      %v268 = vunpack.c.l.b16 %v220
      %v269 = vunpack.c.l.b16 %v221
      %v270 = vunpack.c.l.b16 %v222
      %v271 = vunpack.c.l.b16 %v223
      %v272 = vunpack.c.l.b16 %v224
      %v273 = vunpack.c.l.b16 %v225
      %v274 = vunpack.c.l.b16 %v226
      %v275 = vunpack.c.l.b16 %v227
      %v276 = vrot.slane %v269, 7
      %vm277 = vcmask 1041409
      %v278 = vsel %vm277, %v276, %v268
      %v279 = vrot.slane %v270, 6
      %vm280 = vcmask 1042434
      %v281 = vsel %vm280, %v279, %v278
      %v282 = vrot.slane %v271, 5
      %vm283 = vcmask 1043459
      %v284 = vsel %vm283, %v282, %v281
      %v285 = vrot.slane %v272, 4
      %vm286 = vcmask 1044484
      %v287 = vsel %vm286, %v285, %v284
      %v288 = vrot.slane %v273, 3
      %vm289 = vcmask 1045509
      %v290 = vsel %vm289, %v288, %v287
      %v291 = vrot.slane %v274, 2
      %vm292 = vcmask 1046534
      %v293 = vsel %vm292, %v291, %v290
      %v294 = vrot.slane %v275, 1
      %vm295 = vcmask 1047559
      %v296 = vsel %vm295, %v294, %v293
      %v297 = vpack.c.b16 %v296, %v296
      %v306 = vunpack.c.l.b16 %v236
      %v307 = vunpack.c.l.b16 %v237
      %v308 = vunpack.c.l.b16 %v238
      %v309 = vunpack.c.l.b16 %v239
      %v310 = vunpack.c.l.b16 %v240
      %v311 = vunpack.c.l.b16 %v241
      %v312 = vunpack.c.l.b16 %v242
      %v313 = vunpack.c.l.b16 %v243
      %v314 = vrot.slane %v307, 7
      %v315 = vsel %vm277, %v314, %v306
      %v316 = vrot.slane %v308, 6
      %v317 = vsel %vm280, %v316, %v315
      %v318 = vrot.slane %v309, 5
      %v319 = vsel %vm283, %v318, %v317
      %v320 = vrot.slane %v310, 4
      %v321 = vsel %vm286, %v320, %v319
      %v322 = vrot.slane %v311, 3
      %v323 = vsel %vm289, %v322, %v321
      %v324 = vrot.slane %v312, 2
      %v325 = vsel %vm292, %v324, %v323
      %v326 = vrot.slane %v313, 1
      %v327 = vsel %vm295, %v326, %v325
      %v328 = vpack.c.b16 %v327, %v327
      %vm329 = vcmask 64512
      %v331 = vsel %vm329, %v297, 0
      %v334 = vsel %vm329, %v328, 0
      %336 = vmatprep.subr.bf16.mxu0 0
      %337 = vmatpush1.bf16.xpose.msra.mxu0 %v334
      %338 = vmatprep.subr.bf16.mxu0 0
      %339 = vmatpush1.bf16.xpose.msra.mxu0 0
      %340 = vmatprep.subr.bf16.mxu0 0
      %341 = vmatpush1.bf16.xpose.msra.mxu0 0
      %342 = vmatprep.subr.bf16.mxu0 0
      %343 = vmatpush1.bf16.xpose.msra.mxu0 0
      %344 = vmatprep.subr.bf16.mxu0 0
      %345 = vmatpush1.bf16.xpose.msra.mxu0 0
      %346 = vmatprep.subr.bf16.mxu0 0
      %347 = vmatpush1.bf16.xpose.msra.mxu0 0
      %348 = vmatprep.subr.bf16.mxu0 0
      %349 = vmatpush1.bf16.xpose.msra.mxu0 0
      %350 = vmatprep.subr.bf16.mxu0 0
      %351 = vmatpush1.bf16.xpose.msra.mxu0 0
      %352 = vmatprep.subr.bf16.mxu0 0
      %353 = vmatpush1.bf16.xpose.msra.mxu0 0
      %354 = vmatprep.subr.bf16.mxu0 0
      %355 = vmatpush1.bf16.xpose.msra.mxu0 0
      %356 = vmatprep.subr.bf16.mxu0 0
      %357 = vmatpush1.bf16.xpose.msra.mxu0 0
      %358 = vmatprep.subr.bf16.mxu0 0
      %359 = vmatpush1.bf16.xpose.msra.mxu0 0
      %360 = vmatprep.subr.bf16.mxu0 0
      %361 = vmatpush1.bf16.xpose.msra.mxu0 0
      %362 = vmatprep.subr.bf16.mxu0 0
      %363 = vmatpush1.bf16.xpose.msra.mxu0 0
      %364 = vmatprep.subr.bf16.mxu0 0
      %365 = vmatpush1.bf16.xpose.msra.mxu0 0
      %366 = vmatprep.subr.bf16.mxu0 0
      %367 = vmatpush1.bf16.xpose.msra.mxu0 0
      %368 = vmatprep.mubr.bf16.mxu0 0
      %369 = vmatmul.mubr.bf16.gmra.mrb[0].mxu0 %v331
      %v370 = vpop.f32.mrb[0].mxu0
      %v371 = vadd.f32 0.0, %v370
      %v372 = vpop.f32.mrb[0].mxu0
      %v373 = vpop.f32.mrb[0].mxu0
      %v374 = vpop.f32.mrb[0].mxu0
      %375 = vdwg.mxu0
      %v376 = vmul.f32 %v371, 0.35355338
      %v377 = vsel %vm329, %v376, -inf
      %378 = vmax.xlane.f32.xlu0 %v377
      %v379 = vpop.xlane.xlu0 %378
      %v380 = vsub.f32 %v376, %v379
      %v381 = vmul.f32 %v380, 1.442695
      %v382 = vpow.pop %v381
      %v383 = vsel %vm329, %v382, 0.0
      %384 = vadd.xlane.f32.xlu0 %v383
      %v385 = vpop.xlane.xlu0 %384
      %v386 = vrcp.pop %v385
      %v387 = vmul.f32 %v382, %v386
      %v388 = vpack.c.bf16 %v387, %v387
      %v397 = vunpack.c.l.b16 %v252
      %v398 = vunpack.c.l.b16 %v253
      %v399 = vunpack.c.l.b16 %v254
      %v400 = vunpack.c.l.b16 %v255
      %v401 = vunpack.c.l.b16 %v256
      %v402 = vunpack.c.l.b16 %v257
      %v403 = vunpack.c.l.b16 %v258
      %v404 = vunpack.c.l.b16 %v259
      %v405 = vrot.slane %v398, 7
      %v406 = vsel %vm277, %v405, %v397
      %v407 = vrot.slane %v399, 6
      %v408 = vsel %vm280, %v407, %v406
      %v409 = vrot.slane %v400, 5
      %v410 = vsel %vm283, %v409, %v408
      %v411 = vrot.slane %v401, 4
      %v412 = vsel %vm286, %v411, %v410
      %v413 = vrot.slane %v402, 3
      %v414 = vsel %vm289, %v413, %v412
      %v415 = vrot.slane %v403, 2
      %v416 = vsel %vm292, %v415, %v414
      %v417 = vrot.slane %v404, 1
      %v418 = vsel %vm295, %v417, %v416
      %v419 = vpack.c.b16 %v418, %v418
      %v421 = vsel %vm329, %v388, 0
      %vm423 = vcmask 1043456
      %v425 = vsel %vm423, %v419, 0
      %427 = vmatprep.subr.bf16.mxu0 0
      %428 = vmatpush1.bf16.msra.mxu0 %v425
      %429 = vmatprep.subr.bf16.mxu0 0
      %430 = vmatpush1.bf16.msra.mxu0 0
      %431 = vmatprep.subr.bf16.mxu0 0
      %432 = vmatpush1.bf16.msra.mxu0 0
      %433 = vmatprep.subr.bf16.mxu0 0
      %434 = vmatpush1.bf16.msra.mxu0 0
      %435 = vmatprep.subr.bf16.mxu0 0
      %436 = vmatpush1.bf16.msra.mxu0 0
      %437 = vmatprep.subr.bf16.mxu0 0
      %438 = vmatpush1.bf16.msra.mxu0 0
      %439 = vmatprep.subr.bf16.mxu0 0
      %440 = vmatpush1.bf16.msra.mxu0 0
      %441 = vmatprep.subr.bf16.mxu0 0
      %442 = vmatpush1.bf16.msra.mxu0 0
      %443 = vmatprep.subr.bf16.mxu0 0
      %444 = vmatpush1.bf16.msra.mxu0 0
      %445 = vmatprep.subr.bf16.mxu0 0
      %446 = vmatpush1.bf16.msra.mxu0 0
      %447 = vmatprep.subr.bf16.mxu0 0
      %448 = vmatpush1.bf16.msra.mxu0 0
      %449 = vmatprep.subr.bf16.mxu0 0
      %450 = vmatpush1.bf16.msra.mxu0 0
      %451 = vmatprep.subr.bf16.mxu0 0
      %452 = vmatpush1.bf16.msra.mxu0 0
      %453 = vmatprep.subr.bf16.mxu0 0
      %454 = vmatpush1.bf16.msra.mxu0 0
      %455 = vmatprep.subr.bf16.mxu0 0
      %456 = vmatpush1.bf16.msra.mxu0 0
      %457 = vmatprep.subr.bf16.mxu0 0
      %458 = vmatpush1.bf16.msra.mxu0 0
      %459 = vmatprep.mubr.bf16.mxu0 0
      %460 = vmatmul.mubr.bf16.gmra.mrb[0].mxu0 %v421
      %v461 = vpop.f32.mrb[0].mxu0
      %v462 = vadd.f32 0.0, %v461
      %v463 = vpop.f32.mrb[0].mxu0
      %v464 = vpop.f32.mrb[0].mxu0
      %v465 = vpop.f32.mrb[0].mxu0
      %466 = vdwg.mxu0
      %v468 = vcombine.high %v462, %v462
      %v470 = vunpack.c.l.s4 1966171168
      %v471 = vunpack.c.0.s8 %v470
      %v472 = vlaneseq
      %v473 = vshrl.u32 %v472, 7
      %v474 = vsub.s32 %v471, %v473
      %v475 = vrot.slane %v462, %v474
      %v477 = vunpack.c.l.s4 1966171168
      %v478 = vunpack.c.0.s8 %v477
      %v479 = vlaneseq
      %v480 = vshrl.u32 %v479, 7
      %v481 = vsub.s32 %v478, %v480
      %v482 = vrot.slane %v468, %v481
      %v483 = vcombine.high %v475, %v475
      %v484 = vcombine.high %v482, %v482
      %v486 = vunpack.c.l.s4 1966171168
      %v487 = vunpack.c.0.s8 %v486
      %v488 = vlaneseq
      %v489 = vshrl.u32 %v488, 7
      %v490 = vsub.s32 %v487, %v489
      %v491 = vrot.slane %v475, %v490
      %v493 = vunpack.c.l.s4 1966171168
      %v494 = vunpack.c.0.s8 %v493
      %v495 = vlaneseq
      %v496 = vshrl.u32 %v495, 7
      %v497 = vsub.s32 %v494, %v496
      %v498 = vrot.slane %v482, %v497
      %v500 = vunpack.c.l.s4 1966171168
      %v501 = vunpack.c.0.s8 %v500
      %v502 = vlaneseq
      %v503 = vshrl.u32 %v502, 7
      %v504 = vsub.s32 %v501, %v503
      %v505 = vrot.slane %v483, %v504
      %v507 = vunpack.c.l.s4 1966171168
      %v508 = vunpack.c.0.s8 %v507
      %v509 = vlaneseq
      %v510 = vshrl.u32 %v509, 7
      %v511 = vsub.s32 %v508, %v510
      %v512 = vrot.slane %v484, %v511
      %v513 = vcombine.high %v491, %v491
      %v514 = vcombine.high %v498, %v498
      %v515 = vcombine.high %v505, %v505
      %v516 = vcombine.high %v512, %v512
      %vm525 = vcmask 57344
      %526 = vst.msk [vmem:[%s210] sm:$0x1] %vm525, %v491
      %527 = vst.msk [vmem:[%s210 + $0x4] sm:$0x1] %vm525, %v505
      %528 = vst.msk [vmem:[%s210 + $0x8] sm:$0x1] %vm525, %v513
      %529 = vst.msk [vmem:[%s210 + $0xc] sm:$0x1] %vm525, %v515
      %530 = vst.msk [vmem:[%s210 + $0x10] sm:$0x1] %vm525, %v498
      %531 = vst.msk [vmem:[%s210 + $0x14] sm:$0x1] %vm525, %v512
      %532 = vst.msk [vmem:[%s210 + $0x18] sm:$0x1] %vm525, %v514
      %533 = vst.msk [vmem:[%s210 + $0x1c] sm:$0x1] %vm525, %v516
      %v534 = vld [vmem:[%s195 + $0x1] sm:$0x1]
      %v535 = vld [vmem:[%s195 + $0x5] sm:$0x1]
      %v536 = vld [vmem:[%s195 + $0x9] sm:$0x1]
      %v537 = vld [vmem:[%s195 + $0xd] sm:$0x1]
      %v538 = vld [vmem:[%s195 + $0x11] sm:$0x1]
      %v539 = vld [vmem:[%s195 + $0x15] sm:$0x1]
      %v540 = vld [vmem:[%s195 + $0x19] sm:$0x1]
      %v541 = vld [vmem:[%s195 + $0x1d] sm:$0x1]
      %v542 = vpack.c.bf16 %v534, %v534
      %v543 = vpack.c.bf16 %v535, %v535
      %v544 = vpack.c.bf16 %v536, %v536
      %v545 = vpack.c.bf16 %v537, %v537
      %v546 = vpack.c.bf16 %v538, %v538
      %v547 = vpack.c.bf16 %v539, %v539
      %v548 = vpack.c.bf16 %v540, %v540
      %v549 = vpack.c.bf16 %v541, %v541
      %v550 = vld [vmem:[%s200 + $0x1] sm:$0x1]
      %v551 = vld [vmem:[%s200 + $0x5] sm:$0x1]
      %v552 = vld [vmem:[%s200 + $0x9] sm:$0x1]
      %v553 = vld [vmem:[%s200 + $0xd] sm:$0x1]
      %v554 = vld [vmem:[%s200 + $0x11] sm:$0x1]
      %v555 = vld [vmem:[%s200 + $0x15] sm:$0x1]
      %v556 = vld [vmem:[%s200 + $0x19] sm:$0x1]
      %v557 = vld [vmem:[%s200 + $0x1d] sm:$0x1]
      %v558 = vpack.c.bf16 %v550, %v550
      %v559 = vpack.c.bf16 %v551, %v551
      %v560 = vpack.c.bf16 %v552, %v552
      %v561 = vpack.c.bf16 %v553, %v553
      %v562 = vpack.c.bf16 %v554, %v554
      %v563 = vpack.c.bf16 %v555, %v555
      %v564 = vpack.c.bf16 %v556, %v556
      %v565 = vpack.c.bf16 %v557, %v557
      %v566 = vld [vmem:[%s205 + $0x1] sm:$0x1]
      %v567 = vld [vmem:[%s205 + $0x5] sm:$0x1]
      %v568 = vld [vmem:[%s205 + $0x9] sm:$0x1]
      %v569 = vld [vmem:[%s205 + $0xd] sm:$0x1]
      %v570 = vld [vmem:[%s205 + $0x11] sm:$0x1]
      %v571 = vld [vmem:[%s205 + $0x15] sm:$0x1]
      %v572 = vld [vmem:[%s205 + $0x19] sm:$0x1]
      %v573 = vld [vmem:[%s205 + $0x1d] sm:$0x1]
      %v574 = vpack.c.bf16 %v566, %v566
      %v575 = vpack.c.bf16 %v567, %v567
      %v576 = vpack.c.bf16 %v568, %v568
      %v577 = vpack.c.bf16 %v569, %v569
      %v578 = vpack.c.bf16 %v570, %v570
      %v579 = vpack.c.bf16 %v571, %v571
      %v580 = vpack.c.bf16 %v572, %v572
      %v581 = vpack.c.bf16 %v573, %v573
      %v590 = vunpack.c.l.b16 %v542
      %v591 = vunpack.c.l.b16 %v543
      %v592 = vunpack.c.l.b16 %v544
      %v593 = vunpack.c.l.b16 %v545
      %v594 = vunpack.c.l.b16 %v546
      %v595 = vunpack.c.l.b16 %v547
      %v596 = vunpack.c.l.b16 %v548
      %v597 = vunpack.c.l.b16 %v549
      %v598 = vrot.slane %v591, 7
      %v599 = vsel %vm277, %v598, %v590
      %v600 = vrot.slane %v592, 6
      %v601 = vsel %vm280, %v600, %v599
      %v602 = vrot.slane %v593, 5
      %v603 = vsel %vm283, %v602, %v601
      %v604 = vrot.slane %v594, 4
      %v605 = vsel %vm286, %v604, %v603
      %v606 = vrot.slane %v595, 3
      %v607 = vsel %vm289, %v606, %v605
      %v608 = vrot.slane %v596, 2
      %v609 = vsel %vm292, %v608, %v607
      %v610 = vrot.slane %v597, 1
      %v611 = vsel %vm295, %v610, %v609
      %v612 = vpack.c.b16 %v611, %v611
      %v621 = vunpack.c.l.b16 %v558
      %v622 = vunpack.c.l.b16 %v559
      %v623 = vunpack.c.l.b16 %v560
      %v624 = vunpack.c.l.b16 %v561
      %v625 = vunpack.c.l.b16 %v562
      %v626 = vunpack.c.l.b16 %v563
      %v627 = vunpack.c.l.b16 %v564
      %v628 = vunpack.c.l.b16 %v565
      %v629 = vrot.slane %v622, 7
      %v630 = vsel %vm277, %v629, %v621
      %v631 = vrot.slane %v623, 6
      %v632 = vsel %vm280, %v631, %v630
      %v633 = vrot.slane %v624, 5
      %v634 = vsel %vm283, %v633, %v632
      %v635 = vrot.slane %v625, 4
      %v636 = vsel %vm286, %v635, %v634
      %v637 = vrot.slane %v626, 3
      %v638 = vsel %vm289, %v637, %v636
      %v639 = vrot.slane %v627, 2
      %v640 = vsel %vm292, %v639, %v638
      %v641 = vrot.slane %v628, 1
      %v642 = vsel %vm295, %v641, %v640
      %v643 = vpack.c.b16 %v642, %v642
      %v645 = vsel %vm329, %v612, 0
      %v648 = vsel %vm329, %v643, 0
      %650 = vmatprep.subr.bf16.mxu0 0
      %651 = vmatpush1.bf16.xpose.msra.mxu0 %v648
      %652 = vmatprep.subr.bf16.mxu0 0
      %653 = vmatpush1.bf16.xpose.msra.mxu0 0
      %654 = vmatprep.subr.bf16.mxu0 0
      %655 = vmatpush1.bf16.xpose.msra.mxu0 0
      %656 = vmatprep.subr.bf16.mxu0 0
      %657 = vmatpush1.bf16.xpose.msra.mxu0 0
      %658 = vmatprep.subr.bf16.mxu0 0
      %659 = vmatpush1.bf16.xpose.msra.mxu0 0
      %660 = vmatprep.subr.bf16.mxu0 0
      %661 = vmatpush1.bf16.xpose.msra.mxu0 0
      %662 = vmatprep.subr.bf16.mxu0 0
      %663 = vmatpush1.bf16.xpose.msra.mxu0 0
      %664 = vmatprep.subr.bf16.mxu0 0
      %665 = vmatpush1.bf16.xpose.msra.mxu0 0
      %666 = vmatprep.subr.bf16.mxu0 0
      %667 = vmatpush1.bf16.xpose.msra.mxu0 0
      %668 = vmatprep.subr.bf16.mxu0 0
      %669 = vmatpush1.bf16.xpose.msra.mxu0 0
      %670 = vmatprep.subr.bf16.mxu0 0
      %671 = vmatpush1.bf16.xpose.msra.mxu0 0
      %672 = vmatprep.subr.bf16.mxu0 0
      %673 = vmatpush1.bf16.xpose.msra.mxu0 0
      %674 = vmatprep.subr.bf16.mxu0 0
      %675 = vmatpush1.bf16.xpose.msra.mxu0 0
      %676 = vmatprep.subr.bf16.mxu0 0
      %677 = vmatpush1.bf16.xpose.msra.mxu0 0
      %678 = vmatprep.subr.bf16.mxu0 0
      %679 = vmatpush1.bf16.xpose.msra.mxu0 0
      %680 = vmatprep.subr.bf16.mxu0 0
      %681 = vmatpush1.bf16.xpose.msra.mxu0 0
      %682 = vmatprep.mubr.bf16.mxu0 0
      %683 = vmatmul.mubr.bf16.gmra.mrb[0].mxu0 %v645
      %v684 = vpop.f32.mrb[0].mxu0
      %v685 = vadd.f32 0.0, %v684
      %v686 = vpop.f32.mrb[0].mxu0
      %v687 = vpop.f32.mrb[0].mxu0
      %v688 = vpop.f32.mrb[0].mxu0
      %689 = vdwg.mxu0
      %v690 = vmul.f32 %v685, 0.35355338
      %v691 = vsel %vm329, %v690, -inf
      %692 = vmax.xlane.f32.xlu0 %v691
      %v693 = vpop.xlane.xlu0 %692
      %v694 = vsub.f32 %v690, %v693
      %v695 = vmul.f32 %v694, 1.442695
      %v696 = vpow.pop %v695
      %v697 = vsel %vm329, %v696, 0.0
      %698 = vadd.xlane.f32.xlu0 %v697
      %v699 = vpop.xlane.xlu0 %698
      %v700 = vrcp.pop %v699
      %v701 = vmul.f32 %v696, %v700
      %v702 = vpack.c.bf16 %v701, %v701
      %v711 = vunpack.c.l.b16 %v574
      %v712 = vunpack.c.l.b16 %v575
      %v713 = vunpack.c.l.b16 %v576
      %v714 = vunpack.c.l.b16 %v577
      %v715 = vunpack.c.l.b16 %v578
      %v716 = vunpack.c.l.b16 %v579
      %v717 = vunpack.c.l.b16 %v580
      %v718 = vunpack.c.l.b16 %v581
      %v719 = vrot.slane %v712, 7
      %v720 = vsel %vm277, %v719, %v711
      %v721 = vrot.slane %v713, 6
      %v722 = vsel %vm280, %v721, %v720
      %v723 = vrot.slane %v714, 5
      %v724 = vsel %vm283, %v723, %v722
      %v725 = vrot.slane %v715, 4
      %v726 = vsel %vm286, %v725, %v724
      %v727 = vrot.slane %v716, 3
      %v728 = vsel %vm289, %v727, %v726
      %v729 = vrot.slane %v717, 2
      %v730 = vsel %vm292, %v729, %v728
      %v731 = vrot.slane %v718, 1
      %v732 = vsel %vm295, %v731, %v730
      %v733 = vpack.c.b16 %v732, %v732
      %v735 = vsel %vm329, %v702, 0
      %v738 = vsel %vm423, %v733, 0
      %740 = vmatprep.subr.bf16.mxu0 0
      %741 = vmatpush1.bf16.msra.mxu0 %v738
      %742 = vmatprep.subr.bf16.mxu0 0
      %743 = vmatpush1.bf16.msra.mxu0 0
      %744 = vmatprep.subr.bf16.mxu0 0
      %745 = vmatpush1.bf16.msra.mxu0 0
      %746 = vmatprep.subr.bf16.mxu0 0
      %747 = vmatpush1.bf16.msra.mxu0 0
      %748 = vmatprep.subr.bf16.mxu0 0
      %749 = vmatpush1.bf16.msra.mxu0 0
      %750 = vmatprep.subr.bf16.mxu0 0
      %751 = vmatpush1.bf16.msra.mxu0 0
      %752 = vmatprep.subr.bf16.mxu0 0
      %753 = vmatpush1.bf16.msra.mxu0 0
      %754 = vmatprep.subr.bf16.mxu0 0
      %755 = vmatpush1.bf16.msra.mxu0 0
      %756 = vmatprep.subr.bf16.mxu0 0
      %757 = vmatpush1.bf16.msra.mxu0 0
      %758 = vmatprep.subr.bf16.mxu0 0
      %759 = vmatpush1.bf16.msra.mxu0 0
      %760 = vmatprep.subr.bf16.mxu0 0
      %761 = vmatpush1.bf16.msra.mxu0 0
      %762 = vmatprep.subr.bf16.mxu0 0
      %763 = vmatpush1.bf16.msra.mxu0 0
      %764 = vmatprep.subr.bf16.mxu0 0
      %765 = vmatpush1.bf16.msra.mxu0 0
      %766 = vmatprep.subr.bf16.mxu0 0
      %767 = vmatpush1.bf16.msra.mxu0 0
      %768 = vmatprep.subr.bf16.mxu0 0
      %769 = vmatpush1.bf16.msra.mxu0 0
      %770 = vmatprep.subr.bf16.mxu0 0
      %771 = vmatpush1.bf16.msra.mxu0 0
      %772 = vmatprep.mubr.bf16.mxu0 0
      %773 = vmatmul.mubr.bf16.gmra.mrb[0].mxu0 %v735
      %v774 = vpop.f32.mrb[0].mxu0
      %v775 = vadd.f32 0.0, %v774
      %v776 = vpop.f32.mrb[0].mxu0
      %v777 = vpop.f32.mrb[0].mxu0
      %v778 = vpop.f32.mrb[0].mxu0
      %779 = vdwg.mxu0
      %v781 = vcombine.high %v775, %v775
      %v783 = vunpack.c.l.s4 1966171168
      %v784 = vunpack.c.0.s8 %v783
      %v785 = vlaneseq
      %v786 = vshrl.u32 %v785, 7
      %v787 = vsub.s32 %v784, %v786
      %v788 = vrot.slane %v775, %v787
      %v790 = vunpack.c.l.s4 1966171168
      %v791 = vunpack.c.0.s8 %v790
      %v792 = vlaneseq
      %v793 = vshrl.u32 %v792, 7
      %v794 = vsub.s32 %v791, %v793
      %v795 = vrot.slane %v781, %v794
      %v796 = vcombine.high %v788, %v788
      %v797 = vcombine.high %v795, %v795
      %v799 = vunpack.c.l.s4 1966171168
      %v800 = vunpack.c.0.s8 %v799
      %v801 = vlaneseq
      %v802 = vshrl.u32 %v801, 7
      %v803 = vsub.s32 %v800, %v802
      %v804 = vrot.slane %v788, %v803
      %v806 = vunpack.c.l.s4 1966171168
      %v807 = vunpack.c.0.s8 %v806
      %v808 = vlaneseq
      %v809 = vshrl.u32 %v808, 7
      %v810 = vsub.s32 %v807, %v809
      %v811 = vrot.slane %v795, %v810
      %v813 = vunpack.c.l.s4 1966171168
      %v814 = vunpack.c.0.s8 %v813
      %v815 = vlaneseq
      %v816 = vshrl.u32 %v815, 7
      %v817 = vsub.s32 %v814, %v816
      %v818 = vrot.slane %v796, %v817
      %v820 = vunpack.c.l.s4 1966171168
      %v821 = vunpack.c.0.s8 %v820
      %v822 = vlaneseq
      %v823 = vshrl.u32 %v822, 7
      %v824 = vsub.s32 %v821, %v823
      %v825 = vrot.slane %v797, %v824
      %v826 = vcombine.high %v804, %v804
      %v827 = vcombine.high %v811, %v811
      %v828 = vcombine.high %v818, %v818
      %v829 = vcombine.high %v825, %v825
      %838 = vst.msk [vmem:[%s210 + $0x1] sm:$0x1] %vm525, %v804
      %839 = vst.msk [vmem:[%s210 + $0x5] sm:$0x1] %vm525, %v818
      %840 = vst.msk [vmem:[%s210 + $0x9] sm:$0x1] %vm525, %v826
      %841 = vst.msk [vmem:[%s210 + $0xd] sm:$0x1] %vm525, %v828
      %842 = vst.msk [vmem:[%s210 + $0x11] sm:$0x1] %vm525, %v811
      %843 = vst.msk [vmem:[%s210 + $0x15] sm:$0x1] %vm525, %v825
      %844 = vst.msk [vmem:[%s210 + $0x19] sm:$0x1] %vm525, %v827
      %845 = vst.msk [vmem:[%s210 + $0x1d] sm:$0x1] %vm525, %v829
      %v846 = vld [vmem:[%s195 + $0x2] sm:$0x1]
      %v847 = vld [vmem:[%s195 + $0x6] sm:$0x1]
      %v848 = vld [vmem:[%s195 + $0xa] sm:$0x1]
      %v849 = vld [vmem:[%s195 + $0xe] sm:$0x1]
      %v850 = vld [vmem:[%s195 + $0x12] sm:$0x1]
      %v851 = vld [vmem:[%s195 + $0x16] sm:$0x1]
      %v852 = vld [vmem:[%s195 + $0x1a] sm:$0x1]
      %v853 = vld [vmem:[%s195 + $0x1e] sm:$0x1]
      %v854 = vpack.c.bf16 %v846, %v846
      %v855 = vpack.c.bf16 %v847, %v847
      %v856 = vpack.c.bf16 %v848, %v848
      %v857 = vpack.c.bf16 %v849, %v849
      %v858 = vpack.c.bf16 %v850, %v850
      %v859 = vpack.c.bf16 %v851, %v851
      %v860 = vpack.c.bf16 %v852, %v852
      %v861 = vpack.c.bf16 %v853, %v853
      %v862 = vld [vmem:[%s200 + $0x2] sm:$0x1]
      %v863 = vld [vmem:[%s200 + $0x6] sm:$0x1]
      %v864 = vld [vmem:[%s200 + $0xa] sm:$0x1]
      %v865 = vld [vmem:[%s200 + $0xe] sm:$0x1]
      %v866 = vld [vmem:[%s200 + $0x12] sm:$0x1]
      %v867 = vld [vmem:[%s200 + $0x16] sm:$0x1]
      %v868 = vld [vmem:[%s200 + $0x1a] sm:$0x1]
      %v869 = vld [vmem:[%s200 + $0x1e] sm:$0x1]
      %v870 = vpack.c.bf16 %v862, %v862
      %v871 = vpack.c.bf16 %v863, %v863
      %v872 = vpack.c.bf16 %v864, %v864
      %v873 = vpack.c.bf16 %v865, %v865
      %v874 = vpack.c.bf16 %v866, %v866
      %v875 = vpack.c.bf16 %v867, %v867
      %v876 = vpack.c.bf16 %v868, %v868
      %v877 = vpack.c.bf16 %v869, %v869
      %v878 = vld [vmem:[%s205 + $0x2] sm:$0x1]
      %v879 = vld [vmem:[%s205 + $0x6] sm:$0x1]
      %v880 = vld [vmem:[%s205 + $0xa] sm:$0x1]
      %v881 = vld [vmem:[%s205 + $0xe] sm:$0x1]
      %v882 = vld [vmem:[%s205 + $0x12] sm:$0x1]
      %v883 = vld [vmem:[%s205 + $0x16] sm:$0x1]
      %v884 = vld [vmem:[%s205 + $0x1a] sm:$0x1]
      %v885 = vld [vmem:[%s205 + $0x1e] sm:$0x1]
      %v886 = vpack.c.bf16 %v878, %v878
      %v887 = vpack.c.bf16 %v879, %v879
      %v888 = vpack.c.bf16 %v880, %v880
      %v889 = vpack.c.bf16 %v881, %v881
      %v890 = vpack.c.bf16 %v882, %v882
      %v891 = vpack.c.bf16 %v883, %v883
      %v892 = vpack.c.bf16 %v884, %v884
      %v893 = vpack.c.bf16 %v885, %v885
      %v902 = vunpack.c.l.b16 %v854
      %v903 = vunpack.c.l.b16 %v855
      %v904 = vunpack.c.l.b16 %v856
      %v905 = vunpack.c.l.b16 %v857
      %v906 = vunpack.c.l.b16 %v858
      %v907 = vunpack.c.l.b16 %v859
      %v908 = vunpack.c.l.b16 %v860
      %v909 = vunpack.c.l.b16 %v861
      %v910 = vrot.slane %v903, 7
      %v911 = vsel %vm277, %v910, %v902
      %v912 = vrot.slane %v904, 6
      %v913 = vsel %vm280, %v912, %v911
      %v914 = vrot.slane %v905, 5
      %v915 = vsel %vm283, %v914, %v913
      %v916 = vrot.slane %v906, 4
      %v917 = vsel %vm286, %v916, %v915
      %v918 = vrot.slane %v907, 3
      %v919 = vsel %vm289, %v918, %v917
      %v920 = vrot.slane %v908, 2
      %v921 = vsel %vm292, %v920, %v919
      %v922 = vrot.slane %v909, 1
      %v923 = vsel %vm295, %v922, %v921
      %v924 = vpack.c.b16 %v923, %v923
      %v933 = vunpack.c.l.b16 %v870
      %v934 = vunpack.c.l.b16 %v871
      %v935 = vunpack.c.l.b16 %v872
      %v936 = vunpack.c.l.b16 %v873
      %v937 = vunpack.c.l.b16 %v874
      %v938 = vunpack.c.l.b16 %v875
      %v939 = vunpack.c.l.b16 %v876
      %v940 = vunpack.c.l.b16 %v877
      %v941 = vrot.slane %v934, 7
      %v942 = vsel %vm277, %v941, %v933
      %v943 = vrot.slane %v935, 6
      %v944 = vsel %vm280, %v943, %v942
      %v945 = vrot.slane %v936, 5
      %v946 = vsel %vm283, %v945, %v944
      %v947 = vrot.slane %v937, 4
      %v948 = vsel %vm286, %v947, %v946
      %v949 = vrot.slane %v938, 3
      %v950 = vsel %vm289, %v949, %v948
      %v951 = vrot.slane %v939, 2
      %v952 = vsel %vm292, %v951, %v950
      %v953 = vrot.slane %v940, 1
      %v954 = vsel %vm295, %v953, %v952
      %v955 = vpack.c.b16 %v954, %v954
      %v957 = vsel %vm329, %v924, 0
      %v960 = vsel %vm329, %v955, 0
      %962 = vmatprep.subr.bf16.mxu0 0
      %963 = vmatpush1.bf16.xpose.msra.mxu0 %v960
      %964 = vmatprep.subr.bf16.mxu0 0
      %965 = vmatpush1.bf16.xpose.msra.mxu0 0
      %966 = vmatprep.subr.bf16.mxu0 0
      %967 = vmatpush1.bf16.xpose.msra.mxu0 0
      %968 = vmatprep.subr.bf16.mxu0 0
      %969 = vmatpush1.bf16.xpose.msra.mxu0 0
      %970 = vmatprep.subr.bf16.mxu0 0
      %971 = vmatpush1.bf16.xpose.msra.mxu0 0
      %972 = vmatprep.subr.bf16.mxu0 0
      %973 = vmatpush1.bf16.xpose.msra.mxu0 0
      %974 = vmatprep.subr.bf16.mxu0 0
      %975 = vmatpush1.bf16.xpose.msra.mxu0 0
      %976 = vmatprep.subr.bf16.mxu0 0
      %977 = vmatpush1.bf16.xpose.msra.mxu0 0
      %978 = vmatprep.subr.bf16.mxu0 0
      %979 = vmatpush1.bf16.xpose.msra.mxu0 0
      %980 = vmatprep.subr.bf16.mxu0 0
      %981 = vmatpush1.bf16.xpose.msra.mxu0 0
      %982 = vmatprep.subr.bf16.mxu0 0
      %983 = vmatpush1.bf16.xpose.msra.mxu0 0
      %984 = vmatprep.subr.bf16.mxu0 0
      %985 = vmatpush1.bf16.xpose.msra.mxu0 0
      %986 = vmatprep.subr.bf16.mxu0 0
      %987 = vmatpush1.bf16.xpose.msra.mxu0 0
      %988 = vmatprep.subr.bf16.mxu0 0
      %989 = vmatpush1.bf16.xpose.msra.mxu0 0
      %990 = vmatprep.subr.bf16.mxu0 0
      %991 = vmatpush1.bf16.xpose.msra.mxu0 0
      %992 = vmatprep.subr.bf16.mxu0 0
      %993 = vmatpush1.bf16.xpose.msra.mxu0 0
      %994 = vmatprep.mubr.bf16.mxu0 0
      %995 = vmatmul.mubr.bf16.gmra.mrb[0].mxu0 %v957
      %v996 = vpop.f32.mrb[0].mxu0
      %v997 = vadd.f32 0.0, %v996
      %v998 = vpop.f32.mrb[0].mxu0
      %v999 = vpop.f32.mrb[0].mxu0
      %v1000 = vpop.f32.mrb[0].mxu0
      %1001 = vdwg.mxu0
      %v1002 = vmul.f32 %v997, 0.35355338
      %v1003 = vsel %vm329, %v1002, -inf
      %1004 = vmax.xlane.f32.xlu0 %v1003
      %v1005 = vpop.xlane.xlu0 %1004
      %v1006 = vsub.f32 %v1002, %v1005
      %v1007 = vmul.f32 %v1006, 1.442695
      %v1008 = vpow.pop %v1007
      %v1009 = vsel %vm329, %v1008, 0.0
      %1010 = vadd.xlane.f32.xlu0 %v1009
      %v1011 = vpop.xlane.xlu0 %1010
      %v1012 = vrcp.pop %v1011
      %v1013 = vmul.f32 %v1008, %v1012
      %v1014 = vpack.c.bf16 %v1013, %v1013
      %v1023 = vunpack.c.l.b16 %v886
      %v1024 = vunpack.c.l.b16 %v887
      %v1025 = vunpack.c.l.b16 %v888
      %v1026 = vunpack.c.l.b16 %v889
      %v1027 = vunpack.c.l.b16 %v890
      %v1028 = vunpack.c.l.b16 %v891
      %v1029 = vunpack.c.l.b16 %v892
      %v1030 = vunpack.c.l.b16 %v893
      %v1031 = vrot.slane %v1024, 7
      %v1032 = vsel %vm277, %v1031, %v1023
      %v1033 = vrot.slane %v1025, 6
      %v1034 = vsel %vm280, %v1033, %v1032
      %v1035 = vrot.slane %v1026, 5
      %v1036 = vsel %vm283, %v1035, %v1034
      %v1037 = vrot.slane %v1027, 4
      %v1038 = vsel %vm286, %v1037, %v1036
      %v1039 = vrot.slane %v1028, 3
      %v1040 = vsel %vm289, %v1039, %v1038
      %v1041 = vrot.slane %v1029, 2
      %v1042 = vsel %vm292, %v1041, %v1040
      %v1043 = vrot.slane %v1030, 1
      %v1044 = vsel %vm295, %v1043, %v1042
      %v1045 = vpack.c.b16 %v1044, %v1044
      %v1047 = vsel %vm329, %v1014, 0
      %v1050 = vsel %vm423, %v1045, 0
      %1052 = vmatprep.subr.bf16.mxu0 0
      %1053 = vmatpush1.bf16.msra.mxu0 %v1050
      %1054 = vmatprep.subr.bf16.mxu0 0
      %1055 = vmatpush1.bf16.msra.mxu0 0
      %1056 = vmatprep.subr.bf16.mxu0 0
      %1057 = vmatpush1.bf16.msra.mxu0 0
      %1058 = vmatprep.subr.bf16.mxu0 0
      %1059 = vmatpush1.bf16.msra.mxu0 0
      %1060 = vmatprep.subr.bf16.mxu0 0
      %1061 = vmatpush1.bf16.msra.mxu0 0
      %1062 = vmatprep.subr.bf16.mxu0 0
      %1063 = vmatpush1.bf16.msra.mxu0 0
      %1064 = vmatprep.subr.bf16.mxu0 0
      %1065 = vmatpush1.bf16.msra.mxu0 0
      %1066 = vmatprep.subr.bf16.mxu0 0
      %1067 = vmatpush1.bf16.msra.mxu0 0
      %1068 = vmatprep.subr.bf16.mxu0 0
      %1069 = vmatpush1.bf16.msra.mxu0 0
      %1070 = vmatprep.subr.bf16.mxu0 0
      %1071 = vmatpush1.bf16.msra.mxu0 0
      %1072 = vmatprep.subr.bf16.mxu0 0
      %1073 = vmatpush1.bf16.msra.mxu0 0
      %1074 = vmatprep.subr.bf16.mxu0 0
      %1075 = vmatpush1.bf16.msra.mxu0 0
      %1076 = vmatprep.subr.bf16.mxu0 0
      %1077 = vmatpush1.bf16.msra.mxu0 0
      %1078 = vmatprep.subr.bf16.mxu0 0
      %1079 = vmatpush1.bf16.msra.mxu0 0
      %1080 = vmatprep.subr.bf16.mxu0 0
      %1081 = vmatpush1.bf16.msra.mxu0 0
      %1082 = vmatprep.subr.bf16.mxu0 0
      %1083 = vmatpush1.bf16.msra.mxu0 0
      %1084 = vmatprep.mubr.bf16.mxu0 0
      %1085 = vmatmul.mubr.bf16.gmra.mrb[0].mxu0 %v1047
      %v1086 = vpop.f32.mrb[0].mxu0
      %v1087 = vadd.f32 0.0, %v1086
      %v1088 = vpop.f32.mrb[0].mxu0
      %v1089 = vpop.f32.mrb[0].mxu0
      %v1090 = vpop.f32.mrb[0].mxu0
      %1091 = vdwg.mxu0
      %v1093 = vcombine.high %v1087, %v1087
      %v1095 = vunpack.c.l.s4 1966171168
      %v1096 = vunpack.c.0.s8 %v1095
      %v1097 = vlaneseq
      %v1098 = vshrl.u32 %v1097, 7
      %v1099 = vsub.s32 %v1096, %v1098
      %v1100 = vrot.slane %v1087, %v1099
      %v1102 = vunpack.c.l.s4 1966171168
      %v1103 = vunpack.c.0.s8 %v1102
      %v1104 = vlaneseq
      %v1105 = vshrl.u32 %v1104, 7
      %v1106 = vsub.s32 %v1103, %v1105
      %v1107 = vrot.slane %v1093, %v1106
      %v1108 = vcombine.high %v1100, %v1100
      %v1109 = vcombine.high %v1107, %v1107
      %v1111 = vunpack.c.l.s4 1966171168
      %v1112 = vunpack.c.0.s8 %v1111
      %v1113 = vlaneseq
      %v1114 = vshrl.u32 %v1113, 7
      %v1115 = vsub.s32 %v1112, %v1114
      %v1116 = vrot.slane %v1100, %v1115
      %v1118 = vunpack.c.l.s4 1966171168
      %v1119 = vunpack.c.0.s8 %v1118
      %v1120 = vlaneseq
      %v1121 = vshrl.u32 %v1120, 7
      %v1122 = vsub.s32 %v1119, %v1121
      %v1123 = vrot.slane %v1107, %v1122
      %v1125 = vunpack.c.l.s4 1966171168
      %v1126 = vunpack.c.0.s8 %v1125
      %v1127 = vlaneseq
      %v1128 = vshrl.u32 %v1127, 7
      %v1129 = vsub.s32 %v1126, %v1128
      %v1130 = vrot.slane %v1108, %v1129
      %v1132 = vunpack.c.l.s4 1966171168
      %v1133 = vunpack.c.0.s8 %v1132
      %v1134 = vlaneseq
      %v1135 = vshrl.u32 %v1134, 7
      %v1136 = vsub.s32 %v1133, %v1135
      %v1137 = vrot.slane %v1109, %v1136
      %v1138 = vcombine.high %v1116, %v1116
      %v1139 = vcombine.high %v1123, %v1123
      %v1140 = vcombine.high %v1130, %v1130
      %v1141 = vcombine.high %v1137, %v1137
      %1150 = vst.msk [vmem:[%s210 + $0x2] sm:$0x1] %vm525, %v1116
      %1151 = vst.msk [vmem:[%s210 + $0x6] sm:$0x1] %vm525, %v1130
      %1152 = vst.msk [vmem:[%s210 + $0xa] sm:$0x1] %vm525, %v1138
      %1153 = vst.msk [vmem:[%s210 + $0xe] sm:$0x1] %vm525, %v1140
      %1154 = vst.msk [vmem:[%s210 + $0x12] sm:$0x1] %vm525, %v1123
      %1155 = vst.msk [vmem:[%s210 + $0x16] sm:$0x1] %vm525, %v1137
      %1156 = vst.msk [vmem:[%s210 + $0x1a] sm:$0x1] %vm525, %v1139
      %1157 = vst.msk [vmem:[%s210 + $0x1e] sm:$0x1] %vm525, %v1141
      %v1158 = vld [vmem:[%s195 + $0x3] sm:$0x1]
      %v1159 = vld [vmem:[%s195 + $0x7] sm:$0x1]
      %v1160 = vld [vmem:[%s195 + $0xb] sm:$0x1]
      %v1161 = vld [vmem:[%s195 + $0xf] sm:$0x1]
      %v1162 = vld [vmem:[%s195 + $0x13] sm:$0x1]
      %v1163 = vld [vmem:[%s195 + $0x17] sm:$0x1]
      %v1164 = vld [vmem:[%s195 + $0x1b] sm:$0x1]
      %v1165 = vld [vmem:[%s195 + $0x1f] sm:$0x1]
      %v1166 = vpack.c.bf16 %v1158, %v1158
      %v1167 = vpack.c.bf16 %v1159, %v1159
      %v1168 = vpack.c.bf16 %v1160, %v1160
      %v1169 = vpack.c.bf16 %v1161, %v1161
      %v1170 = vpack.c.bf16 %v1162, %v1162
      %v1171 = vpack.c.bf16 %v1163, %v1163
      %v1172 = vpack.c.bf16 %v1164, %v1164
      %v1173 = vpack.c.bf16 %v1165, %v1165
      %v1174 = vld [vmem:[%s200 + $0x3] sm:$0x1]
      %v1175 = vld [vmem:[%s200 + $0x7] sm:$0x1]
      %v1176 = vld [vmem:[%s200 + $0xb] sm:$0x1]
      %v1177 = vld [vmem:[%s200 + $0xf] sm:$0x1]
      %v1178 = vld [vmem:[%s200 + $0x13] sm:$0x1]
      %v1179 = vld [vmem:[%s200 + $0x17] sm:$0x1]
      %v1180 = vld [vmem:[%s200 + $0x1b] sm:$0x1]
      %v1181 = vld [vmem:[%s200 + $0x1f] sm:$0x1]
      %v1182 = vpack.c.bf16 %v1174, %v1174
      %v1183 = vpack.c.bf16 %v1175, %v1175
      %v1184 = vpack.c.bf16 %v1176, %v1176
      %v1185 = vpack.c.bf16 %v1177, %v1177
      %v1186 = vpack.c.bf16 %v1178, %v1178
      %v1187 = vpack.c.bf16 %v1179, %v1179
      %v1188 = vpack.c.bf16 %v1180, %v1180
      %v1189 = vpack.c.bf16 %v1181, %v1181
      %v1190 = vld [vmem:[%s205 + $0x3] sm:$0x1]
      %v1191 = vld [vmem:[%s205 + $0x7] sm:$0x1]
      %v1192 = vld [vmem:[%s205 + $0xb] sm:$0x1]
      %v1193 = vld [vmem:[%s205 + $0xf] sm:$0x1]
      %v1194 = vld [vmem:[%s205 + $0x13] sm:$0x1]
      %v1195 = vld [vmem:[%s205 + $0x17] sm:$0x1]
      %v1196 = vld [vmem:[%s205 + $0x1b] sm:$0x1]
      %v1197 = vld [vmem:[%s205 + $0x1f] sm:$0x1]
      %v1198 = vpack.c.bf16 %v1190, %v1190
      %v1199 = vpack.c.bf16 %v1191, %v1191
      %v1200 = vpack.c.bf16 %v1192, %v1192
      %v1201 = vpack.c.bf16 %v1193, %v1193
      %v1202 = vpack.c.bf16 %v1194, %v1194
      %v1203 = vpack.c.bf16 %v1195, %v1195
      %v1204 = vpack.c.bf16 %v1196, %v1196
      %v1205 = vpack.c.bf16 %v1197, %v1197
      %v1214 = vunpack.c.l.b16 %v1166
      %v1215 = vunpack.c.l.b16 %v1167
      %v1216 = vunpack.c.l.b16 %v1168
      %v1217 = vunpack.c.l.b16 %v1169
      %v1218 = vunpack.c.l.b16 %v1170
      %v1219 = vunpack.c.l.b16 %v1171
      %v1220 = vunpack.c.l.b16 %v1172
      %v1221 = vunpack.c.l.b16 %v1173
      %v1222 = vrot.slane %v1215, 7
      %v1223 = vsel %vm277, %v1222, %v1214
      %v1224 = vrot.slane %v1216, 6
      %v1225 = vsel %vm280, %v1224, %v1223
      %v1226 = vrot.slane %v1217, 5
      %v1227 = vsel %vm283, %v1226, %v1225
      %v1228 = vrot.slane %v1218, 4
      %v1229 = vsel %vm286, %v1228, %v1227
      %v1230 = vrot.slane %v1219, 3
      %v1231 = vsel %vm289, %v1230, %v1229
      %v1232 = vrot.slane %v1220, 2
      %v1233 = vsel %vm292, %v1232, %v1231
      %v1234 = vrot.slane %v1221, 1
      %v1235 = vsel %vm295, %v1234, %v1233
      %v1236 = vpack.c.b16 %v1235, %v1235
      %v1245 = vunpack.c.l.b16 %v1182
      %v1246 = vunpack.c.l.b16 %v1183
      %v1247 = vunpack.c.l.b16 %v1184
      %v1248 = vunpack.c.l.b16 %v1185
      %v1249 = vunpack.c.l.b16 %v1186
      %v1250 = vunpack.c.l.b16 %v1187
      %v1251 = vunpack.c.l.b16 %v1188
      %v1252 = vunpack.c.l.b16 %v1189
      %v1253 = vrot.slane %v1246, 7
      %v1254 = vsel %vm277, %v1253, %v1245
      %v1255 = vrot.slane %v1247, 6
      %v1256 = vsel %vm280, %v1255, %v1254
      %v1257 = vrot.slane %v1248, 5
      %v1258 = vsel %vm283, %v1257, %v1256
      %v1259 = vrot.slane %v1249, 4
      %v1260 = vsel %vm286, %v1259, %v1258
      %v1261 = vrot.slane %v1250, 3
      %v1262 = vsel %vm289, %v1261, %v1260
      %v1263 = vrot.slane %v1251, 2
      %v1264 = vsel %vm292, %v1263, %v1262
      %v1265 = vrot.slane %v1252, 1
      %v1266 = vsel %vm295, %v1265, %v1264
      %v1267 = vpack.c.b16 %v1266, %v1266
      %v1269 = vsel %vm329, %v1236, 0
      %v1272 = vsel %vm329, %v1267, 0
      %1274 = vmatprep.subr.bf16.mxu0 0
      %1275 = vmatpush1.bf16.xpose.msra.mxu0 %v1272
      %1276 = vmatprep.subr.bf16.mxu0 0
      %1277 = vmatpush1.bf16.xpose.msra.mxu0 0
      %1278 = vmatprep.subr.bf16.mxu0 0
      %1279 = vmatpush1.bf16.xpose.msra.mxu0 0
      %1280 = vmatprep.subr.bf16.mxu0 0
      %1281 = vmatpush1.bf16.xpose.msra.mxu0 0
      %1282 = vmatprep.subr.bf16.mxu0 0
      %1283 = vmatpush1.bf16.xpose.msra.mxu0 0
      %1284 = vmatprep.subr.bf16.mxu0 0
      %1285 = vmatpush1.bf16.xpose.msra.mxu0 0
      %1286 = vmatprep.subr.bf16.mxu0 0
      %1287 = vmatpush1.bf16.xpose.msra.mxu0 0
      %1288 = vmatprep.subr.bf16.mxu0 0
      %1289 = vmatpush1.bf16.xpose.msra.mxu0 0
      %1290 = vmatprep.subr.bf16.mxu0 0
      %1291 = vmatpush1.bf16.xpose.msra.mxu0 0
      %1292 = vmatprep.subr.bf16.mxu0 0
      %1293 = vmatpush1.bf16.xpose.msra.mxu0 0
      %1294 = vmatprep.subr.bf16.mxu0 0
      %1295 = vmatpush1.bf16.xpose.msra.mxu0 0
      %1296 = vmatprep.subr.bf16.mxu0 0
      %1297 = vmatpush1.bf16.xpose.msra.mxu0 0
      %1298 = vmatprep.subr.bf16.mxu0 0
      %1299 = vmatpush1.bf16.xpose.msra.mxu0 0
      %1300 = vmatprep.subr.bf16.mxu0 0
      %1301 = vmatpush1.bf16.xpose.msra.mxu0 0
      %1302 = vmatprep.subr.bf16.mxu0 0
      %1303 = vmatpush1.bf16.xpose.msra.mxu0 0
      %1304 = vmatprep.subr.bf16.mxu0 0
      %1305 = vmatpush1.bf16.xpose.msra.mxu0 0
      %1306 = vmatprep.mubr.bf16.mxu0 0
      %1307 = vmatmul.mubr.bf16.gmra.mrb[0].mxu0 %v1269
      %v1308 = vpop.f32.mrb[0].mxu0
      %v1309 = vadd.f32 0.0, %v1308
      %v1310 = vpop.f32.mrb[0].mxu0
      %v1311 = vpop.f32.mrb[0].mxu0
      %v1312 = vpop.f32.mrb[0].mxu0
      %1313 = vdwg.mxu0
      %v1314 = vmul.f32 %v1309, 0.35355338
      %v1315 = vsel %vm329, %v1314, -inf
      %1316 = vmax.xlane.f32.xlu0 %v1315
      %v1317 = vpop.xlane.xlu0 %1316
      %v1318 = vsub.f32 %v1314, %v1317
      %v1319 = vmul.f32 %v1318, 1.442695
      %v1320 = vpow.pop %v1319
      %v1321 = vsel %vm329, %v1320, 0.0
      %1322 = vadd.xlane.f32.xlu0 %v1321
      %v1323 = vpop.xlane.xlu0 %1322
      %v1324 = vrcp.pop %v1323
      %v1325 = vmul.f32 %v1320, %v1324
      %v1326 = vpack.c.bf16 %v1325, %v1325
      %v1335 = vunpack.c.l.b16 %v1198
      %v1336 = vunpack.c.l.b16 %v1199
      %v1337 = vunpack.c.l.b16 %v1200
      %v1338 = vunpack.c.l.b16 %v1201
      %v1339 = vunpack.c.l.b16 %v1202
      %v1340 = vunpack.c.l.b16 %v1203
      %v1341 = vunpack.c.l.b16 %v1204
      %v1342 = vunpack.c.l.b16 %v1205
      %v1343 = vrot.slane %v1336, 7
      %v1344 = vsel %vm277, %v1343, %v1335
      %v1345 = vrot.slane %v1337, 6
      %v1346 = vsel %vm280, %v1345, %v1344
      %v1347 = vrot.slane %v1338, 5
      %v1348 = vsel %vm283, %v1347, %v1346
      %v1349 = vrot.slane %v1339, 4
      %v1350 = vsel %vm286, %v1349, %v1348
      %v1351 = vrot.slane %v1340, 3
      %v1352 = vsel %vm289, %v1351, %v1350
      %v1353 = vrot.slane %v1341, 2
      %v1354 = vsel %vm292, %v1353, %v1352
      %v1355 = vrot.slane %v1342, 1
      %v1356 = vsel %vm295, %v1355, %v1354
      %v1357 = vpack.c.b16 %v1356, %v1356
      %v1359 = vsel %vm329, %v1326, 0
      %v1362 = vsel %vm423, %v1357, 0
      %1364 = vmatprep.subr.bf16.mxu0 0
      %1365 = vmatpush1.bf16.msra.mxu0 %v1362
      %1366 = vmatprep.subr.bf16.mxu0 0
      %1367 = vmatpush1.bf16.msra.mxu0 0
      %1368 = vmatprep.subr.bf16.mxu0 0
      %1369 = vmatpush1.bf16.msra.mxu0 0
      %1370 = vmatprep.subr.bf16.mxu0 0
      %1371 = vmatpush1.bf16.msra.mxu0 0
      %1372 = vmatprep.subr.bf16.mxu0 0
      %1373 = vmatpush1.bf16.msra.mxu0 0
      %1374 = vmatprep.subr.bf16.mxu0 0
      %1375 = vmatpush1.bf16.msra.mxu0 0
      %1376 = vmatprep.subr.bf16.mxu0 0
      %1377 = vmatpush1.bf16.msra.mxu0 0
      %1378 = vmatprep.subr.bf16.mxu0 0
      %1379 = vmatpush1.bf16.msra.mxu0 0
      %1380 = vmatprep.subr.bf16.mxu0 0
      %1381 = vmatpush1.bf16.msra.mxu0 0
      %1382 = vmatprep.subr.bf16.mxu0 0
      %1383 = vmatpush1.bf16.msra.mxu0 0
      %1384 = vmatprep.subr.bf16.mxu0 0
      %1385 = vmatpush1.bf16.msra.mxu0 0
      %1386 = vmatprep.subr.bf16.mxu0 0
      %1387 = vmatpush1.bf16.msra.mxu0 0
      %1388 = vmatprep.subr.bf16.mxu0 0
      %1389 = vmatpush1.bf16.msra.mxu0 0
      %1390 = vmatprep.subr.bf16.mxu0 0
      %1391 = vmatpush1.bf16.msra.mxu0 0
      %1392 = vmatprep.subr.bf16.mxu0 0
      %1393 = vmatpush1.bf16.msra.mxu0 0
      %1394 = vmatprep.subr.bf16.mxu0 0
      %1395 = vmatpush1.bf16.msra.mxu0 0
      %1396 = vmatprep.mubr.bf16.mxu0 0
      %1397 = vmatmul.mubr.bf16.gmra.mrb[0].mxu0 %v1359
      %v1398 = vpop.f32.mrb[0].mxu0
      %v1399 = vadd.f32 0.0, %v1398
      %v1400 = vpop.f32.mrb[0].mxu0
      %v1401 = vpop.f32.mrb[0].mxu0
      %v1402 = vpop.f32.mrb[0].mxu0
      %1403 = vdwg.mxu0
      %v1405 = vcombine.high %v1399, %v1399
      %v1407 = vunpack.c.l.s4 1966171168
      %v1408 = vunpack.c.0.s8 %v1407
      %v1409 = vlaneseq
      %v1410 = vshrl.u32 %v1409, 7
      %v1411 = vsub.s32 %v1408, %v1410
      %v1412 = vrot.slane %v1399, %v1411
      %v1414 = vunpack.c.l.s4 1966171168
      %v1415 = vunpack.c.0.s8 %v1414
      %v1416 = vlaneseq
      %v1417 = vshrl.u32 %v1416, 7
      %v1418 = vsub.s32 %v1415, %v1417
      %v1419 = vrot.slane %v1405, %v1418
      %v1420 = vcombine.high %v1412, %v1412
      %v1421 = vcombine.high %v1419, %v1419
      %v1423 = vunpack.c.l.s4 1966171168
      %v1424 = vunpack.c.0.s8 %v1423
      %v1425 = vlaneseq
      %v1426 = vshrl.u32 %v1425, 7
      %v1427 = vsub.s32 %v1424, %v1426
      %v1428 = vrot.slane %v1412, %v1427
      %v1430 = vunpack.c.l.s4 1966171168
      %v1431 = vunpack.c.0.s8 %v1430
      %v1432 = vlaneseq
      %v1433 = vshrl.u32 %v1432, 7
      %v1434 = vsub.s32 %v1431, %v1433
      %v1435 = vrot.slane %v1419, %v1434
      %v1437 = vunpack.c.l.s4 1966171168
      %v1438 = vunpack.c.0.s8 %v1437
      %v1439 = vlaneseq
      %v1440 = vshrl.u32 %v1439, 7
      %v1441 = vsub.s32 %v1438, %v1440
      %v1442 = vrot.slane %v1420, %v1441
      %v1444 = vunpack.c.l.s4 1966171168
      %v1445 = vunpack.c.0.s8 %v1444
      %v1446 = vlaneseq
      %v1447 = vshrl.u32 %v1446, 7
      %v1448 = vsub.s32 %v1445, %v1447
      %v1449 = vrot.slane %v1421, %v1448
      %v1450 = vcombine.high %v1428, %v1428
      %v1451 = vcombine.high %v1435, %v1435
      %v1452 = vcombine.high %v1442, %v1442
      %v1453 = vcombine.high %v1449, %v1449
      %1462 = vst.msk [vmem:[%s210 + $0x3] sm:$0x1] %vm525, %v1428
      %1463 = vst.msk [vmem:[%s210 + $0x7] sm:$0x1] %vm525, %v1442
      %1464 = vst.msk [vmem:[%s210 + $0xb] sm:$0x1] %vm525, %v1450
      %1465 = vst.msk [vmem:[%s210 + $0xf] sm:$0x1] %vm525, %v1452
      %1466 = vst.msk [vmem:[%s210 + $0x13] sm:$0x1] %vm525, %v1435
      %1467 = vst.msk [vmem:[%s210 + $0x17] sm:$0x1] %vm525, %v1449
      %1468 = vst.msk [vmem:[%s210 + $0x1b] sm:$0x1] %vm525, %v1451
      %1469 = vst.msk [vmem:[%s210 + $0x1f] sm:$0x1] %vm525, %v1453
      %p1470 = scmp.lt.s32.totalorder %s14, 1
      %s1471 = scalar_select %p1470, %s14, 1
      %s1472 = smul.addr %s1471, 8
      %s1473 = smul.addr %s1472, 4
      %s1474 = scalar_lea.vmem %s3, %s1473
      // Predicated region
      $region33: #{decoder_forward.28} parent=31 // pred_check
        %p1475 = pneg %p110
      $region34: #{decoder_forward.28} parent=31 // pred_check_branch
        %1477 = sbr.rel (%p1475) target = $region36
      $region35: #{decoder_forward.28} parent=31 // pred_region
        _
      $region36: #{decoder_forward.28} parent=31 // pred_fallthru
        _
    $region32: #{decoder_forward.28} parent=5 // pred_fallthru
      _
    %p1478 = scmp.le.s32.totalorder 2, %s9
    // Predicated region
    $region37: #{decoder_forward.28} parent=5 // pred_check
      %p1479 = pneg %p1478
    $region38: #{decoder_forward.28} parent=5 // pred_check_branch
      %1481 = sbr.rel (%p1479) target = $region40
    $region39: #{decoder_forward.28} parent=5 // pred_region
      %s1482 = ssub.s32 %s9, 2
      // Predicated region
      $region41: #{decoder_forward.28} parent=39 // pred_check
        %p1483 = pneg %p116
      $region42: #{decoder_forward.28} parent=39 // pred_check_branch
        %1485 = sbr.rel (%p1483) target = $region44
      $region43: #{decoder_forward.28} parent=39 // pred_region
        %p1486 = scmp.lt.s32.totalorder %s15, 1
        %s1487 = scalar_select %p1486, %s15, 1
        %s1488 = smul.addr %s1487, 8
        %s1489 = smul.addr %s1488, 4
        %s1490 = scalar_lea.vmem %s3, %s1489
      $region44: #{decoder_forward.28} parent=39 // pred_fallthru
        _
    $region40: #{decoder_forward.28} parent=5 // pred_fallthru
      _
  $region6: #{decoder_forward.28} parent=0 // loop_footer
    %s13 = sadd.s32 1, %s9
  $region7: #{decoder_forward.28} parent=0 // loop_footer_branch
    %8 = sbr.rel target = $region3
  $region8: #{decoder_forward.28} parent=0 // loop_exit
    _

// kernel: decoder_forward.32
$region0: #{decoder_forward.32}
  #allocation0 [shape = 'u32[]', space=smem, size = 0x4, offset = 0x4, fixed_abs, tag = 'smem constant byte address 0x4 - core index']
  #allocation1 [shape = 'u32[144,128]{1,0:T(1,128)}', space=vmem, size = 0x12000, scoped, tag = 'internal scratch']
  #allocation2 [shape = 'f32[16,32]{1,0:T(8,128)}', space=vmem, size = 0x2000, scoped, tag = 'scratch operand']
  %s0 = inlined_call_operand.vmem [shape: f32[16,128], index: 0, kind: input, shape index: {}]
  %s1 = inlined_call_operand.vmem [shape: bf16[128,32], index: 1, kind: input, shape index: {}]
  %s2 = inlined_call_operand.vmem [shape: f32[1,32], index: 2, kind: input, shape index: {}]
  %s3 = inlined_call_operand.vmem [shape: f32[16,32], index: 3, kind: output, shape index: {}]
  %s4 = sld [smem:[#allocation0]]
  $region30: #{decoder_forward.32} parent=0
    _
  %s6 = ssub.s32 1, %s4
  %s7 = scalar_select 0, %s6, %s4
  // Predicated region
  $region2: #{decoder_forward.32} parent=0 // pred_check
    _
  $region3: #{decoder_forward.32} parent=0 // pred_check_branch
    %9 = sbr.rel (0) target = $region5
  $region4: #{decoder_forward.32} parent=0 // pred_region
    _
  $region5: #{decoder_forward.32} parent=0 // pred_fallthru
    _
  // Predicated region
  $region6: #{decoder_forward.32} parent=0 // pred_check
    _
  $region7: #{decoder_forward.32} parent=0 // pred_check_branch
    %11 = sbr.rel (0) target = $region9
  $region8: #{decoder_forward.32} parent=0 // pred_region
    _
  $region9: #{decoder_forward.32} parent=0 // pred_fallthru
    _
  // Predicated region
  $region10: #{decoder_forward.32} parent=0 // pred_check
    _
  $region11: #{decoder_forward.32} parent=0 // pred_check_branch
    %13 = sbr.rel (0) target = $region13
  $region12: #{decoder_forward.32} parent=0 // pred_region
    _
  $region13: #{decoder_forward.32} parent=0 // pred_fallthru
    _
  %p15 = scmp.eq.s32.totalorder 0, 0
  // Predicated region
  $region14: #{decoder_forward.32} parent=0 // pred_check
    %p16 = pneg %p15
  $region15: #{decoder_forward.32} parent=0 // pred_check_branch
    %18 = sbr.rel (%p16) target = $region17
  $region16: #{decoder_forward.32} parent=0 // pred_region
    %vm19 = vcmask 261120
    %20 = vst.msk [vmem:[#allocation2] sm:$0xff] %vm19, 0.0
    %21 = vst.msk [vmem:[#allocation2 + $0x8] sm:$0xff] %vm19, 0.0
  $region17: #{decoder_forward.32} parent=0 // pred_fallthru
    _
  %v22 = vld [vmem:[#allocation2] sm:$0xff]
  %v23 = vld [vmem:[#allocation2 + $0x8] sm:$0xff]
  %v24 = vld [vmem:[%s0] sm:$0xff]
  %v25 = vld [vmem:[%s0 + $0x8] sm:$0xff]
  %v26 = vpack.c.bf16 %v25, %v24
  %v27 = vld [vmem:[%s1] sm:$0xf]
  %v28 = vld [vmem:[%s1 + $0x4] sm:$0xf]
  %v29 = vld [vmem:[%s1 + $0x8] sm:$0xf]
  %v30 = vld [vmem:[%s1 + $0xc] sm:$0xf]
  %v31 = vld [vmem:[%s1 + $0x10] sm:$0xf]
  %v32 = vld [vmem:[%s1 + $0x14] sm:$0xf]
  %v33 = vld [vmem:[%s1 + $0x18] sm:$0xf]
  %v34 = vld [vmem:[%s1 + $0x1c] sm:$0xf]
  %v35 = vld [vmem:[%s1 + $0x20] sm:$0xf]
  %v36 = vld [vmem:[%s1 + $0x24] sm:$0xf]
  %v37 = vld [vmem:[%s1 + $0x28] sm:$0xf]
  %v38 = vld [vmem:[%s1 + $0x2c] sm:$0xf]
  %v39 = vld [vmem:[%s1 + $0x30] sm:$0xf]
  %v40 = vld [vmem:[%s1 + $0x34] sm:$0xf]
  %v41 = vld [vmem:[%s1 + $0x38] sm:$0xf]
  %v42 = vld [vmem:[%s1 + $0x3c] sm:$0xf]
  %v59 = vunpack.c.l.b16 %v27
  %v60 = vunpack.c.l.b16 %v28
  %v61 = vunpack.c.l.b16 %v29
  %v62 = vunpack.c.l.b16 %v30
  %v63 = vunpack.c.l.b16 %v31
  %v64 = vunpack.c.l.b16 %v32
  %v65 = vunpack.c.l.b16 %v33
  %v66 = vunpack.c.l.b16 %v34
  %v67 = vunpack.c.l.b16 %v35
  %v68 = vunpack.c.l.b16 %v36
  %v69 = vunpack.c.l.b16 %v37
  %v70 = vunpack.c.l.b16 %v38
  %v71 = vunpack.c.l.b16 %v39
  %v72 = vunpack.c.l.b16 %v40
  %v73 = vunpack.c.l.b16 %v41
  %v74 = vunpack.c.l.b16 %v42
  %v75 = vpack.c.b16 %v60, %v59
  %v76 = vpack.c.b16 %v62, %v61
  %v77 = vpack.c.b16 %v64, %v63
  %v78 = vpack.c.b16 %v66, %v65
  %v79 = vpack.c.b16 %v68, %v67
  %v80 = vpack.c.b16 %v70, %v69
  %v81 = vpack.c.b16 %v72, %v71
  %v82 = vpack.c.b16 %v74, %v73
  %91 = vmatprep.subr.bf16.mxu0 0
  %92 = vmatpush1.bf16.msra.mxu0 %v75
  %93 = vmatprep.subr.bf16.mxu0 0
  %94 = vmatpush1.bf16.msra.mxu0 %v76
  %95 = vmatprep.subr.bf16.mxu0 0
  %96 = vmatpush1.bf16.msra.mxu0 %v77
  %97 = vmatprep.subr.bf16.mxu0 0
  %98 = vmatpush1.bf16.msra.mxu0 %v78
  %99 = vmatprep.subr.bf16.mxu0 0
  %100 = vmatpush1.bf16.msra.mxu0 %v79
  %101 = vmatprep.subr.bf16.mxu0 0
  %102 = vmatpush1.bf16.msra.mxu0 %v80
  %103 = vmatprep.subr.bf16.mxu0 0
  %104 = vmatpush1.bf16.msra.mxu0 %v81
  %105 = vmatprep.subr.bf16.mxu0 0
  %106 = vmatpush1.bf16.msra.mxu0 %v82
  %107 = vmatprep.subr.bf16.mxu0 0
  %108 = vmatpush1.bf16.msra.mxu0 0
  %109 = vmatprep.subr.bf16.mxu0 0
  %110 = vmatpush1.bf16.msra.mxu0 0
  %111 = vmatprep.subr.bf16.mxu0 0
  %112 = vmatpush1.bf16.msra.mxu0 0
  %113 = vmatprep.subr.bf16.mxu0 0
  %114 = vmatpush1.bf16.msra.mxu0 0
  %115 = vmatprep.subr.bf16.mxu0 0
  %116 = vmatpush1.bf16.msra.mxu0 0
  %117 = vmatprep.subr.bf16.mxu0 0
  %118 = vmatpush1.bf16.msra.mxu0 0
  %119 = vmatprep.subr.bf16.mxu0 0
  %120 = vmatpush1.bf16.msra.mxu0 0
  %121 = vmatprep.subr.bf16.mxu0 0
  %122 = vmatpush1.bf16.msra.mxu0 0
  %123 = vmatprep.mubr.bf16.mxu0 0
  %124 = vmatmul.mubr.bf16.gmra.mrb[0].mxu0 %v26
  %v125 = vpop.f32.mrb[0].mxu0
  %v126 = vadd.f32 0.0, %v125
  %v127 = vpop.f32.mrb[0].mxu0
  %v128 = vpop.f32.mrb[0].mxu0
  %v129 = vadd.f32 0.0, %v128
  %v130 = vpop.f32.mrb[0].mxu0
  %131 = vdwg.mxu0
  %v132 = vadd.f32 %v22, %v126
  %v133 = vadd.f32 %v23, %v129
  %vm134 = vcmask 261120
  %135 = vst.msk [vmem:[#allocation2] sm:$0xff] %vm134, %v132
  %136 = vst.msk [vmem:[#allocation2 + $0x8] sm:$0xff] %vm134, %v133
  // Predicated region
  $region18: #{decoder_forward.32} parent=0 // pred_check
    %p137 = pneg %p15
  $region19: #{decoder_forward.32} parent=0 // pred_check_branch
    %139 = sbr.rel (%p137) target = $region21
  $region20: #{decoder_forward.32} parent=0 // pred_region
    %v140 = vld [vmem:[#allocation2] sm:$0xff]
    %v141 = vld [vmem:[#allocation2 + $0x8] sm:$0xff]
    %v142 = vld [vmem:[%s2] sm:$0x1]
    %v144 = vlaneseq
    %v145 = vshrl.u32 %v144, 7
    %v146 = vsub.s32 0, %v145
    %v147 = vrot.slane %v142, %v146
    %v149 = vadd.f32 %v140, %v147
    %v150 = vadd.f32 %v141, %v147
    %151 = vst.msk [vmem:[%s3] sm:$0xff] %vm134, %v149
    %152 = vst.msk [vmem:[%s3 + $0x8] sm:$0xff] %vm134, %v150
  $region21: #{decoder_forward.32} parent=0 // pred_fallthru
    _
  // Predicated region
  $region22: #{decoder_forward.32} parent=0 // pred_check
    _
  $region23: #{decoder_forward.32} parent=0 // pred_check_branch
    %154 = sbr.rel (0) target = $region25
  $region24: #{decoder_forward.32} parent=0 // pred_region
    _
  $region25: #{decoder_forward.32} parent=0 // pred_fallthru
    _
  // Predicated region
  $region26: #{decoder_forward.32} parent=0 // pred_check
    _
  $region27: #{decoder_forward.32} parent=0 // pred_check_branch
    %156 = sbr.rel (0) target = $region29
  $region28: #{decoder_forward.32} parent=0 // pred_region
    _
  $region29: #{decoder_forward.32} parent=0 // pred_fallthru
    _

// kernel: decoder_forward.45
$region0: #{decoder_forward.45}
  #allocation0 [shape = 'u32[]', space=smem, size = 0x4, offset = 0x4, fixed_abs, tag = 'smem constant byte address 0x4 - core index']
  #allocation1 [shape = 'u32[144,128]{1,0:T(1,128)}', space=vmem, size = 0x12000, scoped, tag = 'internal scratch']
  #allocation2 [shape = 'f32[16,64]{1,0:T(8,128)}', space=vmem, size = 0x2000, scoped, tag = 'scratch operand']
  %s0 = inlined_call_operand.vmem [shape: f32[16,32], index: 0, kind: input, shape index: {}]
  %s1 = inlined_call_operand.vmem [shape: bf16[32,64], index: 1, kind: input, shape index: {}]
  %s2 = inlined_call_operand.vmem [shape: f32[1,64], index: 2, kind: input, shape index: {}]
  %s3 = inlined_call_operand.hbm [shape: f32[16,64], index: 3, kind: output, shape index: {}]
  %s4 = sld [smem:[#allocation0]]
  $region30: #{decoder_forward.45} parent=0
    _
  %s6 = ssub.s32 1, %s4
  %s7 = scalar_select 0, %s6, %s4
  $region1: #{decoder_forward.45} parent=0
    #allocation3 [shape = 'u8[8192]{0}', space=vmem, size = 0x2000, scoped, tag = 'output window, operand 0, single buffered']
    #allocation4 [shape = 's32[1]{0}', space=sflag, size = 0x4, scoped, tag = 'scoped memory for decoder_forward.45']
    %8 = vsyncpa [#allocation4], 0
    // Predicated region
    $region2: #{decoder_forward.45} parent=1 // pred_check
      _
    $region3: #{decoder_forward.45} parent=1 // pred_check_branch
      %10 = sbr.rel (0) target = $region5
    $region4: #{decoder_forward.45} parent=1 // pred_region
      _
    $region5: #{decoder_forward.45} parent=1 // pred_fallthru
      _
    // Predicated region
    $region6: #{decoder_forward.45} parent=1 // pred_check
      _
    $region7: #{decoder_forward.45} parent=1 // pred_check_branch
      %12 = sbr.rel (0) target = $region9
    $region8: #{decoder_forward.45} parent=1 // pred_region
      _
    $region9: #{decoder_forward.45} parent=1 // pred_fallthru
      _
    // Predicated region
    $region10: #{decoder_forward.45} parent=1 // pred_check
      _
    $region11: #{decoder_forward.45} parent=1 // pred_check_branch
      %14 = sbr.rel (0) target = $region13
    $region12: #{decoder_forward.45} parent=1 // pred_region
      _
    $region13: #{decoder_forward.45} parent=1 // pred_fallthru
      _
    %p16 = scmp.eq.s32.totalorder 0, 0
    // Predicated region
    $region14: #{decoder_forward.45} parent=1 // pred_check
      %p17 = pneg %p16
    $region15: #{decoder_forward.45} parent=1 // pred_check_branch
      %19 = sbr.rel (%p17) target = $region17
    $region16: #{decoder_forward.45} parent=1 // pred_region
      %vm20 = vcmask 523264
      %21 = vst.msk [vmem:[#allocation2] sm:$0xff] %vm20, 0.0
      %22 = vst.msk [vmem:[#allocation2 + $0x8] sm:$0xff] %vm20, 0.0
    $region17: #{decoder_forward.45} parent=1 // pred_fallthru
      _
    %v23 = vld [vmem:[#allocation2] sm:$0xff]
    %v24 = vld [vmem:[#allocation2 + $0x8] sm:$0xff]
    %v25 = vld [vmem:[%s0] sm:$0xff]
    %v26 = vld [vmem:[%s0 + $0x8] sm:$0xff]
    %v27 = vpack.c.bf16 %v26, %v25
    %v28 = vld [vmem:[%s1] sm:$0xf]
    %v29 = vld [vmem:[%s1 + $0x4] sm:$0xf]
    %v30 = vld [vmem:[%s1 + $0x8] sm:$0xf]
    %v31 = vld [vmem:[%s1 + $0xc] sm:$0xf]
    %v36 = vunpack.c.l.b16 %v28
    %v37 = vunpack.c.l.b16 %v29
    %v38 = vunpack.c.l.b16 %v30
    %v39 = vunpack.c.l.b16 %v31
    %v40 = vpack.c.b16 %v37, %v36
    %v41 = vpack.c.b16 %v39, %v38
    %vm44 = vcmask 261120
    %v46 = vsel %vm44, %v27, 0
    %48 = vmatprep.subr.bf16.mxu0 0
    %49 = vmatpush1.bf16.msra.mxu0 %v40
    %50 = vmatprep.subr.bf16.mxu0 0
    %51 = vmatpush1.bf16.msra.mxu0 %v41
    %52 = vmatprep.subr.bf16.mxu0 0
    %53 = vmatpush1.bf16.msra.mxu0 0
    %54 = vmatprep.subr.bf16.mxu0 0
    %55 = vmatpush1.bf16.msra.mxu0 0
    %56 = vmatprep.subr.bf16.mxu0 0
    %57 = vmatpush1.bf16.msra.mxu0 0
    %58 = vmatprep.subr.bf16.mxu0 0
    %59 = vmatpush1.bf16.msra.mxu0 0
    %60 = vmatprep.subr.bf16.mxu0 0
    %61 = vmatpush1.bf16.msra.mxu0 0
    %62 = vmatprep.subr.bf16.mxu0 0
    %63 = vmatpush1.bf16.msra.mxu0 0
    %64 = vmatprep.subr.bf16.mxu0 0
    %65 = vmatpush1.bf16.msra.mxu0 0
    %66 = vmatprep.subr.bf16.mxu0 0
    %67 = vmatpush1.bf16.msra.mxu0 0
    %68 = vmatprep.subr.bf16.mxu0 0
    %69 = vmatpush1.bf16.msra.mxu0 0
    %70 = vmatprep.subr.bf16.mxu0 0
    %71 = vmatpush1.bf16.msra.mxu0 0
    %72 = vmatprep.subr.bf16.mxu0 0
    %73 = vmatpush1.bf16.msra.mxu0 0
    %74 = vmatprep.subr.bf16.mxu0 0
    %75 = vmatpush1.bf16.msra.mxu0 0
    %76 = vmatprep.subr.bf16.mxu0 0
    %77 = vmatpush1.bf16.msra.mxu0 0
    %78 = vmatprep.subr.bf16.mxu0 0
    %79 = vmatpush1.bf16.msra.mxu0 0
    %80 = vmatprep.mubr.bf16.mxu0 0
    %81 = vmatmul.mubr.bf16.gmra.mrb[0].mxu0 %v46
    %v82 = vpop.f32.mrb[0].mxu0
    %v83 = vadd.f32 0.0, %v82
    %v84 = vpop.f32.mrb[0].mxu0
    %v85 = vpop.f32.mrb[0].mxu0
    %v86 = vadd.f32 0.0, %v85
    %v87 = vpop.f32.mrb[0].mxu0
    %88 = vdwg.mxu0
    %v89 = vadd.f32 %v23, %v83
    %v90 = vadd.f32 %v24, %v86
    %vm91 = vcmask 523264
    %92 = vst.msk [vmem:[#allocation2] sm:$0xff] %vm91, %v89
    %93 = vst.msk [vmem:[#allocation2 + $0x8] sm:$0xff] %vm91, %v90
    // Predicated region
    $region18: #{decoder_forward.45} parent=1 // pred_check
      %p94 = pneg %p16
    $region19: #{decoder_forward.45} parent=1 // pred_check_branch
      %96 = sbr.rel (%p94) target = $region21
    $region20: #{decoder_forward.45} parent=1 // pred_region
      %v97 = vld [vmem:[#allocation2] sm:$0xff]
      %v98 = vld [vmem:[#allocation2 + $0x8] sm:$0xff]
      %v99 = vld [vmem:[%s2] sm:$0x1]
      %v101 = vlaneseq
      %v102 = vshrl.u32 %v101, 7
      %v103 = vsub.s32 0, %v102
      %v104 = vrot.slane %v99, %v103
      %v106 = vadd.f32 %v97, %v104
      %v107 = vadd.f32 %v98, %v104
      %v108 = vsel %vm91, %v106, -inf
      %109 = vmax.xlane.f32.xlu0 %v108
      %v110 = vpop.xlane.xlu0 %109
      %v111 = vsel %vm91, %v107, -inf
      %112 = vmax.xlane.f32.xlu0 %v111
      %v113 = vpop.xlane.xlu0 %112
      %v114 = vsub.f32 %v106, %v110
      %v115 = vsub.f32 %v107, %v113
      %v116 = vmul.f32 %v114, 1.442695
      %v117 = vpow.pop %v116
      %v118 = vmul.f32 %v115, 1.442695
      %v119 = vpow.pop %v118
      %v120 = vsel %vm91, %v117, 0.0
      %121 = vadd.xlane.f32.xlu0 %v120
      %v122 = vpop.xlane.xlu0 %121
      %v123 = vsel %vm91, %v119, 0.0
      %124 = vadd.xlane.f32.xlu0 %v123
      %v125 = vpop.xlane.xlu0 %124
      %v126 = vlog2.pop %v122
      %v127 = vmul.f32 %v126, 0.6931472
      %v128 = vlog2.pop %v125
      %v129 = vmul.f32 %v128, 0.6931472
      %v130 = vsub.f32 %v114, %v127
      %v131 = vsub.f32 %v115, %v129
      %132 = vst.msk [vmem:[#allocation3] sm:$0xff] %vm91, %v130
      %133 = vst.msk [vmem:[#allocation3 + $0x8] sm:$0xff] %vm91, %v131
    $region21: #{decoder_forward.45} parent=1 // pred_fallthru
      _
    // Predicated region
    $region22: #{decoder_forward.45} parent=1 // pred_check
      _
    $region23: #{decoder_forward.45} parent=1 // pred_check_branch
      %135 = sbr.rel (0) target = $region25
    $region24: #{decoder_forward.45} parent=1 // pred_region
      %s137 = ssub.s32 256, 256
      %138 = vsyncadd [#allocation4], %s137
      %s139 = sshll.u32 [#allocation3], 4
      %s140 = int_to_ptr.vmem [resolvable:$true] %s139
      %145 = dma.vmem_to_hbm [thread:$0]  %s140, 256, %s3, [#allocation4], 128, 128, 8
    $region25: #{decoder_forward.45} parent=1 // pred_fallthru
      _
    // Predicated region
    $region26: #{decoder_forward.45} parent=1 // pred_check
      _
    $region27: #{decoder_forward.45} parent=1 // pred_check_branch
      %147 = sbr.rel (0) target = $region29
    $region28: #{decoder_forward.45} parent=1 // pred_region
      %148 = dma.done [#allocation4], 256
    $region29: #{decoder_forward.45} parent=1 // pred_fallthru
      _
    %149 = vsyncpa [#allocation4], 1

</llo_original>
